<compile_context>
chip_gen: v5e
topology: v5e:2x2
jax: 0.10.0
libtpu: 0.0.40
codegen_flags: <defaults>
</compile_context>

<pallas_src>
import functools

import jax
import jax.numpy as jnp
from jax.experimental import pallas as pl
from jax.experimental.pallas import tpu as pltpu


_D_IN = 1000
_D_IN_PAD = 1024   # K of layer 1, padded to a 128 multiple
_N4_PAD = 128      # layer-4 width 24 -> 128 lanes


def _round_up(x, m):
    return (x + m - 1) // m * m


def _mlp_kernel(x_ref,
                w1, b1, w2, b2, w3, b3, w4, b4, w5, b5,
                o_ref):
    """Fused forward pass on one batch tile (bf16 operands, f32 MXU accumulation)."""
    h = x_ref[...]  # bf16 (block_b, 1024)
    for w, b in ((w1, b1), (w2, b2), (w3, b3), (w4, b4)):
        acc = jnp.dot(h, w[...], preferred_element_type=jnp.float32) + b[...]
        h = jnp.maximum(acc, 0.0).astype(jnp.bfloat16)
    out = jnp.dot(h, w5[...], preferred_element_type=jnp.float32) + b5[...]
    o_ref[...] = out.astype(o_ref.dtype)  # bf16 writeback


def prepare_params(params):
    """One-time pad + cast of weights/biases (hoisted out of the forward call)."""
    num_classes = params["w5"].shape[1]
    n5_pad = _round_up(max(num_classes, 128), 128)

    w1 = jnp.zeros((_D_IN_PAD, 512), jnp.bfloat16).at[:_D_IN, :].set(
        params["w1"].astype(jnp.bfloat16))
    b1 = params["b1"].astype(jnp.float32)
    w2 = params["w2"].astype(jnp.bfloat16)
    b2 = params["b2"].astype(jnp.float32)
    w3 = params["w3"].astype(jnp.bfloat16)
    b3 = params["b3"].astype(jnp.float32)
    # layer 4: pad 24 output cols -> 128 (zero cols -> zero activations after ReLU)
    w4 = jnp.zeros((128, _N4_PAD), jnp.bfloat16).at[:, :24].set(
        params["w4"].astype(jnp.bfloat16))
    b4 = jnp.zeros((1, _N4_PAD), jnp.float32).at[:, :24].set(params["b4"])
    # layer 5: pad 24 input rows -> 128 and num_classes cols -> n5_pad
    w5 = jnp.zeros((_N4_PAD, n5_pad), jnp.bfloat16).at[:24, :num_classes].set(
        params["w5"].astype(jnp.bfloat16))
    b5 = jnp.zeros((1, n5_pad), jnp.float32).at[:, :num_classes].set(params["b5"])

    return (w1, b1, w2, b2, w3, b3, w4, b4, w5, b5)


def _choose_block_b(batch):
    """Per-chip / per-batch tile choice (static, decided in Python)."""
    kind = jax.devices()[0].device_kind.lower()
    cap = 256 if "v5" in kind else 1024   # v5e: step overhead already <20% at 256
    if batch <= 16:
        return 16
    # Aim for >=2 grid steps (both v7x TensorCores via the "parallel" axis)
    # while keeping batch-padding waste small; 16-row multiples for bf16 tiles.
    return min(cap, _round_up(-(-batch // 2), 16))


def _vmem_limit_bytes(block_b, n5_pad):
    bf16 = 2
    x_tiles = 2 * block_b * _D_IN_PAD * bf16                      # double-buffered x
    out_tiles = 2 * block_b * n5_pad * bf16                       # double-buffered out
    weights = (_D_IN_PAD * 512 + 512 * 256 + 256 * 128
               + 128 * _N4_PAD + _N4_PAD * n5_pad) * bf16         # resident, single-buf
    biases = (512 + 256 + 128 + _N4_PAD + n5_pad) * 4
    temps = 2 * block_b * (512 + 256 + 128 + _N4_PAD + n5_pad) * 4  # f32 layer temps
    return x_tiles + out_tiles + weights + biases + temps + (8 << 20)


@functools.partial(jax.jit, static_argnames=("block_b", "num_classes"))
def _forward(x, prepared, *, block_b, num_classes):
    B, d_in = x.shape
    assert d_in == _D_IN, d_in
    n5_pad = prepared[-1].shape[1]
    b_pad = _round_up(max(B, block_b), block_b)

    # Batch-pad + bf16 cast of x; allow_input_fusion on operand 0 lets XLA fuse
    # this into the pallas_call input DMA instead of a separate HBM round trip.
    xp = jnp.pad(x.astype(jnp.bfloat16),
                 ((0, b_pad - B), (0, _D_IN_PAD - _D_IN)))

    batch_in_spec = pl.BlockSpec((block_b, _D_IN_PAD), lambda i: (i, 0))

    def resident_spec(shape):
        # Same block (0, 0) every step -> VMEM-resident; single-buffered.
        return pl.BlockSpec(shape, lambda i: (0, 0), pipeline_mode=pl.Buffered(1))

    grid_spec = pltpu.PrefetchScalarGridSpec(
        num_scalar_prefetch=0,
        grid=(b_pad // block_b,),
        in_specs=[batch_in_spec] + [resident_spec(w.shape) for w in prepared],
        out_specs=pl.BlockSpec((block_b, n5_pad), lambda i: (i, 0)),
    )

    out = pl.pallas_call(
        _mlp_kernel,
        grid_spec=grid_spec,
        out_shape=jax.ShapeDtypeStruct((b_pad, n5_pad), jnp.bfloat16),
        compiler_params=pltpu.CompilerParams(
            dimension_semantics=("parallel",),
            vmem_limit_bytes=_vmem_limit_bytes(block_b, n5_pad),
            allow_input_fusion=[True] + [False] * len(prepared),
        ),
    )(xp, *prepared)

    return out[:B, :num_classes].astype(jnp.float32)


def classifier2_forward(x, prepared, num_classes):
    """x: (B, 1000) f32. prepared: output of prepare_params."""
    return _forward(x, prepared, block_b=_choose_block_b(x.shape[0]),
                    num_classes=num_classes)


def init_params(key, num_classes=1):
    """Deterministic init mirroring PyTorch nn.Linear default (U[-1/sqrt(in), 1/sqrt(in)])."""
    dims = [1000, 512, 256, 128, 24, num_classes]
    params = {}
    keys = jax.random.split(key, 2 * (len(dims) - 1))
    for k in range(len(dims) - 1):
        fan_in, fan_out = dims[k], dims[k + 1]
        bound = 1.0 / jnp.sqrt(jnp.float32(fan_in))
        params[f"w{k + 1}"] = jax.random.uniform(
            keys[2 * k], (fan_in, fan_out),
            minval=-bound, maxval=bound, dtype=jnp.float32)
        params[f"b{k + 1}"] = jax.random.uniform(
            keys[2 * k + 1], (1, fan_out),
            minval=-bound, maxval=bound, dtype=jnp.float32)
    return params


def reference_forward(x, params):
    """Pure-JAX reference with the same bf16-operand / f32-accumulate / bf16-out recipe."""
    h = x.astype(jnp.bfloat16)
    for k in range(1, 5):
        w = params[f"w{k}"].astype(jnp.bfloat16)
        acc = jnp.dot(h, w, preferred_element_type=jnp.float32) + params[f"b{k}"]
        h = jnp.maximum(acc, 0.0).astype(jnp.bfloat16)
    w5 = params["w5"].astype(jnp.bfloat16)
    out = jnp.dot(h, w5, preferred_element_type=jnp.float32) + params["b5"]
    return out.astype(jnp.bfloat16).astype(jnp.float32)


if __name__ == "__main__":
    key = jax.random.PRNGKey(0)
    pkey, xkey = jax.random.split(key)

    num_classes = 1
    params = init_params(pkey, num_classes=num_classes)
    prepared = prepare_params(params)          # one-time pad/cast of the weights

    # Small batch that is not a multiple of the tile: exercises adaptive tile
    # choice (block_b=32 here), batch padding, and a 2-step "parallel" grid.
    B = 37
    x = jax.random.normal(xkey, (B, 1000), dtype=jnp.float32)

    out = classifier2_forward(x, prepared, num_classes)
    out = jax.block_until_ready(out)

    ref = reference_forward(x, params)
    assert out.shape == (B, num_classes), out.shape
    assert jnp.allclose(out, ref, atol=1e-2, rtol=1e-2), "mismatch vs reference"

    print("KERNEL_OK")
</pallas_src>

<mosaic_0001>
module attributes {stable_mosaic.version = 11 : i64} {
  func.func @_mlp_kernel(%arg0: i32, %arg1: memref<32x1024xbf16, #tpu.memory_space<vmem>>, %arg2: memref<1024x512xbf16, #tpu.memory_space<vmem>>, %arg3: memref<1x512xf32, #tpu.memory_space<vmem>>, %arg4: memref<512x256xbf16, #tpu.memory_space<vmem>>, %arg5: memref<1x256xf32, #tpu.memory_space<vmem>>, %arg6: memref<256x128xbf16, #tpu.memory_space<vmem>>, %arg7: memref<1x128xf32, #tpu.memory_space<vmem>>, %arg8: memref<128x128xbf16, #tpu.memory_space<vmem>>, %arg9: memref<1x128xf32, #tpu.memory_space<vmem>>, %arg10: memref<128x128xbf16, #tpu.memory_space<vmem>>, %arg11: memref<1x128xf32, #tpu.memory_space<vmem>>, %arg12: memref<32x128xbf16, #tpu.memory_space<vmem>>) attributes {dimension_semantics = [#tpu.dimension_semantics<parallel>], iteration_bounds = array<i64: 2>, scalar_prefetch = 0 : i64, scratch_operands = 0 : i64, tpu.core_type = #tpu.core_type<tc>, window_params = [{transform_indices = @transform_0, window_bounds = array<i64: 32, 1024>}, {pipeline_mode = #tpu.pipeline_mode<synchronous>, transform_indices = @transform_1, window_bounds = array<i64: 1024, 512>}, {pipeline_mode = #tpu.pipeline_mode<synchronous>, transform_indices = @transform_2, window_bounds = array<i64: 1, 512>}, {pipeline_mode = #tpu.pipeline_mode<synchronous>, transform_indices = @transform_3, window_bounds = array<i64: 512, 256>}, {pipeline_mode = #tpu.pipeline_mode<synchronous>, transform_indices = @transform_4, window_bounds = array<i64: 1, 256>}, {pipeline_mode = #tpu.pipeline_mode<synchronous>, transform_indices = @transform_5, window_bounds = array<i64: 256, 128>}, {pipeline_mode = #tpu.pipeline_mode<synchronous>, transform_indices = @transform_6, window_bounds = array<i64: 1, 128>}, {pipeline_mode = #tpu.pipeline_mode<synchronous>, transform_indices = @transform_7, window_bounds = array<i64: 128, 128>}, {pipeline_mode = #tpu.pipeline_mode<synchronous>, transform_indices = @transform_8, window_bounds = array<i64: 1, 128>}, {pipeline_mode = #tpu.pipeline_mode<synchronous>, transform_indices = @transform_9, window_bounds = array<i64: 128, 128>}, {pipeline_mode = #tpu.pipeline_mode<synchronous>, transform_indices = @transform_10, window_bounds = array<i64: 1, 128>}, {transform_indices = @transform_11, window_bounds = array<i64: 32, 128>}]} {
    %c0 = arith.constant 0 : index
    %c0_0 = arith.constant 0 : index
    %0 = vector.load %arg1[%c0, %c0_0] : memref<32x1024xbf16, #tpu.memory_space<vmem>>, vector<32x1024xbf16>
    %c0_1 = arith.constant 0 : index
    %c0_2 = arith.constant 0 : index
    %1 = vector.load %arg2[%c0_1, %c0_2] : memref<1024x512xbf16, #tpu.memory_space<vmem>>, vector<1024x512xbf16>
    %cst = arith.constant dense<0.000000e+00> : vector<32x512xf32>
    %2 = tpu.matmul %0, %1, %cst {dimension_numbers = #tpu.dot_dimension_numbers<[1], [0], [0], [1], [0, 0, 1, 1], [], []>} : vector<32x1024xbf16>, vector<1024x512xbf16>, vector<32x512xf32> -> vector<32x512xf32>
    %c0_3 = arith.constant 0 : index
    %c0_4 = arith.constant 0 : index
    %3 = vector.load %arg3[%c0_3, %c0_4] : memref<1x512xf32, #tpu.memory_space<vmem>>, vector<1x512xf32>
    %4 = vector.broadcast %3 : vector<1x512xf32> to vector<32x512xf32>
    %5 = arith.addf %2, %4 : vector<32x512xf32>
    %cst_5 = arith.constant 0.000000e+00 : f32
    %6 = vector.broadcast %cst_5 : f32 to vector<32x512xf32>
    %7 = arith.maximumf %5, %6 : vector<32x512xf32>
    %8 = arith.truncf %7 : vector<32x512xf32> to vector<32x512xbf16>
    %c0_6 = arith.constant 0 : index
    %c0_7 = arith.constant 0 : index
    %9 = vector.load %arg4[%c0_6, %c0_7] : memref<512x256xbf16, #tpu.memory_space<vmem>>, vector<512x256xbf16>
    %cst_8 = arith.constant dense<0.000000e+00> : vector<32x256xf32>
    %10 = tpu.matmul %8, %9, %cst_8 {dimension_numbers = #tpu.dot_dimension_numbers<[1], [0], [0], [1], [0, 0, 1, 1], [], []>} : vector<32x512xbf16>, vector<512x256xbf16>, vector<32x256xf32> -> vector<32x256xf32>
    %c0_9 = arith.constant 0 : index
    %c0_10 = arith.constant 0 : index
    %11 = vector.load %arg5[%c0_9, %c0_10] : memref<1x256xf32, #tpu.memory_space<vmem>>, vector<1x256xf32>
    %12 = vector.broadcast %11 : vector<1x256xf32> to vector<32x256xf32>
    %13 = arith.addf %10, %12 : vector<32x256xf32>
    %cst_11 = arith.constant 0.000000e+00 : f32
    %14 = vector.broadcast %cst_11 : f32 to vector<32x256xf32>
    %15 = arith.maximumf %13, %14 : vector<32x256xf32>
    %16 = arith.truncf %15 : vector<32x256xf32> to vector<32x256xbf16>
    %c0_12 = arith.constant 0 : index
    %c0_13 = arith.constant 0 : index
    %17 = vector.load %arg6[%c0_12, %c0_13] : memref<256x128xbf16, #tpu.memory_space<vmem>>, vector<256x128xbf16>
    %cst_14 = arith.constant dense<0.000000e+00> : vector<32x128xf32>
    %18 = tpu.matmul %16, %17, %cst_14 {dimension_numbers = #tpu.dot_dimension_numbers<[1], [0], [0], [1], [0, 0, 1, 1], [], []>} : vector<32x256xbf16>, vector<256x128xbf16>, vector<32x128xf32> -> vector<32x128xf32>
    %c0_15 = arith.constant 0 : index
    %c0_16 = arith.constant 0 : index
    %19 = vector.load %arg7[%c0_15, %c0_16] : memref<1x128xf32, #tpu.memory_space<vmem>>, vector<1x128xf32>
    %20 = vector.broadcast %19 : vector<1x128xf32> to vector<32x128xf32>
    %21 = arith.addf %18, %20 : vector<32x128xf32>
    %cst_17 = arith.constant 0.000000e+00 : f32
    %22 = vector.broadcast %cst_17 : f32 to vector<32x128xf32>
    %23 = arith.maximumf %21, %22 : vector<32x128xf32>
    %24 = arith.truncf %23 : vector<32x128xf32> to vector<32x128xbf16>
    %c0_18 = arith.constant 0 : index
    %c0_19 = arith.constant 0 : index
    %25 = vector.load %arg8[%c0_18, %c0_19] : memref<128x128xbf16, #tpu.memory_space<vmem>>, vector<128x128xbf16>
    %cst_20 = arith.constant dense<0.000000e+00> : vector<32x128xf32>
    %26 = tpu.matmul %24, %25, %cst_20 {dimension_numbers = #tpu.dot_dimension_numbers<[1], [0], [0], [1], [0, 0, 1, 1], [], []>} : vector<32x128xbf16>, vector<128x128xbf16>, vector<32x128xf32> -> vector<32x128xf32>
    %c0_21 = arith.constant 0 : index
    %c0_22 = arith.constant 0 : index
    %27 = vector.load %arg9[%c0_21, %c0_22] : memref<1x128xf32, #tpu.memory_space<vmem>>, vector<1x128xf32>
    %28 = vector.broadcast %27 : vector<1x128xf32> to vector<32x128xf32>
    %29 = arith.addf %26, %28 : vector<32x128xf32>
    %cst_23 = arith.constant 0.000000e+00 : f32
    %30 = vector.broadcast %cst_23 : f32 to vector<32x128xf32>
    %31 = arith.maximumf %29, %30 : vector<32x128xf32>
    %32 = arith.truncf %31 : vector<32x128xf32> to vector<32x128xbf16>
    %c0_24 = arith.constant 0 : index
    %c0_25 = arith.constant 0 : index
    %33 = vector.load %arg10[%c0_24, %c0_25] : memref<128x128xbf16, #tpu.memory_space<vmem>>, vector<128x128xbf16>
    %cst_26 = arith.constant dense<0.000000e+00> : vector<32x128xf32>
    %34 = tpu.matmul %32, %33, %cst_26 {dimension_numbers = #tpu.dot_dimension_numbers<[1], [0], [0], [1], [0, 0, 1, 1], [], []>} : vector<32x128xbf16>, vector<128x128xbf16>, vector<32x128xf32> -> vector<32x128xf32>
    %c0_27 = arith.constant 0 : index
    %c0_28 = arith.constant 0 : index
    %35 = vector.load %arg11[%c0_27, %c0_28] : memref<1x128xf32, #tpu.memory_space<vmem>>, vector<1x128xf32>
    %36 = vector.broadcast %35 : vector<1x128xf32> to vector<32x128xf32>
    %37 = arith.addf %34, %36 : vector<32x128xf32>
    %38 = arith.truncf %37 : vector<32x128xf32> to vector<32x128xbf16>
    %c0_29 = arith.constant 0 : index
    %c0_30 = arith.constant 0 : index
    %39 = vector.load %arg12[%c0_29, %c0_30] : memref<32x128xbf16, #tpu.memory_space<vmem>>, vector<32x128xbf16>
    tpu.vector_store %arg12[%c0_29, %c0_30], %38 {strides = array<i32>} : memref<32x128xbf16, #tpu.memory_space<vmem>>, vector<32x128xbf16>,
    return
  }
  func.func @transform_0(%arg0: i32) -> (i32, i32) {
    %c0_i32 = arith.constant 0 : i32
    %c0_i32_0 = arith.constant 0 : i32
    return %arg0, %c0_i32 : i32, i32
  }
  func.func @transform_1(%arg0: i32) -> (i32, i32) {
    %c0_i32 = arith.constant 0 : i32
    %c0_i32_0 = arith.constant 0 : i32
    %c0_i32_1 = arith.constant 0 : i32
    return %c0_i32, %c0_i32_0 : i32, i32
  }
  func.func @transform_2(%arg0: i32) -> (i32, i32) {
    %c0_i32 = arith.constant 0 : i32
    %c0_i32_0 = arith.constant 0 : i32
    %c0_i32_1 = arith.constant 0 : i32
    return %c0_i32, %c0_i32_0 : i32, i32
  }
  func.func @transform_3(%arg0: i32) -> (i32, i32) {
    %c0_i32 = arith.constant 0 : i32
    %c0_i32_0 = arith.constant 0 : i32
    %c0_i32_1 = arith.constant 0 : i32
    return %c0_i32, %c0_i32_0 : i32, i32
  }
  func.func @transform_4(%arg0: i32) -> (i32, i32) {
    %c0_i32 = arith.constant 0 : i32
    %c0_i32_0 = arith.constant 0 : i32
    %c0_i32_1 = arith.constant 0 : i32
    return %c0_i32, %c0_i32_0 : i32, i32
  }
  func.func @transform_5(%arg0: i32) -> (i32, i32) {
    %c0_i32 = arith.constant 0 : i32
    %c0_i32_0 = arith.constant 0 : i32
    %c0_i32_1 = arith.constant 0 : i32
    return %c0_i32, %c0_i32_0 : i32, i32
  }
  func.func @transform_6(%arg0: i32) -> (i32, i32) {
    %c0_i32 = arith.constant 0 : i32
    %c0_i32_0 = arith.constant 0 : i32
    %c0_i32_1 = arith.constant 0 : i32
    return %c0_i32, %c0_i32_0 : i32, i32
  }
  func.func @transform_7(%arg0: i32) -> (i32, i32) {
    %c0_i32 = arith.constant 0 : i32
    %c0_i32_0 = arith.constant 0 : i32
    %c0_i32_1 = arith.constant 0 : i32
    return %c0_i32, %c0_i32_0 : i32, i32
  }
  func.func @transform_8(%arg0: i32) -> (i32, i32) {
    %c0_i32 = arith.constant 0 : i32
    %c0_i32_0 = arith.constant 0 : i32
    %c0_i32_1 = arith.constant 0 : i32
    return %c0_i32, %c0_i32_0 : i32, i32
  }
  func.func @transform_9(%arg0: i32) -> (i32, i32) {
    %c0_i32 = arith.constant 0 : i32
    %c0_i32_0 = arith.constant 0 : i32
    %c0_i32_1 = arith.constant 0 : i32
    return %c0_i32, %c0_i32_0 : i32, i32
  }
  func.func @transform_10(%arg0: i32) -> (i32, i32) {
    %c0_i32 = arith.constant 0 : i32
    %c0_i32_0 = arith.constant 0 : i32
    %c0_i32_1 = arith.constant 0 : i32
    return %c0_i32, %c0_i32_0 : i32, i32
  }
  func.func @transform_11(%arg0: i32) -> (i32, i32) {
    %c0_i32 = arith.constant 0 : i32
    %c0_i32_0 = arith.constant 0 : i32
    return %arg0, %c0_i32 : i32, i32
  }
}

</mosaic_0001>

<llo_original>
// kernel: _forward.2
$region0: #{_forward.2}
  #allocation0 [shape = 'u32[]', space=smem, size = 0x4, offset = 0x4, fixed_abs, tag = 'smem constant byte address 0x4 - core index']
  #allocation1 [shape = 'u32[72,128]{1,0:T(1,128)}', space=vmem, size = 0x9000, scoped, tag = 'internal scratch']
  #allocation2 [shape = 'u32[2048]{0}', space=vmem, size = 0x2000, scoped, tag = 'scoped memory for _forward.2']
  #allocation3 [shape = 'u32[2048]{0}', space=vmem, size = 0x2000, scoped, tag = 'scoped memory for _forward.2']
  #allocation4 [shape = 'u32[2048]{0}', space=vmem, size = 0x2000, scoped, tag = 'scoped memory for _forward.2']
  #allocation5 [shape = 'u32[2048]{0}', space=vmem, size = 0x2000, scoped, tag = 'scoped memory for _forward.2']
  #allocation6 [shape = 'u32[2048]{0}', space=vmem, size = 0x2000, scoped, tag = 'scoped memory for _forward.2']
  %s0 = inlined_call_operand.hbm [shape: bf16[1024,512], index: 0, kind: input, shape index: {}]
  %s1 = inlined_call_operand.vmem [shape: f32[1,512], index: 1, kind: input, shape index: {}]
  %s2 = inlined_call_operand.hbm [shape: bf16[512,256], index: 2, kind: input, shape index: {}]
  %s3 = inlined_call_operand.vmem [shape: f32[1,256], index: 3, kind: input, shape index: {}]
  %s4 = inlined_call_operand.vmem [shape: bf16[256,128], index: 4, kind: input, shape index: {}]
  %s5 = inlined_call_operand.vmem [shape: f32[1,128], index: 5, kind: input, shape index: {}]
  %s6 = inlined_call_operand.vmem [shape: bf16[128,128], index: 6, kind: input, shape index: {}]
  %s7 = inlined_call_operand.vmem [shape: f32[1,128], index: 7, kind: input, shape index: {}]
  %s8 = inlined_call_operand.vmem [shape: bf16[128,128], index: 8, kind: input, shape index: {}]
  %s9 = inlined_call_operand.vmem [shape: f32[1,128], index: 9, kind: input, shape index: {}]
  %s10 = inlined_call_operand.vmem [shape: bf16[37,1000], index: 10, kind: input, shape index: {}]
  %s11 = inlined_call_operand.<no memory space> [shape: bf16[], index: 11, kind: input, shape index: {}]
  %s12 = inlined_call_operand.vmem [shape: bf16[64,128], index: 12, kind: output, shape index: {}]
  %s13 = sld [smem:[#allocation0]]
  $region85: #{_forward.2} parent=0
    _
  %s15 = ssub.s32 1, %s13
  %s16 = scalar_select 0, %s15, %s13
  %v17 = vstv %s11
  %v18 = vunpack.i.l.bf16 %v17
  %v20 = vunpack.i.h.bf16 %v17
  $region1: #{_forward.2} parent=0
    #allocation7 [shape = 'u8[1048576]{0}', space=vmem, size = 0x100000, scoped, tag = 'input window, operand 1, single buffered']
    #allocation8 [shape = 's32[2]{0}', space=sflag, size = 0x8, scoped, tag = 'scoped memory for _forward.2']
    #allocation9 [shape = 'u8[262144]{0}', space=vmem, size = 0x40000, scoped, tag = 'input window, operand 3, single buffered']
    #allocation10 [shape = 's32[1]{0}', space=sflag, size = 0x4, scoped, tag = 'scoped memory for _forward.2']
    %22 = vsyncpa [#allocation8], 0
    %23 = vsyncpa [#allocation10], 0
    loop: start=0, step=1, limit=4
    $region2: #{_forward.2} parent=1 // loop_pre_header
      _
    $region3: #{_forward.2} parent=1 // loop_header
      %s25 = sphi 0, %s29
      %p26 = scmp.ge.s32.totalorder %s25, 4
      %s35 = sphi 0, %s37
      %s38 = sphi 0, %s35
      %s39 = sphi 0, %s38
      %s55 = sphi 0, %s39
      %s59 = sphi 0, %s59
      %s61 = sphi 0, %s59
      %s62 = sphi 0, %s61
      %s76 = sphi 0, %s62
      %s80 = sphi 0, %s80
      %s82 = sphi 0, %s80
      %s83 = sphi 0, %s82
      %s97 = sphi 0, %s83
      %s101 = sphi 0, %s101
      %s103 = sphi 0, %s101
      %s104 = sphi 0, %s103
      %s118 = sphi 0, %s104
      %s122 = sphi 0, %s122
      %s124 = sphi 0, %s122
      %s125 = sphi 0, %s124
      %s139 = sphi 0, %s125
      %s143 = sphi 0, %s143
      %s145 = sphi 0, %s143
      %s146 = sphi 0, %s145
      %s160 = sphi 0, %s146
      %s164 = sphi 0, %s164
      %s166 = sphi 0, %s164
      %s167 = sphi 0, %s166
      %s181 = sphi 0, %s167
      %s185 = sphi 0, %s185
      %s187 = sphi 0, %s185
      %s188 = sphi 0, %s187
      %s202 = sphi 0, %s188
      %s206 = sphi 0, %s206
      %s208 = sphi 0, %s206
      %s209 = sphi 0, %s208
      %s223 = sphi 0, %s209
      %s227 = sphi 0, %s227
      %s229 = sphi 0, %s227
      %s230 = sphi 0, %s229
      %s244 = sphi 0, %s230
      %s248 = sphi 0, %s248
      %s250 = sphi 0, %s248
      %s251 = sphi 0, %s250
      %s265 = sphi 0, %s251
      %s271 = sphi 0, %s273
      %s274 = sphi 0, %s271
      %s275 = sphi 0, %s274
      %s291 = sphi 0, %s275
    $region4: #{_forward.2} parent=1 // loop_header_branch
      %28 = sbr.rel (%p26) target = $region8
    $region5: #{_forward.2} parent=1 // loop_body
      %s30 = ssub.s32 %s25, 1
      %s31 = ssub.s32 %s25, 2
      %s32 = sadd.s32 %s25, 1
      %s33 = ssub.s32 %s25, %s32
      %p34 = scmp.eq.s32.totalorder %s33, 0
      %s36 = sadd.s32 %s35, 1
      %s37 = scalar_select %p34, %s35, %s36
      %p40 = pneg %p34
      %p41 = scmp.eq.s32.totalorder %s25, 1
      %p42 = por %p40, %p41
      %p43 = scmp.ne.s32.totalorder %s35, %s38
      %p44 = scmp.eq.s32.totalorder %s25, 0
      %p45 = por %p43, %p44
      %p46 = scmp.ne.s32.totalorder %s35, %s38
      %p47 = scmp.eq.s32.totalorder %s30, 1
      %p48 = por %p46, %p47
      %p49 = scmp.ne.s32.totalorder %s38, %s39
      %p50 = scmp.eq.s32.totalorder %s30, 0
      %p51 = por %p49, %p50
      %p52 = scmp.ne.s32.totalorder %s38, %s39
      %p53 = scmp.eq.s32.totalorder %s31, 1
      %p54 = por %p52, %p53
      %p56 = scmp.ne.s32.totalorder %s39, %s55
      %p57 = scmp.eq.s32.totalorder %s31, 0
      %p58 = por %p56, %p57
      %s60 = sadd.s32 %s59, 1
      %p63 = scmp.eq.s32.totalorder %s25, 1
      %p64 = scmp.ne.s32.totalorder %s59, %s61
      %p65 = scmp.eq.s32.totalorder %s25, 0
      %p66 = por %p64, %p65
      %p67 = scmp.ne.s32.totalorder %s59, %s61
      %p68 = scmp.eq.s32.totalorder %s30, 1
      %p69 = por %p67, %p68
      %p70 = scmp.ne.s32.totalorder %s61, %s62
      %p71 = scmp.eq.s32.totalorder %s30, 0
      %p72 = por %p70, %p71
      %p73 = scmp.ne.s32.totalorder %s61, %s62
      %p74 = scmp.eq.s32.totalorder %s31, 1
      %p75 = por %p73, %p74
      %p77 = scmp.ne.s32.totalorder %s62, %s76
      %p78 = scmp.eq.s32.totalorder %s31, 0
      %p79 = por %p77, %p78
      %s81 = sadd.s32 %s80, 1
      %p84 = scmp.eq.s32.totalorder %s25, 1
      %p85 = scmp.ne.s32.totalorder %s80, %s82
      %p86 = scmp.eq.s32.totalorder %s25, 0
      %p87 = por %p85, %p86
      %p88 = scmp.ne.s32.totalorder %s80, %s82
      %p89 = scmp.eq.s32.totalorder %s30, 1
      %p90 = por %p88, %p89
      %p91 = scmp.ne.s32.totalorder %s82, %s83
      %p92 = scmp.eq.s32.totalorder %s30, 0
      %p93 = por %p91, %p92
      %p94 = scmp.ne.s32.totalorder %s82, %s83
      %p95 = scmp.eq.s32.totalorder %s31, 1
      %p96 = por %p94, %p95
      %p98 = scmp.ne.s32.totalorder %s83, %s97
      %p99 = scmp.eq.s32.totalorder %s31, 0
      %p100 = por %p98, %p99
      %s102 = sadd.s32 %s101, 1
      %p105 = scmp.eq.s32.totalorder %s25, 1
      %p106 = scmp.ne.s32.totalorder %s101, %s103
      %p107 = scmp.eq.s32.totalorder %s25, 0
      %p108 = por %p106, %p107
      %p109 = scmp.ne.s32.totalorder %s101, %s103
      %p110 = scmp.eq.s32.totalorder %s30, 1
      %p111 = por %p109, %p110
      %p112 = scmp.ne.s32.totalorder %s103, %s104
      %p113 = scmp.eq.s32.totalorder %s30, 0
      %p114 = por %p112, %p113
      %p115 = scmp.ne.s32.totalorder %s103, %s104
      %p116 = scmp.eq.s32.totalorder %s31, 1
      %p117 = por %p115, %p116
      %p119 = scmp.ne.s32.totalorder %s104, %s118
      %p120 = scmp.eq.s32.totalorder %s31, 0
      %p121 = por %p119, %p120
      %s123 = sadd.s32 %s122, 1
      %p126 = scmp.eq.s32.totalorder %s25, 1
      %p127 = scmp.ne.s32.totalorder %s122, %s124
      %p128 = scmp.eq.s32.totalorder %s25, 0
      %p129 = por %p127, %p128
      %p130 = scmp.ne.s32.totalorder %s122, %s124
      %p131 = scmp.eq.s32.totalorder %s30, 1
      %p132 = por %p130, %p131
      %p133 = scmp.ne.s32.totalorder %s124, %s125
      %p134 = scmp.eq.s32.totalorder %s30, 0
      %p135 = por %p133, %p134
      %p136 = scmp.ne.s32.totalorder %s124, %s125
      %p137 = scmp.eq.s32.totalorder %s31, 1
      %p138 = por %p136, %p137
      %p140 = scmp.ne.s32.totalorder %s125, %s139
      %p141 = scmp.eq.s32.totalorder %s31, 0
      %p142 = por %p140, %p141
      %s144 = sadd.s32 %s143, 1
      %p147 = scmp.eq.s32.totalorder %s25, 1
      %p148 = scmp.ne.s32.totalorder %s143, %s145
      %p149 = scmp.eq.s32.totalorder %s25, 0
      %p150 = por %p148, %p149
      %p151 = scmp.ne.s32.totalorder %s143, %s145
      %p152 = scmp.eq.s32.totalorder %s30, 1
      %p153 = por %p151, %p152
      %p154 = scmp.ne.s32.totalorder %s145, %s146
      %p155 = scmp.eq.s32.totalorder %s30, 0
      %p156 = por %p154, %p155
      %p157 = scmp.ne.s32.totalorder %s145, %s146
      %p158 = scmp.eq.s32.totalorder %s31, 1
      %p159 = por %p157, %p158
      %p161 = scmp.ne.s32.totalorder %s146, %s160
      %p162 = scmp.eq.s32.totalorder %s31, 0
      %p163 = por %p161, %p162
      %s165 = sadd.s32 %s164, 1
      %p168 = scmp.eq.s32.totalorder %s25, 1
      %p169 = scmp.ne.s32.totalorder %s164, %s166
      %p170 = scmp.eq.s32.totalorder %s25, 0
      %p171 = por %p169, %p170
      %p172 = scmp.ne.s32.totalorder %s164, %s166
      %p173 = scmp.eq.s32.totalorder %s30, 1
      %p174 = por %p172, %p173
      %p175 = scmp.ne.s32.totalorder %s166, %s167
      %p176 = scmp.eq.s32.totalorder %s30, 0
      %p177 = por %p175, %p176
      %p178 = scmp.ne.s32.totalorder %s166, %s167
      %p179 = scmp.eq.s32.totalorder %s31, 1
      %p180 = por %p178, %p179
      %p182 = scmp.ne.s32.totalorder %s167, %s181
      %p183 = scmp.eq.s32.totalorder %s31, 0
      %p184 = por %p182, %p183
      %s186 = sadd.s32 %s185, 1
      %p189 = scmp.eq.s32.totalorder %s25, 1
      %p190 = scmp.ne.s32.totalorder %s185, %s187
      %p191 = scmp.eq.s32.totalorder %s25, 0
      %p192 = por %p190, %p191
      %p193 = scmp.ne.s32.totalorder %s185, %s187
      %p194 = scmp.eq.s32.totalorder %s30, 1
      %p195 = por %p193, %p194
      %p196 = scmp.ne.s32.totalorder %s187, %s188
      %p197 = scmp.eq.s32.totalorder %s30, 0
      %p198 = por %p196, %p197
      %p199 = scmp.ne.s32.totalorder %s187, %s188
      %p200 = scmp.eq.s32.totalorder %s31, 1
      %p201 = por %p199, %p200
      %p203 = scmp.ne.s32.totalorder %s188, %s202
      %p204 = scmp.eq.s32.totalorder %s31, 0
      %p205 = por %p203, %p204
      %s207 = sadd.s32 %s206, 1
      %p210 = scmp.eq.s32.totalorder %s25, 1
      %p211 = scmp.ne.s32.totalorder %s206, %s208
      %p212 = scmp.eq.s32.totalorder %s25, 0
      %p213 = por %p211, %p212
      %p214 = scmp.ne.s32.totalorder %s206, %s208
      %p215 = scmp.eq.s32.totalorder %s30, 1
      %p216 = por %p214, %p215
      %p217 = scmp.ne.s32.totalorder %s208, %s209
      %p218 = scmp.eq.s32.totalorder %s30, 0
      %p219 = por %p217, %p218
      %p220 = scmp.ne.s32.totalorder %s208, %s209
      %p221 = scmp.eq.s32.totalorder %s31, 1
      %p222 = por %p220, %p221
      %p224 = scmp.ne.s32.totalorder %s209, %s223
      %p225 = scmp.eq.s32.totalorder %s31, 0
      %p226 = por %p224, %p225
      %s228 = sadd.s32 %s227, 1
      %p231 = scmp.eq.s32.totalorder %s25, 1
      %p232 = scmp.ne.s32.totalorder %s227, %s229
      %p233 = scmp.eq.s32.totalorder %s25, 0
      %p234 = por %p232, %p233
      %p235 = scmp.ne.s32.totalorder %s227, %s229
      %p236 = scmp.eq.s32.totalorder %s30, 1
      %p237 = por %p235, %p236
      %p238 = scmp.ne.s32.totalorder %s229, %s230
      %p239 = scmp.eq.s32.totalorder %s30, 0
      %p240 = por %p238, %p239
      %p241 = scmp.ne.s32.totalorder %s229, %s230
      %p242 = scmp.eq.s32.totalorder %s31, 1
      %p243 = por %p241, %p242
      %p245 = scmp.ne.s32.totalorder %s230, %s244
      %p246 = scmp.eq.s32.totalorder %s31, 0
      %p247 = por %p245, %p246
      %s249 = sadd.s32 %s248, 1
      %p252 = scmp.eq.s32.totalorder %s25, 1
      %p253 = scmp.ne.s32.totalorder %s248, %s250
      %p254 = scmp.eq.s32.totalorder %s25, 0
      %p255 = por %p253, %p254
      %p256 = scmp.ne.s32.totalorder %s248, %s250
      %p257 = scmp.eq.s32.totalorder %s30, 1
      %p258 = por %p256, %p257
      %p259 = scmp.ne.s32.totalorder %s250, %s251
      %p260 = scmp.eq.s32.totalorder %s30, 0
      %p261 = por %p259, %p260
      %p262 = scmp.ne.s32.totalorder %s250, %s251
      %p263 = scmp.eq.s32.totalorder %s31, 1
      %p264 = por %p262, %p263
      %p266 = scmp.ne.s32.totalorder %s251, %s265
      %p267 = scmp.eq.s32.totalorder %s31, 0
      %p268 = por %p266, %p267
      %s269 = ssub.s32 %s25, %s32
      %p270 = scmp.eq.s32.totalorder %s269, 0
      %s272 = sadd.s32 %s271, 1
      %s273 = scalar_select %p270, %s271, %s272
      %p276 = pneg %p270
      %p277 = scmp.eq.s32.totalorder %s25, 1
      %p278 = por %p276, %p277
      %p279 = scmp.ne.s32.totalorder %s271, %s274
      %p280 = scmp.eq.s32.totalorder %s25, 0
      %p281 = por %p279, %p280
      %p282 = scmp.ne.s32.totalorder %s271, %s274
      %p283 = scmp.eq.s32.totalorder %s30, 1
      %p284 = por %p282, %p283
      %p285 = scmp.ne.s32.totalorder %s274, %s275
      %p286 = scmp.eq.s32.totalorder %s30, 0
      %p287 = por %p285, %p286
      %p288 = scmp.ne.s32.totalorder %s274, %s275
      %p289 = scmp.eq.s32.totalorder %s31, 1
      %p290 = por %p288, %p289
      %p292 = scmp.ne.s32.totalorder %s275, %s291
      %p293 = scmp.eq.s32.totalorder %s31, 0
      %p294 = por %p292, %p293
      %p295 = scmp.le.s32.totalorder 1, %s25
      %p296 = scmp.lt.s32.totalorder %s25, 3
      %p297 = pnand %p295, %p296
      %p298 = pneg %p297
      // Predicated region
      $region9: #{_forward.2} parent=5 // pred_check
        _
      $region10: #{_forward.2} parent=5 // pred_check_branch
        %300 = sbr.rel (%p297) target = $region12
      $region11: #{_forward.2} parent=5 // pred_region
        %s301 = ssub.s32 %s25, 1
        // Predicated region
        $region13: #{_forward.2} parent=11 // pred_check
          %p302 = pneg %p72
        $region14: #{_forward.2} parent=11 // pred_check_branch
          %304 = sbr.rel (%p302) target = $region16
        $region15: #{_forward.2} parent=11 // pred_region
          %306 = vsyncadd [#allocation8], 0
          %s307 = sshll.u32 %s0, 4
          %s308 = int_to_ptr.hbm [resolvable:$true] %s307
          %s309 = sshll.u32 [#allocation7], 4
          %s310 = int_to_ptr.vmem [resolvable:$true] %s309
          %315 = dma.hbm_to_vmem [thread:$0]  %s308, 32768, %s310, [#allocation8], 256, 256, 16
        $region16: #{_forward.2} parent=11 // pred_fallthru
          _
        // Predicated region
        $region17: #{_forward.2} parent=11 // pred_check
          %p316 = pneg %p93
        $region18: #{_forward.2} parent=11 // pred_check_branch
          %318 = sbr.rel (%p316) target = $region20
        $region19: #{_forward.2} parent=11 // pred_region
          _
        $region20: #{_forward.2} parent=11 // pred_fallthru
          _
        // Predicated region
        $region21: #{_forward.2} parent=11 // pred_check
          %p319 = pneg %p114
        $region22: #{_forward.2} parent=11 // pred_check_branch
          %321 = sbr.rel (%p319) target = $region24
        $region23: #{_forward.2} parent=11 // pred_region
          %323 = vsyncadd [#allocation10], 0
          %s324 = sshll.u32 %s2, 4
          %s325 = int_to_ptr.hbm [resolvable:$true] %s324
          %s326 = sshll.u32 [#allocation9], 4
          %s327 = int_to_ptr.vmem [resolvable:$true] %s326
          %332 = dma.hbm_to_vmem [thread:$0]  %s325, 8192, %s327, [#allocation10], 128, 128, 8
        $region24: #{_forward.2} parent=11 // pred_fallthru
          _
        // Predicated region
        $region25: #{_forward.2} parent=11 // pred_check
          %p333 = pneg %p135
        $region26: #{_forward.2} parent=11 // pred_check_branch
          %335 = sbr.rel (%p333) target = $region28
        $region27: #{_forward.2} parent=11 // pred_region
          _
        $region28: #{_forward.2} parent=11 // pred_fallthru
          _
        // Predicated region
        $region29: #{_forward.2} parent=11 // pred_check
          %p336 = pneg %p156
        $region30: #{_forward.2} parent=11 // pred_check_branch
          %338 = sbr.rel (%p336) target = $region32
        $region31: #{_forward.2} parent=11 // pred_region
          _
        $region32: #{_forward.2} parent=11 // pred_fallthru
          _
        // Predicated region
        $region33: #{_forward.2} parent=11 // pred_check
          %p339 = pneg %p177
        $region34: #{_forward.2} parent=11 // pred_check_branch
          %341 = sbr.rel (%p339) target = $region36
        $region35: #{_forward.2} parent=11 // pred_region
          _
        $region36: #{_forward.2} parent=11 // pred_fallthru
          _
        // Predicated region
        $region37: #{_forward.2} parent=11 // pred_check
          %p342 = pneg %p198
        $region38: #{_forward.2} parent=11 // pred_check_branch
          %344 = sbr.rel (%p342) target = $region40
        $region39: #{_forward.2} parent=11 // pred_region
          _
        $region40: #{_forward.2} parent=11 // pred_fallthru
          _
        // Predicated region
        $region41: #{_forward.2} parent=11 // pred_check
          %p345 = pneg %p219
        $region42: #{_forward.2} parent=11 // pred_check_branch
          %347 = sbr.rel (%p345) target = $region44
        $region43: #{_forward.2} parent=11 // pred_region
          _
        $region44: #{_forward.2} parent=11 // pred_fallthru
          _
        // Predicated region
        $region45: #{_forward.2} parent=11 // pred_check
          %p348 = pneg %p240
        $region46: #{_forward.2} parent=11 // pred_check_branch
          %350 = sbr.rel (%p348) target = $region48
        $region47: #{_forward.2} parent=11 // pred_region
          _
        $region48: #{_forward.2} parent=11 // pred_fallthru
          _
        // Predicated region
        $region49: #{_forward.2} parent=11 // pred_check
          %p351 = pneg %p261
        $region50: #{_forward.2} parent=11 // pred_check_branch
          %353 = sbr.rel (%p351) target = $region52
        $region51: #{_forward.2} parent=11 // pred_region
          _
        $region52: #{_forward.2} parent=11 // pred_fallthru
          _
      $region12: #{_forward.2} parent=5 // pred_fallthru
        _
      %p354 = scmp.lt.s32.totalorder %s25, 2
      // Predicated region
      $region53: #{_forward.2} parent=5 // pred_check
        %p355 = pneg %p354
      $region54: #{_forward.2} parent=5 // pred_check_branch
        %357 = sbr.rel (%p355) target = $region56
      $region55: #{_forward.2} parent=5 // pred_region
        // Predicated region
        $region57: #{_forward.2} parent=55 // pred_check
          %p358 = pneg %p45
        $region58: #{_forward.2} parent=55 // pred_check_branch
          %360 = sbr.rel (%p358) target = $region60
        $region59: #{_forward.2} parent=55 // pred_region
          %s361 = smul.u32 4, %s25
          %s362 = ssub.s32 5, %s361
          %p363 = scmp.lt.s32.totalorder %s362, 4
          %s364 = scalar_select %p363, %s362, 4
          %s365 = smul.u32 4, %s364
          %s366 = smul.u32 %s365, 8
          %p367 = scmp.lt.s32.totalorder %s361, 4
          %s368 = scalar_select %p367, %s361, 4
          %s369 = smul.addr %s368, 8
          %s370 = smul.addr %s369, 4
          %s371 = scalar_lea.vmem %s10, %s370
          %s372 = smul.u32 4, %s25
          %s373 = ssub.s32 5, %s372
          %p374 = scmp.lt.s32.totalorder %s373, 4
          %s375 = scalar_select %p374, %s373, 4
          %s376 = smul.u32 4, %s375
          %s377 = smul.u32 %s376, 8
        $region60: #{_forward.2} parent=55 // pred_fallthru
          _
      $region56: #{_forward.2} parent=5 // pred_fallthru
        _
      %p378 = scmp.le.s32.totalorder 1, %s25
      %p379 = scmp.lt.s32.totalorder %s25, 3
      %p380 = pnand %p378, %p379
      %p381 = pneg %p380
      // Predicated region
      $region61: #{_forward.2} parent=5 // pred_check
        _
      $region62: #{_forward.2} parent=5 // pred_check_branch
        %383 = sbr.rel (%p380) target = $region64
      $region63: #{_forward.2} parent=5 // pred_region
        #allocation11 [shape = 'u8[65536]{0}', space=vmem, size = 0x10000, dematerialized = true, scoped, tag = 'FusionAdapter Buffer %fusion.1 = bf16[64,1024]{1,0:T(8,128)(2,1)} fusion(%param_10.1, %param_11), kind=kLoop, calls=%fused_computation.1.clone, metadata={op_name="jit(_forward)/jit(_pad)/pad" stack_frame_id=9}']
        %s384 = ssub.s32 %s25, 1
        // Predicated region
        $region65: #{_forward.2} parent=63 // pred_check
          %p385 = pneg %p72
        $region66: #{_forward.2} parent=63 // pred_check_branch
          %387 = sbr.rel (%p385) target = $region68
        $region67: #{_forward.2} parent=63 // pred_region
          %389 = dma.done [#allocation8], 32768
        $region68: #{_forward.2} parent=63 // pred_fallthru
          _
        // Predicated region
        $region69: #{_forward.2} parent=63 // pred_check
          %p390 = pneg %p114
        $region70: #{_forward.2} parent=63 // pred_check_branch
          %392 = sbr.rel (%p390) target = $region72
        $region71: #{_forward.2} parent=63 // pred_region
          %394 = dma.done [#allocation10], 8192
        $region72: #{_forward.2} parent=63 // pred_fallthru
          _
        %s395 = smul.u32 4, %s30
        %s396 = ssub.s32 5, %s395
        %p397 = scmp.lt.s32.totalorder %s396, 4
        %s398 = scalar_select %p397, %s396, 4
        %s399 = smul.u32 4, %s398
        %s400 = smul.u32 %s399, 8
        %p401 = scmp.lt.s32.totalorder %s395, 4
        %s402 = scalar_select %p401, %s395, 4
        %s403 = smul.addr %s402, 8
        %s404 = smul.addr %s403, 4
        %s405 = scalar_lea.vmem %s10, %s404
        %p406 = pneg %p51
        %p407 = pneg %p48
        %p408 = pneg %p72
        %p409 = pneg %p69
        %p410 = pneg %p93
        %p411 = pneg %p90
        %p412 = pneg %p114
        %p413 = pneg %p111
        %p414 = pneg %p135
        %p415 = pneg %p132
        %p416 = pneg %p156
        %p417 = pneg %p153
        %p418 = pneg %p177
        %p419 = pneg %p174
        %p420 = pneg %p198
        %p421 = pneg %p195
        %p422 = pneg %p219
        %p423 = pneg %p216
        %p424 = pneg %p240
        %p425 = pneg %p237
        %p426 = pneg %p261
        %p427 = pneg %p258
        %p428 = pneg %p287
        %p429 = pneg %p284
        %s430 = smul.u32 4, %s30
        %p431 = scmp.lt.s32.totalorder %s430, 7
        %s432 = scalar_select %p431, %s430, 7
        %s433 = smul.addr %s432, 4
        %s434 = scalar_lea.vmem %s12, %s433
        %s435 = smul.u32 4, %s30
        %s436 = ssub.s32 5, %s435
        %p437 = scmp.lt.s32.totalorder %s436, 4
        %s438 = scalar_select %p437, %s436, 4
        %s439 = smul.u32 4, %s438
        %s440 = smul.u32 %s439, 8
        %p441 = scmp.lt.s32.totalorder %s435, 4
        %s442 = scalar_select %p441, %s435, 4
        %s443 = smul.addr %s442, 8
        %s444 = smul.addr %s443, 4
        %s445 = scalar_lea.vmem %s10, %s444
        %s446 = smul.u32 4, %s30
        %s447 = ssub.s32 5, %s446
        %p448 = scmp.lt.s32.totalorder %s447, 4
        %s449 = scalar_select %p448, %s447, 4
        %s450 = smul.u32 4, %s449
        %s451 = smul.u32 %s450, 8
        %s452 = smul.u32 4, %s30
        %p453 = scmp.lt.s32.totalorder %s452, 7
        %s454 = scalar_select %p453, %s452, 7
        %s455 = smul.addr %s454, 4
        %s456 = scalar_lea.vmem %s12, %s455
        %s457 = smul.u32 4, %s30
        %s458 = ssub.s32 4, %s446
        %p459 = scmp.lt.s32.totalorder %s458, 0
        %s460 = scalar_select %p459, 0, 255
        %s461 = sshrl.u32 %s460, 1
        %s462 = sor.u32 %s460, %s461
        %s463 = sand.u32 %s462, 85
        %s464 = sshrl.u32 %s463, 1
        %s465 = sor.u32 %s463, %s464
        %s466 = sand.u32 51, %s465
        %s467 = sshrl.u32 %s466, 2
        %s468 = sor.u32 %s466, %s467
        %s469 = sand.u32 15, %s468
        %v470 = vld [vmem:[%s445] sm:%s469]
        %v471 = vunpack.c.l.bf16 %v470
        %v472 = vunpack.c.h.bf16 %v470
        %s473 = ssub.s32 4, %s446
        %v474 = vstv %s473
        %vm475 = vcmp.lt.s32.totalorder %v474, 0
        %v476 = vsel %vm475, %v18, %v471
        %s477 = smul.addr %s446, 8
        %v478 = vlaneseq
        %v479 = vshrl.u32 %v478, 7
        %v480 = vstv %s477
        %v481 = vadd.s32 %v479, %v480
        %vm482 = vcmp.lt.s32.totalorder %v481, 37
        %v483 = vsel %vm482, %v476, %v18
        %v484 = vlaneseq
        %v485 = vand.u32 %v484, 127
        %vm487 = vcmp.lt.s32.totalorder %v485, 1000
        %v488 = vsel %vm487, %v483, %v18
        %v489 = vpack.c.bf16 0.0, %v488
        %s491 = ssub.s32 16, 1
        %492 = vst [vmem:[#allocation11] sm:%s491] %v489
        %s493 = scalar_lea.vmem %s445, 4
        %s494 = ssub.s32 4, %s446
        %p495 = scmp.lt.s32.totalorder %s494, 0
        %s496 = scalar_select %p495, 0, 255
        %s497 = sshrl.u32 %s496, 1
        %s498 = sor.u32 %s496, %s497
        %s499 = sand.u32 %s498, 85
        %s500 = sshrl.u32 %s499, 1
        %s501 = sor.u32 %s499, %s500
        %s502 = sand.u32 51, %s501
        %s503 = sshrl.u32 %s502, 2
        %s504 = sor.u32 %s502, %s503
        %s505 = sand.u32 15, %s504
        %v506 = vld [vmem:[%s493] sm:%s505]
        %v507 = vunpack.c.l.bf16 %v506
        %v508 = vunpack.c.h.bf16 %v506
        %s509 = ssub.s32 4, %s446
        %v510 = vstv %s509
        %vm511 = vcmp.lt.s32.totalorder %v510, 0
        %v512 = vsel %vm511, %v18, %v507
        %s513 = smul.addr %s446, 8
        %v514 = vlaneseq
        %v515 = vshrl.u32 %v514, 7
        %v516 = vstv %s513
        %v517 = vadd.s32 %v515, %v516
        %vm518 = vcmp.lt.s32.totalorder %v517, 37
        %v519 = vsel %vm518, %v512, %v18
        %v520 = vlaneseq
        %v521 = vand.u32 %v520, 127
        %v522 = vadd.s32 %v521, 128
        %vm523 = vcmp.lt.s32.totalorder %v522, 1000
        %v524 = vsel %vm523, %v519, %v18
        %s525 = scalar_lea.vmem [#allocation11], 4
        %v526 = vpack.c.bf16 0.0, %v524
        %s528 = ssub.s32 16, 1
        %529 = vst [vmem:[%s525] sm:%s528] %v526
        %s530 = scalar_lea.vmem %s445, 8
        %s531 = ssub.s32 4, %s446
        %p532 = scmp.lt.s32.totalorder %s531, 0
        %s533 = scalar_select %p532, 0, 255
        %s534 = sshrl.u32 %s533, 1
        %s535 = sor.u32 %s533, %s534
        %s536 = sand.u32 %s535, 85
        %s537 = sshrl.u32 %s536, 1
        %s538 = sor.u32 %s536, %s537
        %s539 = sand.u32 51, %s538
        %s540 = sshrl.u32 %s539, 2
        %s541 = sor.u32 %s539, %s540
        %s542 = sand.u32 15, %s541
        %v543 = vld [vmem:[%s530] sm:%s542]
        %v544 = vunpack.c.l.bf16 %v543
        %v545 = vunpack.c.h.bf16 %v543
        %s546 = ssub.s32 4, %s446
        %v547 = vstv %s546
        %vm548 = vcmp.lt.s32.totalorder %v547, 0
        %v549 = vsel %vm548, %v18, %v544
        %s550 = smul.addr %s446, 8
        %v551 = vlaneseq
        %v552 = vshrl.u32 %v551, 7
        %v553 = vstv %s550
        %v554 = vadd.s32 %v552, %v553
        %vm555 = vcmp.lt.s32.totalorder %v554, 37
        %v556 = vsel %vm555, %v549, %v18
        %v557 = vlaneseq
        %v558 = vand.u32 %v557, 127
        %v559 = vadd.s32 %v558, 256
        %vm560 = vcmp.lt.s32.totalorder %v559, 1000
        %v561 = vsel %vm560, %v556, %v18
        %s562 = scalar_lea.vmem [#allocation11], 8
        %v563 = vpack.c.bf16 0.0, %v561
        %s565 = ssub.s32 16, 1
        %566 = vst [vmem:[%s562] sm:%s565] %v563
        %s567 = scalar_lea.vmem %s445, 12
        %s568 = ssub.s32 4, %s446
        %p569 = scmp.lt.s32.totalorder %s568, 0
        %s570 = scalar_select %p569, 0, 255
        %s571 = sshrl.u32 %s570, 1
        %s572 = sor.u32 %s570, %s571
        %s573 = sand.u32 %s572, 85
        %s574 = sshrl.u32 %s573, 1
        %s575 = sor.u32 %s573, %s574
        %s576 = sand.u32 51, %s575
        %s577 = sshrl.u32 %s576, 2
        %s578 = sor.u32 %s576, %s577
        %s579 = sand.u32 15, %s578
        %v580 = vld [vmem:[%s567] sm:%s579]
        %v581 = vunpack.c.l.bf16 %v580
        %v582 = vunpack.c.h.bf16 %v580
        %s583 = ssub.s32 4, %s446
        %v584 = vstv %s583
        %vm585 = vcmp.lt.s32.totalorder %v584, 0
        %v586 = vsel %vm585, %v18, %v581
        %s587 = smul.addr %s446, 8
        %v588 = vlaneseq
        %v589 = vshrl.u32 %v588, 7
        %v590 = vstv %s587
        %v591 = vadd.s32 %v589, %v590
        %vm592 = vcmp.lt.s32.totalorder %v591, 37
        %v593 = vsel %vm592, %v586, %v18
        %v594 = vlaneseq
        %v595 = vand.u32 %v594, 127
        %v596 = vadd.s32 %v595, 384
        %vm597 = vcmp.lt.s32.totalorder %v596, 1000
        %v598 = vsel %vm597, %v593, %v18
        %s599 = scalar_lea.vmem [#allocation11], 12
        %v600 = vpack.c.bf16 0.0, %v598
        %s602 = ssub.s32 16, 1
        %603 = vst [vmem:[%s599] sm:%s602] %v600
        %s604 = scalar_lea.vmem %s445, 16
        %s605 = ssub.s32 4, %s446
        %p606 = scmp.lt.s32.totalorder %s605, 0
        %s607 = scalar_select %p606, 0, 255
        %s608 = sshrl.u32 %s607, 1
        %s609 = sor.u32 %s607, %s608
        %s610 = sand.u32 %s609, 85
        %s611 = sshrl.u32 %s610, 1
        %s612 = sor.u32 %s610, %s611
        %s613 = sand.u32 51, %s612
        %s614 = sshrl.u32 %s613, 2
        %s615 = sor.u32 %s613, %s614
        %s616 = sand.u32 15, %s615
        %v617 = vld [vmem:[%s604] sm:%s616]
        %v618 = vunpack.c.l.bf16 %v617
        %v619 = vunpack.c.h.bf16 %v617
        %s620 = ssub.s32 4, %s446
        %v621 = vstv %s620
        %vm622 = vcmp.lt.s32.totalorder %v621, 0
        %v623 = vsel %vm622, %v18, %v618
        %s624 = smul.addr %s446, 8
        %v625 = vlaneseq
        %v626 = vshrl.u32 %v625, 7
        %v627 = vstv %s624
        %v628 = vadd.s32 %v626, %v627
        %vm629 = vcmp.lt.s32.totalorder %v628, 37
        %v630 = vsel %vm629, %v623, %v18
        %v631 = vlaneseq
        %v632 = vand.u32 %v631, 127
        %v633 = vadd.s32 %v632, 512
        %vm634 = vcmp.lt.s32.totalorder %v633, 1000
        %v635 = vsel %vm634, %v630, %v18
        %s636 = scalar_lea.vmem [#allocation11], 16
        %v637 = vpack.c.bf16 0.0, %v635
        %s639 = ssub.s32 16, 1
        %640 = vst [vmem:[%s636] sm:%s639] %v637
        %s641 = scalar_lea.vmem %s445, 20
        %s642 = ssub.s32 4, %s446
        %p643 = scmp.lt.s32.totalorder %s642, 0
        %s644 = scalar_select %p643, 0, 255
        %s645 = sshrl.u32 %s644, 1
        %s646 = sor.u32 %s644, %s645
        %s647 = sand.u32 %s646, 85
        %s648 = sshrl.u32 %s647, 1
        %s649 = sor.u32 %s647, %s648
        %s650 = sand.u32 51, %s649
        %s651 = sshrl.u32 %s650, 2
        %s652 = sor.u32 %s650, %s651
        %s653 = sand.u32 15, %s652
        %v654 = vld [vmem:[%s641] sm:%s653]
        %v655 = vunpack.c.l.bf16 %v654
        %v656 = vunpack.c.h.bf16 %v654
        %s657 = ssub.s32 4, %s446
        %v658 = vstv %s657
        %vm659 = vcmp.lt.s32.totalorder %v658, 0
        %v660 = vsel %vm659, %v18, %v655
        %s661 = smul.addr %s446, 8
        %v662 = vlaneseq
        %v663 = vshrl.u32 %v662, 7
        %v664 = vstv %s661
        %v665 = vadd.s32 %v663, %v664
        %vm666 = vcmp.lt.s32.totalorder %v665, 37
        %v667 = vsel %vm666, %v660, %v18
        %v668 = vlaneseq
        %v669 = vand.u32 %v668, 127
        %v670 = vadd.s32 %v669, 640
        %vm671 = vcmp.lt.s32.totalorder %v670, 1000
        %v672 = vsel %vm671, %v667, %v18
        %s673 = scalar_lea.vmem [#allocation11], 20
        %v674 = vpack.c.bf16 0.0, %v672
        %s676 = ssub.s32 16, 1
        %677 = vst [vmem:[%s673] sm:%s676] %v674
        %s678 = scalar_lea.vmem %s445, 24
        %s679 = ssub.s32 4, %s446
        %p680 = scmp.lt.s32.totalorder %s679, 0
        %s681 = scalar_select %p680, 0, 255
        %s682 = sshrl.u32 %s681, 1
        %s683 = sor.u32 %s681, %s682
        %s684 = sand.u32 %s683, 85
        %s685 = sshrl.u32 %s684, 1
        %s686 = sor.u32 %s684, %s685
        %s687 = sand.u32 51, %s686
        %s688 = sshrl.u32 %s687, 2
        %s689 = sor.u32 %s687, %s688
        %s690 = sand.u32 15, %s689
        %v691 = vld [vmem:[%s678] sm:%s690]
        %v692 = vunpack.c.l.bf16 %v691
        %v693 = vunpack.c.h.bf16 %v691
        %s694 = ssub.s32 4, %s446
        %v695 = vstv %s694
        %vm696 = vcmp.lt.s32.totalorder %v695, 0
        %v697 = vsel %vm696, %v18, %v692
        %s698 = smul.addr %s446, 8
        %v699 = vlaneseq
        %v700 = vshrl.u32 %v699, 7
        %v701 = vstv %s698
        %v702 = vadd.s32 %v700, %v701
        %vm703 = vcmp.lt.s32.totalorder %v702, 37
        %v704 = vsel %vm703, %v697, %v18
        %v705 = vlaneseq
        %v706 = vand.u32 %v705, 127
        %v707 = vadd.s32 %v706, 768
        %vm708 = vcmp.lt.s32.totalorder %v707, 1000
        %v709 = vsel %vm708, %v704, %v18
        %s710 = scalar_lea.vmem [#allocation11], 24
        %v711 = vpack.c.bf16 0.0, %v709
        %s713 = ssub.s32 16, 1
        %714 = vst [vmem:[%s710] sm:%s713] %v711
        %s715 = scalar_lea.vmem %s445, 28
        %s716 = ssub.s32 4, %s446
        %p717 = scmp.lt.s32.totalorder %s716, 0
        %s718 = scalar_select %p717, 0, 255
        %s719 = sshrl.u32 %s718, 1
        %s720 = sor.u32 %s718, %s719
        %s721 = sand.u32 %s720, 85
        %s722 = sshrl.u32 %s721, 1
        %s723 = sor.u32 %s721, %s722
        %s724 = sand.u32 51, %s723
        %s725 = sshrl.u32 %s724, 2
        %s726 = sor.u32 %s724, %s725
        %s727 = sand.u32 15, %s726
        %v728 = vld [vmem:[%s715] sm:%s727]
        %v729 = vunpack.c.l.bf16 %v728
        %v730 = vunpack.c.h.bf16 %v728
        %s731 = ssub.s32 4, %s446
        %v732 = vstv %s731
        %vm733 = vcmp.lt.s32.totalorder %v732, 0
        %v734 = vsel %vm733, %v18, %v729
        %s735 = smul.addr %s446, 8
        %v736 = vlaneseq
        %v737 = vshrl.u32 %v736, 7
        %v738 = vstv %s735
        %v739 = vadd.s32 %v737, %v738
        %vm740 = vcmp.lt.s32.totalorder %v739, 37
        %v741 = vsel %vm740, %v734, %v18
        %v742 = vlaneseq
        %v743 = vand.u32 %v742, 127
        %v744 = vadd.s32 %v743, 896
        %vm745 = vcmp.lt.s32.totalorder %v744, 1000
        %v746 = vsel %vm745, %v741, %v18
        %s747 = scalar_lea.vmem [#allocation11], 28
        %v748 = vpack.c.bf16 0.0, %v746
        %s750 = ssub.s32 16, 1
        %751 = vst [vmem:[%s747] sm:%s750] %v748
        %s752 = scalar_lea.vmem %s445, 32
        %s753 = sadd.s32 %s446, 1
        %s754 = ssub.s32 4, %s753
        %p755 = scmp.lt.s32.totalorder %s754, 0
        %s756 = scalar_select %p755, 0, 255
        %s757 = sshrl.u32 %s756, 1
        %s758 = sor.u32 %s756, %s757
        %s759 = sand.u32 %s758, 85
        %s760 = sshrl.u32 %s759, 1
        %s761 = sor.u32 %s759, %s760
        %s762 = sand.u32 51, %s761
        %s763 = sshrl.u32 %s762, 2
        %s764 = sor.u32 %s762, %s763
        %s765 = sand.u32 15, %s764
        %v766 = vld [vmem:[%s752] sm:%s765]
        %v767 = vunpack.c.l.bf16 %v766
        %v768 = vunpack.c.h.bf16 %v766
        %s769 = sadd.s32 %s446, 1
        %s770 = ssub.s32 4, %s769
        %v771 = vstv %s770
        %vm772 = vcmp.lt.s32.totalorder %v771, 0
        %v773 = vsel %vm772, %v18, %v767
        %s774 = sadd.s32 %s446, 1
        %s775 = smul.addr %s774, 8
        %v776 = vlaneseq
        %v777 = vshrl.u32 %v776, 7
        %v778 = vstv %s775
        %v779 = vadd.s32 %v777, %v778
        %vm780 = vcmp.lt.s32.totalorder %v779, 37
        %v781 = vsel %vm780, %v773, %v18
        %v782 = vlaneseq
        %v783 = vand.u32 %v782, 127
        %vm785 = vcmp.lt.s32.totalorder %v783, 1000
        %v786 = vsel %vm785, %v781, %v18
        %s787 = scalar_lea.vmem [#allocation11], 32
        %v788 = vpack.c.bf16 0.0, %v786
        %s790 = ssub.s32 16, 1
        %791 = vst [vmem:[%s787] sm:%s790] %v788
        %s792 = scalar_lea.vmem %s445, 36
        %s793 = sadd.s32 %s446, 1
        %s794 = ssub.s32 4, %s793
        %p795 = scmp.lt.s32.totalorder %s794, 0
        %s796 = scalar_select %p795, 0, 255
        %s797 = sshrl.u32 %s796, 1
        %s798 = sor.u32 %s796, %s797
        %s799 = sand.u32 %s798, 85
        %s800 = sshrl.u32 %s799, 1
        %s801 = sor.u32 %s799, %s800
        %s802 = sand.u32 51, %s801
        %s803 = sshrl.u32 %s802, 2
        %s804 = sor.u32 %s802, %s803
        %s805 = sand.u32 15, %s804
        %v806 = vld [vmem:[%s792] sm:%s805]
        %v807 = vunpack.c.l.bf16 %v806
        %v808 = vunpack.c.h.bf16 %v806
        %s809 = sadd.s32 %s446, 1
        %s810 = ssub.s32 4, %s809
        %v811 = vstv %s810
        %vm812 = vcmp.lt.s32.totalorder %v811, 0
        %v813 = vsel %vm812, %v18, %v807
        %s814 = sadd.s32 %s446, 1
        %s815 = smul.addr %s814, 8
        %v816 = vlaneseq
        %v817 = vshrl.u32 %v816, 7
        %v818 = vstv %s815
        %v819 = vadd.s32 %v817, %v818
        %vm820 = vcmp.lt.s32.totalorder %v819, 37
        %v821 = vsel %vm820, %v813, %v18
        %v822 = vlaneseq
        %v823 = vand.u32 %v822, 127
        %v824 = vadd.s32 %v823, 128
        %vm825 = vcmp.lt.s32.totalorder %v824, 1000
        %v826 = vsel %vm825, %v821, %v18
        %s827 = scalar_lea.vmem [#allocation11], 36
        %v828 = vpack.c.bf16 0.0, %v826
        %s830 = ssub.s32 16, 1
        %831 = vst [vmem:[%s827] sm:%s830] %v828
        %s832 = scalar_lea.vmem %s445, 40
        %s833 = sadd.s32 %s446, 1
        %s834 = ssub.s32 4, %s833
        %p835 = scmp.lt.s32.totalorder %s834, 0
        %s836 = scalar_select %p835, 0, 255
        %s837 = sshrl.u32 %s836, 1
        %s838 = sor.u32 %s836, %s837
        %s839 = sand.u32 %s838, 85
        %s840 = sshrl.u32 %s839, 1
        %s841 = sor.u32 %s839, %s840
        %s842 = sand.u32 51, %s841
        %s843 = sshrl.u32 %s842, 2
        %s844 = sor.u32 %s842, %s843
        %s845 = sand.u32 15, %s844
        %v846 = vld [vmem:[%s832] sm:%s845]
        %v847 = vunpack.c.l.bf16 %v846
        %v848 = vunpack.c.h.bf16 %v846
        %s849 = sadd.s32 %s446, 1
        %s850 = ssub.s32 4, %s849
        %v851 = vstv %s850
        %vm852 = vcmp.lt.s32.totalorder %v851, 0
        %v853 = vsel %vm852, %v18, %v847
        %s854 = sadd.s32 %s446, 1
        %s855 = smul.addr %s854, 8
        %v856 = vlaneseq
        %v857 = vshrl.u32 %v856, 7
        %v858 = vstv %s855
        %v859 = vadd.s32 %v857, %v858
        %vm860 = vcmp.lt.s32.totalorder %v859, 37
        %v861 = vsel %vm860, %v853, %v18
        %v862 = vlaneseq
        %v863 = vand.u32 %v862, 127
        %v864 = vadd.s32 %v863, 256
        %vm865 = vcmp.lt.s32.totalorder %v864, 1000
        %v866 = vsel %vm865, %v861, %v18
        %s867 = scalar_lea.vmem [#allocation11], 40
        %v868 = vpack.c.bf16 0.0, %v866
        %s870 = ssub.s32 16, 1
        %871 = vst [vmem:[%s867] sm:%s870] %v868
        %s872 = scalar_lea.vmem %s445, 44
        %s873 = sadd.s32 %s446, 1
        %s874 = ssub.s32 4, %s873
        %p875 = scmp.lt.s32.totalorder %s874, 0
        %s876 = scalar_select %p875, 0, 255
        %s877 = sshrl.u32 %s876, 1
        %s878 = sor.u32 %s876, %s877
        %s879 = sand.u32 %s878, 85
        %s880 = sshrl.u32 %s879, 1
        %s881 = sor.u32 %s879, %s880
        %s882 = sand.u32 51, %s881
        %s883 = sshrl.u32 %s882, 2
        %s884 = sor.u32 %s882, %s883
        %s885 = sand.u32 15, %s884
        %v886 = vld [vmem:[%s872] sm:%s885]
        %v887 = vunpack.c.l.bf16 %v886
        %v888 = vunpack.c.h.bf16 %v886
        %s889 = sadd.s32 %s446, 1
        %s890 = ssub.s32 4, %s889
        %v891 = vstv %s890
        %vm892 = vcmp.lt.s32.totalorder %v891, 0
        %v893 = vsel %vm892, %v18, %v887
        %s894 = sadd.s32 %s446, 1
        %s895 = smul.addr %s894, 8
        %v896 = vlaneseq
        %v897 = vshrl.u32 %v896, 7
        %v898 = vstv %s895
        %v899 = vadd.s32 %v897, %v898
        %vm900 = vcmp.lt.s32.totalorder %v899, 37
        %v901 = vsel %vm900, %v893, %v18
        %v902 = vlaneseq
        %v903 = vand.u32 %v902, 127
        %v904 = vadd.s32 %v903, 384
        %vm905 = vcmp.lt.s32.totalorder %v904, 1000
        %v906 = vsel %vm905, %v901, %v18
        %s907 = scalar_lea.vmem [#allocation11], 44
        %v908 = vpack.c.bf16 0.0, %v906
        %s910 = ssub.s32 16, 1
        %911 = vst [vmem:[%s907] sm:%s910] %v908
        %s912 = scalar_lea.vmem %s445, 48
        %s913 = sadd.s32 %s446, 1
        %s914 = ssub.s32 4, %s913
        %p915 = scmp.lt.s32.totalorder %s914, 0
        %s916 = scalar_select %p915, 0, 255
        %s917 = sshrl.u32 %s916, 1
        %s918 = sor.u32 %s916, %s917
        %s919 = sand.u32 %s918, 85
        %s920 = sshrl.u32 %s919, 1
        %s921 = sor.u32 %s919, %s920
        %s922 = sand.u32 51, %s921
        %s923 = sshrl.u32 %s922, 2
        %s924 = sor.u32 %s922, %s923
        %s925 = sand.u32 15, %s924
        %v926 = vld [vmem:[%s912] sm:%s925]
        %v927 = vunpack.c.l.bf16 %v926
        %v928 = vunpack.c.h.bf16 %v926
        %s929 = sadd.s32 %s446, 1
        %s930 = ssub.s32 4, %s929
        %v931 = vstv %s930
        %vm932 = vcmp.lt.s32.totalorder %v931, 0
        %v933 = vsel %vm932, %v18, %v927
        %s934 = sadd.s32 %s446, 1
        %s935 = smul.addr %s934, 8
        %v936 = vlaneseq
        %v937 = vshrl.u32 %v936, 7
        %v938 = vstv %s935
        %v939 = vadd.s32 %v937, %v938
        %vm940 = vcmp.lt.s32.totalorder %v939, 37
        %v941 = vsel %vm940, %v933, %v18
        %v942 = vlaneseq
        %v943 = vand.u32 %v942, 127
        %v944 = vadd.s32 %v943, 512
        %vm945 = vcmp.lt.s32.totalorder %v944, 1000
        %v946 = vsel %vm945, %v941, %v18
        %s947 = scalar_lea.vmem [#allocation11], 48
        %v948 = vpack.c.bf16 0.0, %v946
        %s950 = ssub.s32 16, 1
        %951 = vst [vmem:[%s947] sm:%s950] %v948
        %s952 = scalar_lea.vmem %s445, 52
        %s953 = sadd.s32 %s446, 1
        %s954 = ssub.s32 4, %s953
        %p955 = scmp.lt.s32.totalorder %s954, 0
        %s956 = scalar_select %p955, 0, 255
        %s957 = sshrl.u32 %s956, 1
        %s958 = sor.u32 %s956, %s957
        %s959 = sand.u32 %s958, 85
        %s960 = sshrl.u32 %s959, 1
        %s961 = sor.u32 %s959, %s960
        %s962 = sand.u32 51, %s961
        %s963 = sshrl.u32 %s962, 2
        %s964 = sor.u32 %s962, %s963
        %s965 = sand.u32 15, %s964
        %v966 = vld [vmem:[%s952] sm:%s965]
        %v967 = vunpack.c.l.bf16 %v966
        %v968 = vunpack.c.h.bf16 %v966
        %s969 = sadd.s32 %s446, 1
        %s970 = ssub.s32 4, %s969
        %v971 = vstv %s970
        %vm972 = vcmp.lt.s32.totalorder %v971, 0
        %v973 = vsel %vm972, %v18, %v967
        %s974 = sadd.s32 %s446, 1
        %s975 = smul.addr %s974, 8
        %v976 = vlaneseq
        %v977 = vshrl.u32 %v976, 7
        %v978 = vstv %s975
        %v979 = vadd.s32 %v977, %v978
        %vm980 = vcmp.lt.s32.totalorder %v979, 37
        %v981 = vsel %vm980, %v973, %v18
        %v982 = vlaneseq
        %v983 = vand.u32 %v982, 127
        %v984 = vadd.s32 %v983, 640
        %vm985 = vcmp.lt.s32.totalorder %v984, 1000
        %v986 = vsel %vm985, %v981, %v18
        %s987 = scalar_lea.vmem [#allocation11], 52
        %v988 = vpack.c.bf16 0.0, %v986
        %s990 = ssub.s32 16, 1
        %991 = vst [vmem:[%s987] sm:%s990] %v988
        %s992 = scalar_lea.vmem %s445, 56
        %s993 = sadd.s32 %s446, 1
        %s994 = ssub.s32 4, %s993
        %p995 = scmp.lt.s32.totalorder %s994, 0
        %s996 = scalar_select %p995, 0, 255
        %s997 = sshrl.u32 %s996, 1
        %s998 = sor.u32 %s996, %s997
        %s999 = sand.u32 %s998, 85
        %s1000 = sshrl.u32 %s999, 1
        %s1001 = sor.u32 %s999, %s1000
        %s1002 = sand.u32 51, %s1001
        %s1003 = sshrl.u32 %s1002, 2
        %s1004 = sor.u32 %s1002, %s1003
        %s1005 = sand.u32 15, %s1004
        %v1006 = vld [vmem:[%s992] sm:%s1005]
        %v1007 = vunpack.c.l.bf16 %v1006
        %v1008 = vunpack.c.h.bf16 %v1006
        %s1009 = sadd.s32 %s446, 1
        %s1010 = ssub.s32 4, %s1009
        %v1011 = vstv %s1010
        %vm1012 = vcmp.lt.s32.totalorder %v1011, 0
        %v1013 = vsel %vm1012, %v18, %v1007
        %s1014 = sadd.s32 %s446, 1
        %s1015 = smul.addr %s1014, 8
        %v1016 = vlaneseq
        %v1017 = vshrl.u32 %v1016, 7
        %v1018 = vstv %s1015
        %v1019 = vadd.s32 %v1017, %v1018
        %vm1020 = vcmp.lt.s32.totalorder %v1019, 37
        %v1021 = vsel %vm1020, %v1013, %v18
        %v1022 = vlaneseq
        %v1023 = vand.u32 %v1022, 127
        %v1024 = vadd.s32 %v1023, 768
        %vm1025 = vcmp.lt.s32.totalorder %v1024, 1000
        %v1026 = vsel %vm1025, %v1021, %v18
        %s1027 = scalar_lea.vmem [#allocation11], 56
        %v1028 = vpack.c.bf16 0.0, %v1026
        %s1030 = ssub.s32 16, 1
        %1031 = vst [vmem:[%s1027] sm:%s1030] %v1028
        %s1032 = scalar_lea.vmem %s445, 60
        %s1033 = sadd.s32 %s446, 1
        %s1034 = ssub.s32 4, %s1033
        %p1035 = scmp.lt.s32.totalorder %s1034, 0
        %s1036 = scalar_select %p1035, 0, 255
        %s1037 = sshrl.u32 %s1036, 1
        %s1038 = sor.u32 %s1036, %s1037
        %s1039 = sand.u32 %s1038, 85
        %s1040 = sshrl.u32 %s1039, 1
        %s1041 = sor.u32 %s1039, %s1040
        %s1042 = sand.u32 51, %s1041
        %s1043 = sshrl.u32 %s1042, 2
        %s1044 = sor.u32 %s1042, %s1043
        %s1045 = sand.u32 15, %s1044
        %v1046 = vld [vmem:[%s1032] sm:%s1045]
        %v1047 = vunpack.c.l.bf16 %v1046
        %v1048 = vunpack.c.h.bf16 %v1046
        %s1049 = sadd.s32 %s446, 1
        %s1050 = ssub.s32 4, %s1049
        %v1051 = vstv %s1050
        %vm1052 = vcmp.lt.s32.totalorder %v1051, 0
        %v1053 = vsel %vm1052, %v18, %v1047
        %s1054 = sadd.s32 %s446, 1
        %s1055 = smul.addr %s1054, 8
        %v1056 = vlaneseq
        %v1057 = vshrl.u32 %v1056, 7
        %v1058 = vstv %s1055
        %v1059 = vadd.s32 %v1057, %v1058
        %vm1060 = vcmp.lt.s32.totalorder %v1059, 37
        %v1061 = vsel %vm1060, %v1053, %v18
        %v1062 = vlaneseq
        %v1063 = vand.u32 %v1062, 127
        %v1064 = vadd.s32 %v1063, 896
        %vm1065 = vcmp.lt.s32.totalorder %v1064, 1000
        %v1066 = vsel %vm1065, %v1061, %v18
        %s1067 = scalar_lea.vmem [#allocation11], 60
        %v1068 = vpack.c.bf16 0.0, %v1066
        %s1070 = ssub.s32 16, 1
        %1071 = vst [vmem:[%s1067] sm:%s1070] %v1068
        %s1072 = scalar_lea.vmem %s445, 64
        %s1073 = sadd.s32 %s446, 2
        %s1074 = ssub.s32 4, %s1073
        %p1075 = scmp.lt.s32.totalorder %s1074, 0
        %s1076 = scalar_select %p1075, 0, 255
        %s1077 = sshrl.u32 %s1076, 1
        %s1078 = sor.u32 %s1076, %s1077
        %s1079 = sand.u32 %s1078, 85
        %s1080 = sshrl.u32 %s1079, 1
        %s1081 = sor.u32 %s1079, %s1080
        %s1082 = sand.u32 51, %s1081
        %s1083 = sshrl.u32 %s1082, 2
        %s1084 = sor.u32 %s1082, %s1083
        %s1085 = sand.u32 15, %s1084
        %v1086 = vld [vmem:[%s1072] sm:%s1085]
        %v1087 = vunpack.c.l.bf16 %v1086
        %v1088 = vunpack.c.h.bf16 %v1086
        %s1089 = sadd.s32 %s446, 2
        %s1090 = ssub.s32 4, %s1089
        %v1091 = vstv %s1090
        %vm1092 = vcmp.lt.s32.totalorder %v1091, 0
        %v1093 = vsel %vm1092, %v18, %v1087
        %s1094 = sadd.s32 %s446, 2
        %s1095 = smul.addr %s1094, 8
        %v1096 = vlaneseq
        %v1097 = vshrl.u32 %v1096, 7
        %v1098 = vstv %s1095
        %v1099 = vadd.s32 %v1097, %v1098
        %vm1100 = vcmp.lt.s32.totalorder %v1099, 37
        %v1101 = vsel %vm1100, %v1093, %v18
        %v1102 = vlaneseq
        %v1103 = vand.u32 %v1102, 127
        %vm1105 = vcmp.lt.s32.totalorder %v1103, 1000
        %v1106 = vsel %vm1105, %v1101, %v18
        %s1107 = scalar_lea.vmem [#allocation11], 64
        %v1108 = vpack.c.bf16 0.0, %v1106
        %s1110 = ssub.s32 16, 1
        %1111 = vst [vmem:[%s1107] sm:%s1110] %v1108
        %s1112 = scalar_lea.vmem %s445, 68
        %s1113 = sadd.s32 %s446, 2
        %s1114 = ssub.s32 4, %s1113
        %p1115 = scmp.lt.s32.totalorder %s1114, 0
        %s1116 = scalar_select %p1115, 0, 255
        %s1117 = sshrl.u32 %s1116, 1
        %s1118 = sor.u32 %s1116, %s1117
        %s1119 = sand.u32 %s1118, 85
        %s1120 = sshrl.u32 %s1119, 1
        %s1121 = sor.u32 %s1119, %s1120
        %s1122 = sand.u32 51, %s1121
        %s1123 = sshrl.u32 %s1122, 2
        %s1124 = sor.u32 %s1122, %s1123
        %s1125 = sand.u32 15, %s1124
        %v1126 = vld [vmem:[%s1112] sm:%s1125]
        %v1127 = vunpack.c.l.bf16 %v1126
        %v1128 = vunpack.c.h.bf16 %v1126
        %s1129 = sadd.s32 %s446, 2
        %s1130 = ssub.s32 4, %s1129
        %v1131 = vstv %s1130
        %vm1132 = vcmp.lt.s32.totalorder %v1131, 0
        %v1133 = vsel %vm1132, %v18, %v1127
        %s1134 = sadd.s32 %s446, 2
        %s1135 = smul.addr %s1134, 8
        %v1136 = vlaneseq
        %v1137 = vshrl.u32 %v1136, 7
        %v1138 = vstv %s1135
        %v1139 = vadd.s32 %v1137, %v1138
        %vm1140 = vcmp.lt.s32.totalorder %v1139, 37
        %v1141 = vsel %vm1140, %v1133, %v18
        %v1142 = vlaneseq
        %v1143 = vand.u32 %v1142, 127
        %v1144 = vadd.s32 %v1143, 128
        %vm1145 = vcmp.lt.s32.totalorder %v1144, 1000
        %v1146 = vsel %vm1145, %v1141, %v18
        %s1147 = scalar_lea.vmem [#allocation11], 68
        %v1148 = vpack.c.bf16 0.0, %v1146
        %s1150 = ssub.s32 16, 1
        %1151 = vst [vmem:[%s1147] sm:%s1150] %v1148
        %s1152 = scalar_lea.vmem %s445, 72
        %s1153 = sadd.s32 %s446, 2
        %s1154 = ssub.s32 4, %s1153
        %p1155 = scmp.lt.s32.totalorder %s1154, 0
        %s1156 = scalar_select %p1155, 0, 255
        %s1157 = sshrl.u32 %s1156, 1
        %s1158 = sor.u32 %s1156, %s1157
        %s1159 = sand.u32 %s1158, 85
        %s1160 = sshrl.u32 %s1159, 1
        %s1161 = sor.u32 %s1159, %s1160
        %s1162 = sand.u32 51, %s1161
        %s1163 = sshrl.u32 %s1162, 2
        %s1164 = sor.u32 %s1162, %s1163
        %s1165 = sand.u32 15, %s1164
        %v1166 = vld [vmem:[%s1152] sm:%s1165]
        %v1167 = vunpack.c.l.bf16 %v1166
        %v1168 = vunpack.c.h.bf16 %v1166
        %s1169 = sadd.s32 %s446, 2
        %s1170 = ssub.s32 4, %s1169
        %v1171 = vstv %s1170
        %vm1172 = vcmp.lt.s32.totalorder %v1171, 0
        %v1173 = vsel %vm1172, %v18, %v1167
        %s1174 = sadd.s32 %s446, 2
        %s1175 = smul.addr %s1174, 8
        %v1176 = vlaneseq
        %v1177 = vshrl.u32 %v1176, 7
        %v1178 = vstv %s1175
        %v1179 = vadd.s32 %v1177, %v1178
        %vm1180 = vcmp.lt.s32.totalorder %v1179, 37
        %v1181 = vsel %vm1180, %v1173, %v18
        %v1182 = vlaneseq
        %v1183 = vand.u32 %v1182, 127
        %v1184 = vadd.s32 %v1183, 256
        %vm1185 = vcmp.lt.s32.totalorder %v1184, 1000
        %v1186 = vsel %vm1185, %v1181, %v18
        %s1187 = scalar_lea.vmem [#allocation11], 72
        %v1188 = vpack.c.bf16 0.0, %v1186
        %s1190 = ssub.s32 16, 1
        %1191 = vst [vmem:[%s1187] sm:%s1190] %v1188
        %s1192 = scalar_lea.vmem %s445, 76
        %s1193 = sadd.s32 %s446, 2
        %s1194 = ssub.s32 4, %s1193
        %p1195 = scmp.lt.s32.totalorder %s1194, 0
        %s1196 = scalar_select %p1195, 0, 255
        %s1197 = sshrl.u32 %s1196, 1
        %s1198 = sor.u32 %s1196, %s1197
        %s1199 = sand.u32 %s1198, 85
        %s1200 = sshrl.u32 %s1199, 1
        %s1201 = sor.u32 %s1199, %s1200
        %s1202 = sand.u32 51, %s1201
        %s1203 = sshrl.u32 %s1202, 2
        %s1204 = sor.u32 %s1202, %s1203
        %s1205 = sand.u32 15, %s1204
        %v1206 = vld [vmem:[%s1192] sm:%s1205]
        %v1207 = vunpack.c.l.bf16 %v1206
        %v1208 = vunpack.c.h.bf16 %v1206
        %s1209 = sadd.s32 %s446, 2
        %s1210 = ssub.s32 4, %s1209
        %v1211 = vstv %s1210
        %vm1212 = vcmp.lt.s32.totalorder %v1211, 0
        %v1213 = vsel %vm1212, %v18, %v1207
        %s1214 = sadd.s32 %s446, 2
        %s1215 = smul.addr %s1214, 8
        %v1216 = vlaneseq
        %v1217 = vshrl.u32 %v1216, 7
        %v1218 = vstv %s1215
        %v1219 = vadd.s32 %v1217, %v1218
        %vm1220 = vcmp.lt.s32.totalorder %v1219, 37
        %v1221 = vsel %vm1220, %v1213, %v18
        %v1222 = vlaneseq
        %v1223 = vand.u32 %v1222, 127
        %v1224 = vadd.s32 %v1223, 384
        %vm1225 = vcmp.lt.s32.totalorder %v1224, 1000
        %v1226 = vsel %vm1225, %v1221, %v18
        %s1227 = scalar_lea.vmem [#allocation11], 76
        %v1228 = vpack.c.bf16 0.0, %v1226
        %s1230 = ssub.s32 16, 1
        %1231 = vst [vmem:[%s1227] sm:%s1230] %v1228
        %s1232 = scalar_lea.vmem %s445, 80
        %s1233 = sadd.s32 %s446, 2
        %s1234 = ssub.s32 4, %s1233
        %p1235 = scmp.lt.s32.totalorder %s1234, 0
        %s1236 = scalar_select %p1235, 0, 255
        %s1237 = sshrl.u32 %s1236, 1
        %s1238 = sor.u32 %s1236, %s1237
        %s1239 = sand.u32 %s1238, 85
        %s1240 = sshrl.u32 %s1239, 1
        %s1241 = sor.u32 %s1239, %s1240
        %s1242 = sand.u32 51, %s1241
        %s1243 = sshrl.u32 %s1242, 2
        %s1244 = sor.u32 %s1242, %s1243
        %s1245 = sand.u32 15, %s1244
        %v1246 = vld [vmem:[%s1232] sm:%s1245]
        %v1247 = vunpack.c.l.bf16 %v1246
        %v1248 = vunpack.c.h.bf16 %v1246
        %s1249 = sadd.s32 %s446, 2
        %s1250 = ssub.s32 4, %s1249
        %v1251 = vstv %s1250
        %vm1252 = vcmp.lt.s32.totalorder %v1251, 0
        %v1253 = vsel %vm1252, %v18, %v1247
        %s1254 = sadd.s32 %s446, 2
        %s1255 = smul.addr %s1254, 8
        %v1256 = vlaneseq
        %v1257 = vshrl.u32 %v1256, 7
        %v1258 = vstv %s1255
        %v1259 = vadd.s32 %v1257, %v1258
        %vm1260 = vcmp.lt.s32.totalorder %v1259, 37
        %v1261 = vsel %vm1260, %v1253, %v18
        %v1262 = vlaneseq
        %v1263 = vand.u32 %v1262, 127
        %v1264 = vadd.s32 %v1263, 512
        %vm1265 = vcmp.lt.s32.totalorder %v1264, 1000
        %v1266 = vsel %vm1265, %v1261, %v18
        %s1267 = scalar_lea.vmem [#allocation11], 80
        %v1268 = vpack.c.bf16 0.0, %v1266
        %s1270 = ssub.s32 16, 1
        %1271 = vst [vmem:[%s1267] sm:%s1270] %v1268
        %s1272 = scalar_lea.vmem %s445, 84
        %s1273 = sadd.s32 %s446, 2
        %s1274 = ssub.s32 4, %s1273
        %p1275 = scmp.lt.s32.totalorder %s1274, 0
        %s1276 = scalar_select %p1275, 0, 255
        %s1277 = sshrl.u32 %s1276, 1
        %s1278 = sor.u32 %s1276, %s1277
        %s1279 = sand.u32 %s1278, 85
        %s1280 = sshrl.u32 %s1279, 1
        %s1281 = sor.u32 %s1279, %s1280
        %s1282 = sand.u32 51, %s1281
        %s1283 = sshrl.u32 %s1282, 2
        %s1284 = sor.u32 %s1282, %s1283
        %s1285 = sand.u32 15, %s1284
        %v1286 = vld [vmem:[%s1272] sm:%s1285]
        %v1287 = vunpack.c.l.bf16 %v1286
        %v1288 = vunpack.c.h.bf16 %v1286
        %s1289 = sadd.s32 %s446, 2
        %s1290 = ssub.s32 4, %s1289
        %v1291 = vstv %s1290
        %vm1292 = vcmp.lt.s32.totalorder %v1291, 0
        %v1293 = vsel %vm1292, %v18, %v1287
        %s1294 = sadd.s32 %s446, 2
        %s1295 = smul.addr %s1294, 8
        %v1296 = vlaneseq
        %v1297 = vshrl.u32 %v1296, 7
        %v1298 = vstv %s1295
        %v1299 = vadd.s32 %v1297, %v1298
        %vm1300 = vcmp.lt.s32.totalorder %v1299, 37
        %v1301 = vsel %vm1300, %v1293, %v18
        %v1302 = vlaneseq
        %v1303 = vand.u32 %v1302, 127
        %v1304 = vadd.s32 %v1303, 640
        %vm1305 = vcmp.lt.s32.totalorder %v1304, 1000
        %v1306 = vsel %vm1305, %v1301, %v18
        %s1307 = scalar_lea.vmem [#allocation11], 84
        %v1308 = vpack.c.bf16 0.0, %v1306
        %s1310 = ssub.s32 16, 1
        %1311 = vst [vmem:[%s1307] sm:%s1310] %v1308
        %s1312 = scalar_lea.vmem %s445, 88
        %s1313 = sadd.s32 %s446, 2
        %s1314 = ssub.s32 4, %s1313
        %p1315 = scmp.lt.s32.totalorder %s1314, 0
        %s1316 = scalar_select %p1315, 0, 255
        %s1317 = sshrl.u32 %s1316, 1
        %s1318 = sor.u32 %s1316, %s1317
        %s1319 = sand.u32 %s1318, 85
        %s1320 = sshrl.u32 %s1319, 1
        %s1321 = sor.u32 %s1319, %s1320
        %s1322 = sand.u32 51, %s1321
        %s1323 = sshrl.u32 %s1322, 2
        %s1324 = sor.u32 %s1322, %s1323
        %s1325 = sand.u32 15, %s1324
        %v1326 = vld [vmem:[%s1312] sm:%s1325]
        %v1327 = vunpack.c.l.bf16 %v1326
        %v1328 = vunpack.c.h.bf16 %v1326
        %s1329 = sadd.s32 %s446, 2
        %s1330 = ssub.s32 4, %s1329
        %v1331 = vstv %s1330
        %vm1332 = vcmp.lt.s32.totalorder %v1331, 0
        %v1333 = vsel %vm1332, %v18, %v1327
        %s1334 = sadd.s32 %s446, 2
        %s1335 = smul.addr %s1334, 8
        %v1336 = vlaneseq
        %v1337 = vshrl.u32 %v1336, 7
        %v1338 = vstv %s1335
        %v1339 = vadd.s32 %v1337, %v1338
        %vm1340 = vcmp.lt.s32.totalorder %v1339, 37
        %v1341 = vsel %vm1340, %v1333, %v18
        %v1342 = vlaneseq
        %v1343 = vand.u32 %v1342, 127
        %v1344 = vadd.s32 %v1343, 768
        %vm1345 = vcmp.lt.s32.totalorder %v1344, 1000
        %v1346 = vsel %vm1345, %v1341, %v18
        %s1347 = scalar_lea.vmem [#allocation11], 88
        %v1348 = vpack.c.bf16 0.0, %v1346
        %s1350 = ssub.s32 16, 1
        %1351 = vst [vmem:[%s1347] sm:%s1350] %v1348
        %s1352 = scalar_lea.vmem %s445, 92
        %s1353 = sadd.s32 %s446, 2
        %s1354 = ssub.s32 4, %s1353
        %p1355 = scmp.lt.s32.totalorder %s1354, 0
        %s1356 = scalar_select %p1355, 0, 255
        %s1357 = sshrl.u32 %s1356, 1
        %s1358 = sor.u32 %s1356, %s1357
        %s1359 = sand.u32 %s1358, 85
        %s1360 = sshrl.u32 %s1359, 1
        %s1361 = sor.u32 %s1359, %s1360
        %s1362 = sand.u32 51, %s1361
        %s1363 = sshrl.u32 %s1362, 2
        %s1364 = sor.u32 %s1362, %s1363
        %s1365 = sand.u32 15, %s1364
        %v1366 = vld [vmem:[%s1352] sm:%s1365]
        %v1367 = vunpack.c.l.bf16 %v1366
        %v1368 = vunpack.c.h.bf16 %v1366
        %s1369 = sadd.s32 %s446, 2
        %s1370 = ssub.s32 4, %s1369
        %v1371 = vstv %s1370
        %vm1372 = vcmp.lt.s32.totalorder %v1371, 0
        %v1373 = vsel %vm1372, %v18, %v1367
        %s1374 = sadd.s32 %s446, 2
        %s1375 = smul.addr %s1374, 8
        %v1376 = vlaneseq
        %v1377 = vshrl.u32 %v1376, 7
        %v1378 = vstv %s1375
        %v1379 = vadd.s32 %v1377, %v1378
        %vm1380 = vcmp.lt.s32.totalorder %v1379, 37
        %v1381 = vsel %vm1380, %v1373, %v18
        %v1382 = vlaneseq
        %v1383 = vand.u32 %v1382, 127
        %v1384 = vadd.s32 %v1383, 896
        %vm1385 = vcmp.lt.s32.totalorder %v1384, 1000
        %v1386 = vsel %vm1385, %v1381, %v18
        %s1387 = scalar_lea.vmem [#allocation11], 92
        %v1388 = vpack.c.bf16 0.0, %v1386
        %s1390 = ssub.s32 16, 1
        %1391 = vst [vmem:[%s1387] sm:%s1390] %v1388
        %s1392 = scalar_lea.vmem %s445, 96
        %s1393 = sadd.s32 %s446, 3
        %s1394 = ssub.s32 4, %s1393
        %p1395 = scmp.lt.s32.totalorder %s1394, 0
        %s1396 = scalar_select %p1395, 0, 255
        %s1397 = sshrl.u32 %s1396, 1
        %s1398 = sor.u32 %s1396, %s1397
        %s1399 = sand.u32 %s1398, 85
        %s1400 = sshrl.u32 %s1399, 1
        %s1401 = sor.u32 %s1399, %s1400
        %s1402 = sand.u32 51, %s1401
        %s1403 = sshrl.u32 %s1402, 2
        %s1404 = sor.u32 %s1402, %s1403
        %s1405 = sand.u32 15, %s1404
        %v1406 = vld [vmem:[%s1392] sm:%s1405]
        %v1407 = vunpack.c.l.bf16 %v1406
        %v1408 = vunpack.c.h.bf16 %v1406
        %s1409 = sadd.s32 %s446, 3
        %s1410 = ssub.s32 4, %s1409
        %v1411 = vstv %s1410
        %vm1412 = vcmp.lt.s32.totalorder %v1411, 0
        %v1413 = vsel %vm1412, %v18, %v1407
        %s1414 = sadd.s32 %s446, 3
        %s1415 = smul.addr %s1414, 8
        %v1416 = vlaneseq
        %v1417 = vshrl.u32 %v1416, 7
        %v1418 = vstv %s1415
        %v1419 = vadd.s32 %v1417, %v1418
        %vm1420 = vcmp.lt.s32.totalorder %v1419, 37
        %v1421 = vsel %vm1420, %v1413, %v18
        %v1422 = vlaneseq
        %v1423 = vand.u32 %v1422, 127
        %vm1425 = vcmp.lt.s32.totalorder %v1423, 1000
        %v1426 = vsel %vm1425, %v1421, %v18
        %s1427 = scalar_lea.vmem [#allocation11], 96
        %v1428 = vpack.c.bf16 0.0, %v1426
        %s1430 = ssub.s32 16, 1
        %1431 = vst [vmem:[%s1427] sm:%s1430] %v1428
        %s1432 = scalar_lea.vmem %s445, 100
        %s1433 = sadd.s32 %s446, 3
        %s1434 = ssub.s32 4, %s1433
        %p1435 = scmp.lt.s32.totalorder %s1434, 0
        %s1436 = scalar_select %p1435, 0, 255
        %s1437 = sshrl.u32 %s1436, 1
        %s1438 = sor.u32 %s1436, %s1437
        %s1439 = sand.u32 %s1438, 85
        %s1440 = sshrl.u32 %s1439, 1
        %s1441 = sor.u32 %s1439, %s1440
        %s1442 = sand.u32 51, %s1441
        %s1443 = sshrl.u32 %s1442, 2
        %s1444 = sor.u32 %s1442, %s1443
        %s1445 = sand.u32 15, %s1444
        %v1446 = vld [vmem:[%s1432] sm:%s1445]
        %v1447 = vunpack.c.l.bf16 %v1446
        %v1448 = vunpack.c.h.bf16 %v1446
        %s1449 = sadd.s32 %s446, 3
        %s1450 = ssub.s32 4, %s1449
        %v1451 = vstv %s1450
        %vm1452 = vcmp.lt.s32.totalorder %v1451, 0
        %v1453 = vsel %vm1452, %v18, %v1447
        %s1454 = sadd.s32 %s446, 3
        %s1455 = smul.addr %s1454, 8
        %v1456 = vlaneseq
        %v1457 = vshrl.u32 %v1456, 7
        %v1458 = vstv %s1455
        %v1459 = vadd.s32 %v1457, %v1458
        %vm1460 = vcmp.lt.s32.totalorder %v1459, 37
        %v1461 = vsel %vm1460, %v1453, %v18
        %v1462 = vlaneseq
        %v1463 = vand.u32 %v1462, 127
        %v1464 = vadd.s32 %v1463, 128
        %vm1465 = vcmp.lt.s32.totalorder %v1464, 1000
        %v1466 = vsel %vm1465, %v1461, %v18
        %s1467 = scalar_lea.vmem [#allocation11], 100
        %v1468 = vpack.c.bf16 0.0, %v1466
        %s1470 = ssub.s32 16, 1
        %1471 = vst [vmem:[%s1467] sm:%s1470] %v1468
        %s1472 = scalar_lea.vmem %s445, 104
        %s1473 = sadd.s32 %s446, 3
        %s1474 = ssub.s32 4, %s1473
        %p1475 = scmp.lt.s32.totalorder %s1474, 0
        %s1476 = scalar_select %p1475, 0, 255
        %s1477 = sshrl.u32 %s1476, 1
        %s1478 = sor.u32 %s1476, %s1477
        %s1479 = sand.u32 %s1478, 85
        %s1480 = sshrl.u32 %s1479, 1
        %s1481 = sor.u32 %s1479, %s1480
        %s1482 = sand.u32 51, %s1481
        %s1483 = sshrl.u32 %s1482, 2
        %s1484 = sor.u32 %s1482, %s1483
        %s1485 = sand.u32 15, %s1484
        %v1486 = vld [vmem:[%s1472] sm:%s1485]
        %v1487 = vunpack.c.l.bf16 %v1486
        %v1488 = vunpack.c.h.bf16 %v1486
        %s1489 = sadd.s32 %s446, 3
        %s1490 = ssub.s32 4, %s1489
        %v1491 = vstv %s1490
        %vm1492 = vcmp.lt.s32.totalorder %v1491, 0
        %v1493 = vsel %vm1492, %v18, %v1487
        %s1494 = sadd.s32 %s446, 3
        %s1495 = smul.addr %s1494, 8
        %v1496 = vlaneseq
        %v1497 = vshrl.u32 %v1496, 7
        %v1498 = vstv %s1495
        %v1499 = vadd.s32 %v1497, %v1498
        %vm1500 = vcmp.lt.s32.totalorder %v1499, 37
        %v1501 = vsel %vm1500, %v1493, %v18
        %v1502 = vlaneseq
        %v1503 = vand.u32 %v1502, 127
        %v1504 = vadd.s32 %v1503, 256
        %vm1505 = vcmp.lt.s32.totalorder %v1504, 1000
        %v1506 = vsel %vm1505, %v1501, %v18
        %s1507 = scalar_lea.vmem [#allocation11], 104
        %v1508 = vpack.c.bf16 0.0, %v1506
        %s1510 = ssub.s32 16, 1
        %1511 = vst [vmem:[%s1507] sm:%s1510] %v1508
        %s1512 = scalar_lea.vmem %s445, 108
        %s1513 = sadd.s32 %s446, 3
        %s1514 = ssub.s32 4, %s1513
        %p1515 = scmp.lt.s32.totalorder %s1514, 0
        %s1516 = scalar_select %p1515, 0, 255
        %s1517 = sshrl.u32 %s1516, 1
        %s1518 = sor.u32 %s1516, %s1517
        %s1519 = sand.u32 %s1518, 85
        %s1520 = sshrl.u32 %s1519, 1
        %s1521 = sor.u32 %s1519, %s1520
        %s1522 = sand.u32 51, %s1521
        %s1523 = sshrl.u32 %s1522, 2
        %s1524 = sor.u32 %s1522, %s1523
        %s1525 = sand.u32 15, %s1524
        %v1526 = vld [vmem:[%s1512] sm:%s1525]
        %v1527 = vunpack.c.l.bf16 %v1526
        %v1528 = vunpack.c.h.bf16 %v1526
        %s1529 = sadd.s32 %s446, 3
        %s1530 = ssub.s32 4, %s1529
        %v1531 = vstv %s1530
        %vm1532 = vcmp.lt.s32.totalorder %v1531, 0
        %v1533 = vsel %vm1532, %v18, %v1527
        %s1534 = sadd.s32 %s446, 3
        %s1535 = smul.addr %s1534, 8
        %v1536 = vlaneseq
        %v1537 = vshrl.u32 %v1536, 7
        %v1538 = vstv %s1535
        %v1539 = vadd.s32 %v1537, %v1538
        %vm1540 = vcmp.lt.s32.totalorder %v1539, 37
        %v1541 = vsel %vm1540, %v1533, %v18
        %v1542 = vlaneseq
        %v1543 = vand.u32 %v1542, 127
        %v1544 = vadd.s32 %v1543, 384
        %vm1545 = vcmp.lt.s32.totalorder %v1544, 1000
        %v1546 = vsel %vm1545, %v1541, %v18
        %s1547 = scalar_lea.vmem [#allocation11], 108
        %v1548 = vpack.c.bf16 0.0, %v1546
        %s1550 = ssub.s32 16, 1
        %1551 = vst [vmem:[%s1547] sm:%s1550] %v1548
        %s1552 = scalar_lea.vmem %s445, 112
        %s1553 = sadd.s32 %s446, 3
        %s1554 = ssub.s32 4, %s1553
        %p1555 = scmp.lt.s32.totalorder %s1554, 0
        %s1556 = scalar_select %p1555, 0, 255
        %s1557 = sshrl.u32 %s1556, 1
        %s1558 = sor.u32 %s1556, %s1557
        %s1559 = sand.u32 %s1558, 85
        %s1560 = sshrl.u32 %s1559, 1
        %s1561 = sor.u32 %s1559, %s1560
        %s1562 = sand.u32 51, %s1561
        %s1563 = sshrl.u32 %s1562, 2
        %s1564 = sor.u32 %s1562, %s1563
        %s1565 = sand.u32 15, %s1564
        %v1566 = vld [vmem:[%s1552] sm:%s1565]
        %v1567 = vunpack.c.l.bf16 %v1566
        %v1568 = vunpack.c.h.bf16 %v1566
        %s1569 = sadd.s32 %s446, 3
        %s1570 = ssub.s32 4, %s1569
        %v1571 = vstv %s1570
        %vm1572 = vcmp.lt.s32.totalorder %v1571, 0
        %v1573 = vsel %vm1572, %v18, %v1567
        %s1574 = sadd.s32 %s446, 3
        %s1575 = smul.addr %s1574, 8
        %v1576 = vlaneseq
        %v1577 = vshrl.u32 %v1576, 7
        %v1578 = vstv %s1575
        %v1579 = vadd.s32 %v1577, %v1578
        %vm1580 = vcmp.lt.s32.totalorder %v1579, 37
        %v1581 = vsel %vm1580, %v1573, %v18
        %v1582 = vlaneseq
        %v1583 = vand.u32 %v1582, 127
        %v1584 = vadd.s32 %v1583, 512
        %vm1585 = vcmp.lt.s32.totalorder %v1584, 1000
        %v1586 = vsel %vm1585, %v1581, %v18
        %s1587 = scalar_lea.vmem [#allocation11], 112
        %v1588 = vpack.c.bf16 0.0, %v1586
        %s1590 = ssub.s32 16, 1
        %1591 = vst [vmem:[%s1587] sm:%s1590] %v1588
        %s1592 = scalar_lea.vmem %s445, 116
        %s1593 = sadd.s32 %s446, 3
        %s1594 = ssub.s32 4, %s1593
        %p1595 = scmp.lt.s32.totalorder %s1594, 0
        %s1596 = scalar_select %p1595, 0, 255
        %s1597 = sshrl.u32 %s1596, 1
        %s1598 = sor.u32 %s1596, %s1597
        %s1599 = sand.u32 %s1598, 85
        %s1600 = sshrl.u32 %s1599, 1
        %s1601 = sor.u32 %s1599, %s1600
        %s1602 = sand.u32 51, %s1601
        %s1603 = sshrl.u32 %s1602, 2
        %s1604 = sor.u32 %s1602, %s1603
        %s1605 = sand.u32 15, %s1604
        %v1606 = vld [vmem:[%s1592] sm:%s1605]
        %v1607 = vunpack.c.l.bf16 %v1606
        %v1608 = vunpack.c.h.bf16 %v1606
        %s1609 = sadd.s32 %s446, 3
        %s1610 = ssub.s32 4, %s1609
        %v1611 = vstv %s1610
        %vm1612 = vcmp.lt.s32.totalorder %v1611, 0
        %v1613 = vsel %vm1612, %v18, %v1607
        %s1614 = sadd.s32 %s446, 3
        %s1615 = smul.addr %s1614, 8
        %v1616 = vlaneseq
        %v1617 = vshrl.u32 %v1616, 7
        %v1618 = vstv %s1615
        %v1619 = vadd.s32 %v1617, %v1618
        %vm1620 = vcmp.lt.s32.totalorder %v1619, 37
        %v1621 = vsel %vm1620, %v1613, %v18
        %v1622 = vlaneseq
        %v1623 = vand.u32 %v1622, 127
        %v1624 = vadd.s32 %v1623, 640
        %vm1625 = vcmp.lt.s32.totalorder %v1624, 1000
        %v1626 = vsel %vm1625, %v1621, %v18
        %s1627 = scalar_lea.vmem [#allocation11], 116
        %v1628 = vpack.c.bf16 0.0, %v1626
        %s1630 = ssub.s32 16, 1
        %1631 = vst [vmem:[%s1627] sm:%s1630] %v1628
        %s1632 = scalar_lea.vmem %s445, 120
        %s1633 = sadd.s32 %s446, 3
        %s1634 = ssub.s32 4, %s1633
        %p1635 = scmp.lt.s32.totalorder %s1634, 0
        %s1636 = scalar_select %p1635, 0, 255
        %s1637 = sshrl.u32 %s1636, 1
        %s1638 = sor.u32 %s1636, %s1637
        %s1639 = sand.u32 %s1638, 85
        %s1640 = sshrl.u32 %s1639, 1
        %s1641 = sor.u32 %s1639, %s1640
        %s1642 = sand.u32 51, %s1641
        %s1643 = sshrl.u32 %s1642, 2
        %s1644 = sor.u32 %s1642, %s1643
        %s1645 = sand.u32 15, %s1644
        %v1646 = vld [vmem:[%s1632] sm:%s1645]
        %v1647 = vunpack.c.l.bf16 %v1646
        %v1648 = vunpack.c.h.bf16 %v1646
        %s1649 = sadd.s32 %s446, 3
        %s1650 = ssub.s32 4, %s1649
        %v1651 = vstv %s1650
        %vm1652 = vcmp.lt.s32.totalorder %v1651, 0
        %v1653 = vsel %vm1652, %v18, %v1647
        %s1654 = sadd.s32 %s446, 3
        %s1655 = smul.addr %s1654, 8
        %v1656 = vlaneseq
        %v1657 = vshrl.u32 %v1656, 7
        %v1658 = vstv %s1655
        %v1659 = vadd.s32 %v1657, %v1658
        %vm1660 = vcmp.lt.s32.totalorder %v1659, 37
        %v1661 = vsel %vm1660, %v1653, %v18
        %v1662 = vlaneseq
        %v1663 = vand.u32 %v1662, 127
        %v1664 = vadd.s32 %v1663, 768
        %vm1665 = vcmp.lt.s32.totalorder %v1664, 1000
        %v1666 = vsel %vm1665, %v1661, %v18
        %s1667 = scalar_lea.vmem [#allocation11], 120
        %v1668 = vpack.c.bf16 0.0, %v1666
        %s1670 = ssub.s32 16, 1
        %1671 = vst [vmem:[%s1667] sm:%s1670] %v1668
        %s1672 = scalar_lea.vmem %s445, 124
        %s1673 = sadd.s32 %s446, 3
        %s1674 = ssub.s32 4, %s1673
        %p1675 = scmp.lt.s32.totalorder %s1674, 0
        %s1676 = scalar_select %p1675, 0, 255
        %s1677 = sshrl.u32 %s1676, 1
        %s1678 = sor.u32 %s1676, %s1677
        %s1679 = sand.u32 %s1678, 85
        %s1680 = sshrl.u32 %s1679, 1
        %s1681 = sor.u32 %s1679, %s1680
        %s1682 = sand.u32 51, %s1681
        %s1683 = sshrl.u32 %s1682, 2
        %s1684 = sor.u32 %s1682, %s1683
        %s1685 = sand.u32 15, %s1684
        %v1686 = vld [vmem:[%s1672] sm:%s1685]
        %v1687 = vunpack.c.l.bf16 %v1686
        %v1688 = vunpack.c.h.bf16 %v1686
        %s1689 = sadd.s32 %s446, 3
        %s1690 = ssub.s32 4, %s1689
        %v1691 = vstv %s1690
        %vm1692 = vcmp.lt.s32.totalorder %v1691, 0
        %v1693 = vsel %vm1692, %v18, %v1687
        %s1694 = sadd.s32 %s446, 3
        %s1695 = smul.addr %s1694, 8
        %v1696 = vlaneseq
        %v1697 = vshrl.u32 %v1696, 7
        %v1698 = vstv %s1695
        %v1699 = vadd.s32 %v1697, %v1698
        %vm1700 = vcmp.lt.s32.totalorder %v1699, 37
        %v1701 = vsel %vm1700, %v1693, %v18
        %v1702 = vlaneseq
        %v1703 = vand.u32 %v1702, 127
        %v1704 = vadd.s32 %v1703, 896
        %vm1705 = vcmp.lt.s32.totalorder %v1704, 1000
        %v1706 = vsel %vm1705, %v1701, %v18
        %s1707 = scalar_lea.vmem [#allocation11], 124
        %v1708 = vpack.c.bf16 0.0, %v1706
        %s1710 = ssub.s32 16, 1
        %1711 = vst [vmem:[%s1707] sm:%s1710] %v1708
        %v1712 = vld [vmem:[#allocation11] sm:$0xff]
        %v1713 = vld [vmem:[#allocation11 + $0x8] sm:$0xff]
        %v1714 = vld [vmem:[#allocation11 + $0x10] sm:$0xff]
        %v1715 = vld [vmem:[#allocation11 + $0x18] sm:$0xff]
        %v1716 = vld [vmem:[#allocation11 + $0x20] sm:$0xff]
        %v1717 = vld [vmem:[#allocation11 + $0x28] sm:$0xff]
        %v1718 = vld [vmem:[#allocation11 + $0x30] sm:$0xff]
        %v1719 = vld [vmem:[#allocation11 + $0x38] sm:$0xff]
        %v1720 = vld [vmem:[#allocation11 + $0x40] sm:$0xff]
        %v1721 = vld [vmem:[#allocation11 + $0x48] sm:$0xff]
        %v1722 = vld [vmem:[#allocation11 + $0x50] sm:$0xff]
        %v1723 = vld [vmem:[#allocation11 + $0x58] sm:$0xff]
        %v1724 = vld [vmem:[#allocation11 + $0x60] sm:$0xff]
        %v1725 = vld [vmem:[#allocation11 + $0x68] sm:$0xff]
        %v1726 = vld [vmem:[#allocation11 + $0x70] sm:$0xff]
        %v1727 = vld [vmem:[#allocation11 + $0x78] sm:$0xff]
        %v1728 = vld [vmem:[#allocation7] sm:$0xff]
        %v1729 = vld [vmem:[#allocation7 + $0x8] sm:$0xff]
        %v1730 = vld [vmem:[#allocation7 + $0x10] sm:$0xff]
        %v1731 = vld [vmem:[#allocation7 + $0x18] sm:$0xff]
        %v1732 = vld [vmem:[#allocation7 + $0x20] sm:$0xff]
        %v1733 = vld [vmem:[#allocation7 + $0x28] sm:$0xff]
        %v1734 = vld [vmem:[#allocation7 + $0x30] sm:$0xff]
        %v1735 = vld [vmem:[#allocation7 + $0x38] sm:$0xff]
        %v1736 = vld [vmem:[#allocation7 + $0x40] sm:$0xff]
        %v1737 = vld [vmem:[#allocation7 + $0x48] sm:$0xff]
        %v1738 = vld [vmem:[#allocation7 + $0x50] sm:$0xff]
        %v1739 = vld [vmem:[#allocation7 + $0x58] sm:$0xff]
        %v1740 = vld [vmem:[#allocation7 + $0x60] sm:$0xff]
        %v1741 = vld [vmem:[#allocation7 + $0x68] sm:$0xff]
        %v1742 = vld [vmem:[#allocation7 + $0x70] sm:$0xff]
        %v1743 = vld [vmem:[#allocation7 + $0x78] sm:$0xff]
        %v1744 = vld [vmem:[#allocation7 + $0x80] sm:$0xff]
        %v1745 = vld [vmem:[#allocation7 + $0x88] sm:$0xff]
        %v1746 = vld [vmem:[#allocation7 + $0x90] sm:$0xff]
        %v1747 = vld [vmem:[#allocation7 + $0x98] sm:$0xff]
        %v1748 = vld [vmem:[#allocation7 + $0xa0] sm:$0xff]
        %v1749 = vld [vmem:[#allocation7 + $0xa8] sm:$0xff]
        %v1750 = vld [vmem:[#allocation7 + $0xb0] sm:$0xff]
        %v1751 = vld [vmem:[#allocation7 + $0xb8] sm:$0xff]
        %v1752 = vld [vmem:[#allocation7 + $0xc0] sm:$0xff]
        %v1753 = vld [vmem:[#allocation7 + $0xc8] sm:$0xff]
        %v1754 = vld [vmem:[#allocation7 + $0xd0] sm:$0xff]
        %v1755 = vld [vmem:[#allocation7 + $0xd8] sm:$0xff]
        %v1756 = vld [vmem:[#allocation7 + $0xe0] sm:$0xff]
        %v1757 = vld [vmem:[#allocation7 + $0xe8] sm:$0xff]
        %v1758 = vld [vmem:[#allocation7 + $0xf0] sm:$0xff]
        %v1759 = vld [vmem:[#allocation7 + $0xf8] sm:$0xff]
        %v1760 = vld [vmem:[#allocation7 + $0x100] sm:$0xff]
        %v1761 = vld [vmem:[#allocation7 + $0x108] sm:$0xff]
        %v1762 = vld [vmem:[#allocation7 + $0x110] sm:$0xff]
        %v1763 = vld [vmem:[#allocation7 + $0x118] sm:$0xff]
        %v1764 = vld [vmem:[#allocation7 + $0x120] sm:$0xff]
        %v1765 = vld [vmem:[#allocation7 + $0x128] sm:$0xff]
        %v1766 = vld [vmem:[#allocation7 + $0x130] sm:$0xff]
        %v1767 = vld [vmem:[#allocation7 + $0x138] sm:$0xff]
        %v1768 = vld [vmem:[#allocation7 + $0x140] sm:$0xff]
        %v1769 = vld [vmem:[#allocation7 + $0x148] sm:$0xff]
        %v1770 = vld [vmem:[#allocation7 + $0x150] sm:$0xff]
        %v1771 = vld [vmem:[#allocation7 + $0x158] sm:$0xff]
        %v1772 = vld [vmem:[#allocation7 + $0x160] sm:$0xff]
        %v1773 = vld [vmem:[#allocation7 + $0x168] sm:$0xff]
        %v1774 = vld [vmem:[#allocation7 + $0x170] sm:$0xff]
        %v1775 = vld [vmem:[#allocation7 + $0x178] sm:$0xff]
        %v1776 = vld [vmem:[#allocation7 + $0x180] sm:$0xff]
        %v1777 = vld [vmem:[#allocation7 + $0x188] sm:$0xff]
        %v1778 = vld [vmem:[#allocation7 + $0x190] sm:$0xff]
        %v1779 = vld [vmem:[#allocation7 + $0x198] sm:$0xff]
        %v1780 = vld [vmem:[#allocation7 + $0x1a0] sm:$0xff]
        %v1781 = vld [vmem:[#allocation7 + $0x1a8] sm:$0xff]
        %v1782 = vld [vmem:[#allocation7 + $0x1b0] sm:$0xff]
        %v1783 = vld [vmem:[#allocation7 + $0x1b8] sm:$0xff]
        %v1784 = vld [vmem:[#allocation7 + $0x1c0] sm:$0xff]
        %v1785 = vld [vmem:[#allocation7 + $0x1c8] sm:$0xff]
        %v1786 = vld [vmem:[#allocation7 + $0x1d0] sm:$0xff]
        %v1787 = vld [vmem:[#allocation7 + $0x1d8] sm:$0xff]
        %v1788 = vld [vmem:[#allocation7 + $0x1e0] sm:$0xff]
        %v1789 = vld [vmem:[#allocation7 + $0x1e8] sm:$0xff]
        %v1790 = vld [vmem:[#allocation7 + $0x1f0] sm:$0xff]
        %v1791 = vld [vmem:[#allocation7 + $0x1f8] sm:$0xff]
        %v1792 = vld [vmem:[#allocation7 + $0x200] sm:$0xff]
        %v1793 = vld [vmem:[#allocation7 + $0x208] sm:$0xff]
        %v1794 = vld [vmem:[#allocation7 + $0x210] sm:$0xff]
        %v1795 = vld [vmem:[#allocation7 + $0x218] sm:$0xff]
        %v1796 = vld [vmem:[#allocation7 + $0x220] sm:$0xff]
        %v1797 = vld [vmem:[#allocation7 + $0x228] sm:$0xff]
        %v1798 = vld [vmem:[#allocation7 + $0x230] sm:$0xff]
        %v1799 = vld [vmem:[#allocation7 + $0x238] sm:$0xff]
        %v1800 = vld [vmem:[#allocation7 + $0x240] sm:$0xff]
        %v1801 = vld [vmem:[#allocation7 + $0x248] sm:$0xff]
        %v1802 = vld [vmem:[#allocation7 + $0x250] sm:$0xff]
        %v1803 = vld [vmem:[#allocation7 + $0x258] sm:$0xff]
        %v1804 = vld [vmem:[#allocation7 + $0x260] sm:$0xff]
        %v1805 = vld [vmem:[#allocation7 + $0x268] sm:$0xff]
        %v1806 = vld [vmem:[#allocation7 + $0x270] sm:$0xff]
        %v1807 = vld [vmem:[#allocation7 + $0x278] sm:$0xff]
        %v1808 = vld [vmem:[#allocation7 + $0x280] sm:$0xff]
        %v1809 = vld [vmem:[#allocation7 + $0x288] sm:$0xff]
        %v1810 = vld [vmem:[#allocation7 + $0x290] sm:$0xff]
        %v1811 = vld [vmem:[#allocation7 + $0x298] sm:$0xff]
        %v1812 = vld [vmem:[#allocation7 + $0x2a0] sm:$0xff]
        %v1813 = vld [vmem:[#allocation7 + $0x2a8] sm:$0xff]
        %v1814 = vld [vmem:[#allocation7 + $0x2b0] sm:$0xff]
        %v1815 = vld [vmem:[#allocation7 + $0x2b8] sm:$0xff]
        %v1816 = vld [vmem:[#allocation7 + $0x2c0] sm:$0xff]
        %v1817 = vld [vmem:[#allocation7 + $0x2c8] sm:$0xff]
        %v1818 = vld [vmem:[#allocation7 + $0x2d0] sm:$0xff]
        %v1819 = vld [vmem:[#allocation7 + $0x2d8] sm:$0xff]
        %v1820 = vld [vmem:[#allocation7 + $0x2e0] sm:$0xff]
        %v1821 = vld [vmem:[#allocation7 + $0x2e8] sm:$0xff]
        %v1822 = vld [vmem:[#allocation7 + $0x2f0] sm:$0xff]
        %v1823 = vld [vmem:[#allocation7 + $0x2f8] sm:$0xff]
        %v1824 = vld [vmem:[#allocation7 + $0x300] sm:$0xff]
        %v1825 = vld [vmem:[#allocation7 + $0x308] sm:$0xff]
        %v1826 = vld [vmem:[#allocation7 + $0x310] sm:$0xff]
        %v1827 = vld [vmem:[#allocation7 + $0x318] sm:$0xff]
        %v1828 = vld [vmem:[#allocation7 + $0x320] sm:$0xff]
        %v1829 = vld [vmem:[#allocation7 + $0x328] sm:$0xff]
        %v1830 = vld [vmem:[#allocation7 + $0x330] sm:$0xff]
        %v1831 = vld [vmem:[#allocation7 + $0x338] sm:$0xff]
        %v1832 = vld [vmem:[#allocation7 + $0x340] sm:$0xff]
        %v1833 = vld [vmem:[#allocation7 + $0x348] sm:$0xff]
        %v1834 = vld [vmem:[#allocation7 + $0x350] sm:$0xff]
        %v1835 = vld [vmem:[#allocation7 + $0x358] sm:$0xff]
        %v1836 = vld [vmem:[#allocation7 + $0x360] sm:$0xff]
        %v1837 = vld [vmem:[#allocation7 + $0x368] sm:$0xff]
        %v1838 = vld [vmem:[#allocation7 + $0x370] sm:$0xff]
        %v1839 = vld [vmem:[#allocation7 + $0x378] sm:$0xff]
        %v1840 = vld [vmem:[#allocation7 + $0x380] sm:$0xff]
        %v1841 = vld [vmem:[#allocation7 + $0x388] sm:$0xff]
        %v1842 = vld [vmem:[#allocation7 + $0x390] sm:$0xff]
        %v1843 = vld [vmem:[#allocation7 + $0x398] sm:$0xff]
        %v1844 = vld [vmem:[#allocation7 + $0x3a0] sm:$0xff]
        %v1845 = vld [vmem:[#allocation7 + $0x3a8] sm:$0xff]
        %v1846 = vld [vmem:[#allocation7 + $0x3b0] sm:$0xff]
        %v1847 = vld [vmem:[#allocation7 + $0x3b8] sm:$0xff]
        %v1848 = vld [vmem:[#allocation7 + $0x3c0] sm:$0xff]
        %v1849 = vld [vmem:[#allocation7 + $0x3c8] sm:$0xff]
        %v1850 = vld [vmem:[#allocation7 + $0x3d0] sm:$0xff]
        %v1851 = vld [vmem:[#allocation7 + $0x3d8] sm:$0xff]
        %v1852 = vld [vmem:[#allocation7 + $0x3e0] sm:$0xff]
        %v1853 = vld [vmem:[#allocation7 + $0x3e8] sm:$0xff]
        %v1854 = vld [vmem:[#allocation7 + $0x3f0] sm:$0xff]
        %v1855 = vld [vmem:[#allocation7 + $0x3f8] sm:$0xff]
        %v1856 = vld [vmem:[#allocation7 + $0x400] sm:$0xff]
        %v1857 = vld [vmem:[#allocation7 + $0x408] sm:$0xff]
        %v1858 = vld [vmem:[#allocation7 + $0x410] sm:$0xff]
        %v1859 = vld [vmem:[#allocation7 + $0x418] sm:$0xff]
        %v1860 = vld [vmem:[#allocation7 + $0x420] sm:$0xff]
        %v1861 = vld [vmem:[#allocation7 + $0x428] sm:$0xff]
        %v1862 = vld [vmem:[#allocation7 + $0x430] sm:$0xff]
        %v1863 = vld [vmem:[#allocation7 + $0x438] sm:$0xff]
        %v1864 = vld [vmem:[#allocation7 + $0x440] sm:$0xff]
        %v1865 = vld [vmem:[#allocation7 + $0x448] sm:$0xff]
        %v1866 = vld [vmem:[#allocation7 + $0x450] sm:$0xff]
        %v1867 = vld [vmem:[#allocation7 + $0x458] sm:$0xff]
        %v1868 = vld [vmem:[#allocation7 + $0x460] sm:$0xff]
        %v1869 = vld [vmem:[#allocation7 + $0x468] sm:$0xff]
        %v1870 = vld [vmem:[#allocation7 + $0x470] sm:$0xff]
        %v1871 = vld [vmem:[#allocation7 + $0x478] sm:$0xff]
        %v1872 = vld [vmem:[#allocation7 + $0x480] sm:$0xff]
        %v1873 = vld [vmem:[#allocation7 + $0x488] sm:$0xff]
        %v1874 = vld [vmem:[#allocation7 + $0x490] sm:$0xff]
        %v1875 = vld [vmem:[#allocation7 + $0x498] sm:$0xff]
        %v1876 = vld [vmem:[#allocation7 + $0x4a0] sm:$0xff]
        %v1877 = vld [vmem:[#allocation7 + $0x4a8] sm:$0xff]
        %v1878 = vld [vmem:[#allocation7 + $0x4b0] sm:$0xff]
        %v1879 = vld [vmem:[#allocation7 + $0x4b8] sm:$0xff]
        %v1880 = vld [vmem:[#allocation7 + $0x4c0] sm:$0xff]
        %v1881 = vld [vmem:[#allocation7 + $0x4c8] sm:$0xff]
        %v1882 = vld [vmem:[#allocation7 + $0x4d0] sm:$0xff]
        %v1883 = vld [vmem:[#allocation7 + $0x4d8] sm:$0xff]
        %v1884 = vld [vmem:[#allocation7 + $0x4e0] sm:$0xff]
        %v1885 = vld [vmem:[#allocation7 + $0x4e8] sm:$0xff]
        %v1886 = vld [vmem:[#allocation7 + $0x4f0] sm:$0xff]
        %v1887 = vld [vmem:[#allocation7 + $0x4f8] sm:$0xff]
        %v1888 = vld [vmem:[#allocation7 + $0x500] sm:$0xff]
        %v1889 = vld [vmem:[#allocation7 + $0x508] sm:$0xff]
        %v1890 = vld [vmem:[#allocation7 + $0x510] sm:$0xff]
        %v1891 = vld [vmem:[#allocation7 + $0x518] sm:$0xff]
        %v1892 = vld [vmem:[#allocation7 + $0x520] sm:$0xff]
        %v1893 = vld [vmem:[#allocation7 + $0x528] sm:$0xff]
        %v1894 = vld [vmem:[#allocation7 + $0x530] sm:$0xff]
        %v1895 = vld [vmem:[#allocation7 + $0x538] sm:$0xff]
        %v1896 = vld [vmem:[#allocation7 + $0x540] sm:$0xff]
        %v1897 = vld [vmem:[#allocation7 + $0x548] sm:$0xff]
        %v1898 = vld [vmem:[#allocation7 + $0x550] sm:$0xff]
        %v1899 = vld [vmem:[#allocation7 + $0x558] sm:$0xff]
        %v1900 = vld [vmem:[#allocation7 + $0x560] sm:$0xff]
        %v1901 = vld [vmem:[#allocation7 + $0x568] sm:$0xff]
        %v1902 = vld [vmem:[#allocation7 + $0x570] sm:$0xff]
        %v1903 = vld [vmem:[#allocation7 + $0x578] sm:$0xff]
        %v1904 = vld [vmem:[#allocation7 + $0x580] sm:$0xff]
        %v1905 = vld [vmem:[#allocation7 + $0x588] sm:$0xff]
        %v1906 = vld [vmem:[#allocation7 + $0x590] sm:$0xff]
        %v1907 = vld [vmem:[#allocation7 + $0x598] sm:$0xff]
        %v1908 = vld [vmem:[#allocation7 + $0x5a0] sm:$0xff]
        %v1909 = vld [vmem:[#allocation7 + $0x5a8] sm:$0xff]
        %v1910 = vld [vmem:[#allocation7 + $0x5b0] sm:$0xff]
        %v1911 = vld [vmem:[#allocation7 + $0x5b8] sm:$0xff]
        %v1912 = vld [vmem:[#allocation7 + $0x5c0] sm:$0xff]
        %v1913 = vld [vmem:[#allocation7 + $0x5c8] sm:$0xff]
        %v1914 = vld [vmem:[#allocation7 + $0x5d0] sm:$0xff]
        %v1915 = vld [vmem:[#allocation7 + $0x5d8] sm:$0xff]
        %v1916 = vld [vmem:[#allocation7 + $0x5e0] sm:$0xff]
        %v1917 = vld [vmem:[#allocation7 + $0x5e8] sm:$0xff]
        %v1918 = vld [vmem:[#allocation7 + $0x5f0] sm:$0xff]
        %v1919 = vld [vmem:[#allocation7 + $0x5f8] sm:$0xff]
        %v1920 = vld [vmem:[#allocation7 + $0x600] sm:$0xff]
        %v1921 = vld [vmem:[#allocation7 + $0x608] sm:$0xff]
        %v1922 = vld [vmem:[#allocation7 + $0x610] sm:$0xff]
        %v1923 = vld [vmem:[#allocation7 + $0x618] sm:$0xff]
        %v1924 = vld [vmem:[#allocation7 + $0x620] sm:$0xff]
        %v1925 = vld [vmem:[#allocation7 + $0x628] sm:$0xff]
        %v1926 = vld [vmem:[#allocation7 + $0x630] sm:$0xff]
        %v1927 = vld [vmem:[#allocation7 + $0x638] sm:$0xff]
        %v1928 = vld [vmem:[#allocation7 + $0x640] sm:$0xff]
        %v1929 = vld [vmem:[#allocation7 + $0x648] sm:$0xff]
        %v1930 = vld [vmem:[#allocation7 + $0x650] sm:$0xff]
        %v1931 = vld [vmem:[#allocation7 + $0x658] sm:$0xff]
        %v1932 = vld [vmem:[#allocation7 + $0x660] sm:$0xff]
        %v1933 = vld [vmem:[#allocation7 + $0x668] sm:$0xff]
        %v1934 = vld [vmem:[#allocation7 + $0x670] sm:$0xff]
        %v1935 = vld [vmem:[#allocation7 + $0x678] sm:$0xff]
        %v1936 = vld [vmem:[#allocation7 + $0x680] sm:$0xff]
        %v1937 = vld [vmem:[#allocation7 + $0x688] sm:$0xff]
        %v1938 = vld [vmem:[#allocation7 + $0x690] sm:$0xff]
        %v1939 = vld [vmem:[#allocation7 + $0x698] sm:$0xff]
        %v1940 = vld [vmem:[#allocation7 + $0x6a0] sm:$0xff]
        %v1941 = vld [vmem:[#allocation7 + $0x6a8] sm:$0xff]
        %v1942 = vld [vmem:[#allocation7 + $0x6b0] sm:$0xff]
        %v1943 = vld [vmem:[#allocation7 + $0x6b8] sm:$0xff]
        %v1944 = vld [vmem:[#allocation7 + $0x6c0] sm:$0xff]
        %v1945 = vld [vmem:[#allocation7 + $0x6c8] sm:$0xff]
        %v1946 = vld [vmem:[#allocation7 + $0x6d0] sm:$0xff]
        %v1947 = vld [vmem:[#allocation7 + $0x6d8] sm:$0xff]
        %v1948 = vld [vmem:[#allocation7 + $0x6e0] sm:$0xff]
        %v1949 = vld [vmem:[#allocation7 + $0x6e8] sm:$0xff]
        %v1950 = vld [vmem:[#allocation7 + $0x6f0] sm:$0xff]
        %v1951 = vld [vmem:[#allocation7 + $0x6f8] sm:$0xff]
        %v1952 = vld [vmem:[#allocation7 + $0x700] sm:$0xff]
        %v1953 = vld [vmem:[#allocation7 + $0x708] sm:$0xff]
        %v1954 = vld [vmem:[#allocation7 + $0x710] sm:$0xff]
        %v1955 = vld [vmem:[#allocation7 + $0x718] sm:$0xff]
        %v1956 = vld [vmem:[#allocation7 + $0x720] sm:$0xff]
        %v1957 = vld [vmem:[#allocation7 + $0x728] sm:$0xff]
        %v1958 = vld [vmem:[#allocation7 + $0x730] sm:$0xff]
        %v1959 = vld [vmem:[#allocation7 + $0x738] sm:$0xff]
        %v1960 = vld [vmem:[#allocation7 + $0x740] sm:$0xff]
        %v1961 = vld [vmem:[#allocation7 + $0x748] sm:$0xff]
        %v1962 = vld [vmem:[#allocation7 + $0x750] sm:$0xff]
        %v1963 = vld [vmem:[#allocation7 + $0x758] sm:$0xff]
        %v1964 = vld [vmem:[#allocation7 + $0x760] sm:$0xff]
        %v1965 = vld [vmem:[#allocation7 + $0x768] sm:$0xff]
        %v1966 = vld [vmem:[#allocation7 + $0x770] sm:$0xff]
        %v1967 = vld [vmem:[#allocation7 + $0x778] sm:$0xff]
        %v1968 = vld [vmem:[#allocation7 + $0x780] sm:$0xff]
        %v1969 = vld [vmem:[#allocation7 + $0x788] sm:$0xff]
        %v1970 = vld [vmem:[#allocation7 + $0x790] sm:$0xff]
        %v1971 = vld [vmem:[#allocation7 + $0x798] sm:$0xff]
        %v1972 = vld [vmem:[#allocation7 + $0x7a0] sm:$0xff]
        %v1973 = vld [vmem:[#allocation7 + $0x7a8] sm:$0xff]
        %v1974 = vld [vmem:[#allocation7 + $0x7b0] sm:$0xff]
        %v1975 = vld [vmem:[#allocation7 + $0x7b8] sm:$0xff]
        %v1976 = vld [vmem:[#allocation7 + $0x7c0] sm:$0xff]
        %v1977 = vld [vmem:[#allocation7 + $0x7c8] sm:$0xff]
        %v1978 = vld [vmem:[#allocation7 + $0x7d0] sm:$0xff]
        %v1979 = vld [vmem:[#allocation7 + $0x7d8] sm:$0xff]
        %v1980 = vld [vmem:[#allocation7 + $0x7e0] sm:$0xff]
        %v1981 = vld [vmem:[#allocation7 + $0x7e8] sm:$0xff]
        %v1982 = vld [vmem:[#allocation7 + $0x7f0] sm:$0xff]
        %v1983 = vld [vmem:[#allocation7 + $0x7f8] sm:$0xff]
        %v1984 = vld [vmem:[%s1] sm:$0xf]
        %v1986 = vperm.slane %v1984, 0
        %v1987 = vperm.slane %v1984, 1
        %v1988 = vperm.slane %v1984, 2
        %v1989 = vperm.slane %v1984, 3
        %v2010 = vunpack.c.l.b16 %v1712
        %v2011 = vunpack.c.h.b16 %v1712
        %v2012 = vunpack.c.l.b16 %v1713
        %v2013 = vunpack.c.h.b16 %v1713
        %v2014 = vunpack.c.l.b16 %v1714
        %v2015 = vunpack.c.h.b16 %v1714
        %v2016 = vunpack.c.l.b16 %v1715
        %v2017 = vunpack.c.h.b16 %v1715
        %v2018 = vunpack.c.l.b16 %v1716
        %v2019 = vunpack.c.h.b16 %v1716
        %v2020 = vunpack.c.l.b16 %v1717
        %v2021 = vunpack.c.h.b16 %v1717
        %v2022 = vunpack.c.l.b16 %v1718
        %v2023 = vunpack.c.h.b16 %v1718
        %v2024 = vunpack.c.l.b16 %v1719
        %v2025 = vunpack.c.h.b16 %v1719
        %v2026 = vunpack.c.l.b16 %v1720
        %v2027 = vunpack.c.h.b16 %v1720
        %v2028 = vunpack.c.l.b16 %v1721
        %v2029 = vunpack.c.h.b16 %v1721
        %v2030 = vunpack.c.l.b16 %v1722
        %v2031 = vunpack.c.h.b16 %v1722
        %v2032 = vunpack.c.l.b16 %v1723
        %v2033 = vunpack.c.h.b16 %v1723
        %v2034 = vunpack.c.l.b16 %v1724
        %v2035 = vunpack.c.h.b16 %v1724
        %v2036 = vunpack.c.l.b16 %v1725
        %v2037 = vunpack.c.h.b16 %v1725
        %v2038 = vunpack.c.l.b16 %v1726
        %v2039 = vunpack.c.h.b16 %v1726
        %v2040 = vunpack.c.l.b16 %v1727
        %v2041 = vunpack.c.h.b16 %v1727
        %v2042 = vpack.c.b16 %v2018, %v2010
        %v2043 = vpack.c.b16 %v2019, %v2011
        %v2044 = vpack.c.b16 %v2020, %v2012
        %v2045 = vpack.c.b16 %v2021, %v2013
        %v2046 = vpack.c.b16 %v2022, %v2014
        %v2047 = vpack.c.b16 %v2023, %v2015
        %v2048 = vpack.c.b16 %v2024, %v2016
        %v2049 = vpack.c.b16 %v2025, %v2017
        %v2050 = vpack.c.b16 %v2034, %v2026
        %v2051 = vpack.c.b16 %v2035, %v2027
        %v2052 = vpack.c.b16 %v2036, %v2028
        %v2053 = vpack.c.b16 %v2037, %v2029
        %v2054 = vpack.c.b16 %v2038, %v2030
        %v2055 = vpack.c.b16 %v2039, %v2031
        %v2056 = vpack.c.b16 %v2040, %v2032
        %v2057 = vpack.c.b16 %v2041, %v2033
        %v2330 = vunpack.c.l.b16 %v1728
        %v2331 = vunpack.c.h.b16 %v1728
        %v2332 = vunpack.c.l.b16 %v1729
        %v2333 = vunpack.c.h.b16 %v1729
        %v2334 = vunpack.c.l.b16 %v1730
        %v2335 = vunpack.c.h.b16 %v1730
        %v2336 = vunpack.c.l.b16 %v1731
        %v2337 = vunpack.c.h.b16 %v1731
        %v2338 = vunpack.c.l.b16 %v1732
        %v2339 = vunpack.c.h.b16 %v1732
        %v2340 = vunpack.c.l.b16 %v1733
        %v2341 = vunpack.c.h.b16 %v1733
        %v2342 = vunpack.c.l.b16 %v1734
        %v2343 = vunpack.c.h.b16 %v1734
        %v2344 = vunpack.c.l.b16 %v1735
        %v2345 = vunpack.c.h.b16 %v1735
        %v2346 = vunpack.c.l.b16 %v1736
        %v2347 = vunpack.c.h.b16 %v1736
        %v2348 = vunpack.c.l.b16 %v1737
        %v2349 = vunpack.c.h.b16 %v1737
        %v2350 = vunpack.c.l.b16 %v1738
        %v2351 = vunpack.c.h.b16 %v1738
        %v2352 = vunpack.c.l.b16 %v1739
        %v2353 = vunpack.c.h.b16 %v1739
        %v2354 = vunpack.c.l.b16 %v1740
        %v2355 = vunpack.c.h.b16 %v1740
        %v2356 = vunpack.c.l.b16 %v1741
        %v2357 = vunpack.c.h.b16 %v1741
        %v2358 = vunpack.c.l.b16 %v1742
        %v2359 = vunpack.c.h.b16 %v1742
        %v2360 = vunpack.c.l.b16 %v1743
        %v2361 = vunpack.c.h.b16 %v1743
        %v2362 = vunpack.c.l.b16 %v1744
        %v2363 = vunpack.c.h.b16 %v1744
        %v2364 = vunpack.c.l.b16 %v1745
        %v2365 = vunpack.c.h.b16 %v1745
        %v2366 = vunpack.c.l.b16 %v1746
        %v2367 = vunpack.c.h.b16 %v1746
        %v2368 = vunpack.c.l.b16 %v1747
        %v2369 = vunpack.c.h.b16 %v1747
        %v2370 = vunpack.c.l.b16 %v1748
        %v2371 = vunpack.c.h.b16 %v1748
        %v2372 = vunpack.c.l.b16 %v1749
        %v2373 = vunpack.c.h.b16 %v1749
        %v2374 = vunpack.c.l.b16 %v1750
        %v2375 = vunpack.c.h.b16 %v1750
        %v2376 = vunpack.c.l.b16 %v1751
        %v2377 = vunpack.c.h.b16 %v1751
        %v2378 = vunpack.c.l.b16 %v1752
        %v2379 = vunpack.c.h.b16 %v1752
        %v2380 = vunpack.c.l.b16 %v1753
        %v2381 = vunpack.c.h.b16 %v1753
        %v2382 = vunpack.c.l.b16 %v1754
        %v2383 = vunpack.c.h.b16 %v1754
        %v2384 = vunpack.c.l.b16 %v1755
        %v2385 = vunpack.c.h.b16 %v1755
        %v2386 = vunpack.c.l.b16 %v1756
        %v2387 = vunpack.c.h.b16 %v1756
        %v2388 = vunpack.c.l.b16 %v1757
        %v2389 = vunpack.c.h.b16 %v1757
        %v2390 = vunpack.c.l.b16 %v1758
        %v2391 = vunpack.c.h.b16 %v1758
        %v2392 = vunpack.c.l.b16 %v1759
        %v2393 = vunpack.c.h.b16 %v1759
        %v2394 = vunpack.c.l.b16 %v1760
        %v2395 = vunpack.c.h.b16 %v1760
        %v2396 = vunpack.c.l.b16 %v1761
        %v2397 = vunpack.c.h.b16 %v1761
        %v2398 = vunpack.c.l.b16 %v1762
        %v2399 = vunpack.c.h.b16 %v1762
        %v2400 = vunpack.c.l.b16 %v1763
        %v2401 = vunpack.c.h.b16 %v1763
        %v2402 = vunpack.c.l.b16 %v1764
        %v2403 = vunpack.c.h.b16 %v1764
        %v2404 = vunpack.c.l.b16 %v1765
        %v2405 = vunpack.c.h.b16 %v1765
        %v2406 = vunpack.c.l.b16 %v1766
        %v2407 = vunpack.c.h.b16 %v1766
        %v2408 = vunpack.c.l.b16 %v1767
        %v2409 = vunpack.c.h.b16 %v1767
        %v2410 = vunpack.c.l.b16 %v1768
        %v2411 = vunpack.c.h.b16 %v1768
        %v2412 = vunpack.c.l.b16 %v1769
        %v2413 = vunpack.c.h.b16 %v1769
        %v2414 = vunpack.c.l.b16 %v1770
        %v2415 = vunpack.c.h.b16 %v1770
        %v2416 = vunpack.c.l.b16 %v1771
        %v2417 = vunpack.c.h.b16 %v1771
        %v2418 = vunpack.c.l.b16 %v1772
        %v2419 = vunpack.c.h.b16 %v1772
        %v2420 = vunpack.c.l.b16 %v1773
        %v2421 = vunpack.c.h.b16 %v1773
        %v2422 = vunpack.c.l.b16 %v1774
        %v2423 = vunpack.c.h.b16 %v1774
        %v2424 = vunpack.c.l.b16 %v1775
        %v2425 = vunpack.c.h.b16 %v1775
        %v2426 = vunpack.c.l.b16 %v1776
        %v2427 = vunpack.c.h.b16 %v1776
        %v2428 = vunpack.c.l.b16 %v1777
        %v2429 = vunpack.c.h.b16 %v1777
        %v2430 = vunpack.c.l.b16 %v1778
        %v2431 = vunpack.c.h.b16 %v1778
        %v2432 = vunpack.c.l.b16 %v1779
        %v2433 = vunpack.c.h.b16 %v1779
        %v2434 = vunpack.c.l.b16 %v1780
        %v2435 = vunpack.c.h.b16 %v1780
        %v2436 = vunpack.c.l.b16 %v1781
        %v2437 = vunpack.c.h.b16 %v1781
        %v2438 = vunpack.c.l.b16 %v1782
        %v2439 = vunpack.c.h.b16 %v1782
        %v2440 = vunpack.c.l.b16 %v1783
        %v2441 = vunpack.c.h.b16 %v1783
        %v2442 = vunpack.c.l.b16 %v1784
        %v2443 = vunpack.c.h.b16 %v1784
        %v2444 = vunpack.c.l.b16 %v1785
        %v2445 = vunpack.c.h.b16 %v1785
        %v2446 = vunpack.c.l.b16 %v1786
        %v2447 = vunpack.c.h.b16 %v1786
        %v2448 = vunpack.c.l.b16 %v1787
        %v2449 = vunpack.c.h.b16 %v1787
        %v2450 = vunpack.c.l.b16 %v1788
        %v2451 = vunpack.c.h.b16 %v1788
        %v2452 = vunpack.c.l.b16 %v1789
        %v2453 = vunpack.c.h.b16 %v1789
        %v2454 = vunpack.c.l.b16 %v1790
        %v2455 = vunpack.c.h.b16 %v1790
        %v2456 = vunpack.c.l.b16 %v1791
        %v2457 = vunpack.c.h.b16 %v1791
        %v2458 = vunpack.c.l.b16 %v1792
        %v2459 = vunpack.c.h.b16 %v1792
        %v2460 = vunpack.c.l.b16 %v1793
        %v2461 = vunpack.c.h.b16 %v1793
        %v2462 = vunpack.c.l.b16 %v1794
        %v2463 = vunpack.c.h.b16 %v1794
        %v2464 = vunpack.c.l.b16 %v1795
        %v2465 = vunpack.c.h.b16 %v1795
        %v2466 = vunpack.c.l.b16 %v1796
        %v2467 = vunpack.c.h.b16 %v1796
        %v2468 = vunpack.c.l.b16 %v1797
        %v2469 = vunpack.c.h.b16 %v1797
        %v2470 = vunpack.c.l.b16 %v1798
        %v2471 = vunpack.c.h.b16 %v1798
        %v2472 = vunpack.c.l.b16 %v1799
        %v2473 = vunpack.c.h.b16 %v1799
        %v2474 = vunpack.c.l.b16 %v1800
        %v2475 = vunpack.c.h.b16 %v1800
        %v2476 = vunpack.c.l.b16 %v1801
        %v2477 = vunpack.c.h.b16 %v1801
        %v2478 = vunpack.c.l.b16 %v1802
        %v2479 = vunpack.c.h.b16 %v1802
        %v2480 = vunpack.c.l.b16 %v1803
        %v2481 = vunpack.c.h.b16 %v1803
        %v2482 = vunpack.c.l.b16 %v1804
        %v2483 = vunpack.c.h.b16 %v1804
        %v2484 = vunpack.c.l.b16 %v1805
        %v2485 = vunpack.c.h.b16 %v1805
        %v2486 = vunpack.c.l.b16 %v1806
        %v2487 = vunpack.c.h.b16 %v1806
        %v2488 = vunpack.c.l.b16 %v1807
        %v2489 = vunpack.c.h.b16 %v1807
        %v2490 = vunpack.c.l.b16 %v1808
        %v2491 = vunpack.c.h.b16 %v1808
        %v2492 = vunpack.c.l.b16 %v1809
        %v2493 = vunpack.c.h.b16 %v1809
        %v2494 = vunpack.c.l.b16 %v1810
        %v2495 = vunpack.c.h.b16 %v1810
        %v2496 = vunpack.c.l.b16 %v1811
        %v2497 = vunpack.c.h.b16 %v1811
        %v2498 = vunpack.c.l.b16 %v1812
        %v2499 = vunpack.c.h.b16 %v1812
        %v2500 = vunpack.c.l.b16 %v1813
        %v2501 = vunpack.c.h.b16 %v1813
        %v2502 = vunpack.c.l.b16 %v1814
        %v2503 = vunpack.c.h.b16 %v1814
        %v2504 = vunpack.c.l.b16 %v1815
        %v2505 = vunpack.c.h.b16 %v1815
        %v2506 = vunpack.c.l.b16 %v1816
        %v2507 = vunpack.c.h.b16 %v1816
        %v2508 = vunpack.c.l.b16 %v1817
        %v2509 = vunpack.c.h.b16 %v1817
        %v2510 = vunpack.c.l.b16 %v1818
        %v2511 = vunpack.c.h.b16 %v1818
        %v2512 = vunpack.c.l.b16 %v1819
        %v2513 = vunpack.c.h.b16 %v1819
        %v2514 = vunpack.c.l.b16 %v1820
        %v2515 = vunpack.c.h.b16 %v1820
        %v2516 = vunpack.c.l.b16 %v1821
        %v2517 = vunpack.c.h.b16 %v1821
        %v2518 = vunpack.c.l.b16 %v1822
        %v2519 = vunpack.c.h.b16 %v1822
        %v2520 = vunpack.c.l.b16 %v1823
        %v2521 = vunpack.c.h.b16 %v1823
        %v2522 = vunpack.c.l.b16 %v1824
        %v2523 = vunpack.c.h.b16 %v1824
        %v2524 = vunpack.c.l.b16 %v1825
        %v2525 = vunpack.c.h.b16 %v1825
        %v2526 = vunpack.c.l.b16 %v1826
        %v2527 = vunpack.c.h.b16 %v1826
        %v2528 = vunpack.c.l.b16 %v1827
        %v2529 = vunpack.c.h.b16 %v1827
        %v2530 = vunpack.c.l.b16 %v1828
        %v2531 = vunpack.c.h.b16 %v1828
        %v2532 = vunpack.c.l.b16 %v1829
        %v2533 = vunpack.c.h.b16 %v1829
        %v2534 = vunpack.c.l.b16 %v1830
        %v2535 = vunpack.c.h.b16 %v1830
        %v2536 = vunpack.c.l.b16 %v1831
        %v2537 = vunpack.c.h.b16 %v1831
        %v2538 = vunpack.c.l.b16 %v1832
        %v2539 = vunpack.c.h.b16 %v1832
        %v2540 = vunpack.c.l.b16 %v1833
        %v2541 = vunpack.c.h.b16 %v1833
        %v2542 = vunpack.c.l.b16 %v1834
        %v2543 = vunpack.c.h.b16 %v1834
        %v2544 = vunpack.c.l.b16 %v1835
        %v2545 = vunpack.c.h.b16 %v1835
        %v2546 = vunpack.c.l.b16 %v1836
        %v2547 = vunpack.c.h.b16 %v1836
        %v2548 = vunpack.c.l.b16 %v1837
        %v2549 = vunpack.c.h.b16 %v1837
        %v2550 = vunpack.c.l.b16 %v1838
        %v2551 = vunpack.c.h.b16 %v1838
        %v2552 = vunpack.c.l.b16 %v1839
        %v2553 = vunpack.c.h.b16 %v1839
        %v2554 = vunpack.c.l.b16 %v1840
        %v2555 = vunpack.c.h.b16 %v1840
        %v2556 = vunpack.c.l.b16 %v1841
        %v2557 = vunpack.c.h.b16 %v1841
        %v2558 = vunpack.c.l.b16 %v1842
        %v2559 = vunpack.c.h.b16 %v1842
        %v2560 = vunpack.c.l.b16 %v1843
        %v2561 = vunpack.c.h.b16 %v1843
        %v2562 = vunpack.c.l.b16 %v1844
        %v2563 = vunpack.c.h.b16 %v1844
        %v2564 = vunpack.c.l.b16 %v1845
        %v2565 = vunpack.c.h.b16 %v1845
        %v2566 = vunpack.c.l.b16 %v1846
        %v2567 = vunpack.c.h.b16 %v1846
        %v2568 = vunpack.c.l.b16 %v1847
        %v2569 = vunpack.c.h.b16 %v1847
        %v2570 = vunpack.c.l.b16 %v1848
        %v2571 = vunpack.c.h.b16 %v1848
        %v2572 = vunpack.c.l.b16 %v1849
        %v2573 = vunpack.c.h.b16 %v1849
        %v2574 = vunpack.c.l.b16 %v1850
        %v2575 = vunpack.c.h.b16 %v1850
        %v2576 = vunpack.c.l.b16 %v1851
        %v2577 = vunpack.c.h.b16 %v1851
        %v2578 = vunpack.c.l.b16 %v1852
        %v2579 = vunpack.c.h.b16 %v1852
        %v2580 = vunpack.c.l.b16 %v1853
        %v2581 = vunpack.c.h.b16 %v1853
        %v2582 = vunpack.c.l.b16 %v1854
        %v2583 = vunpack.c.h.b16 %v1854
        %v2584 = vunpack.c.l.b16 %v1855
        %v2585 = vunpack.c.h.b16 %v1855
        %v2586 = vunpack.c.l.b16 %v1856
        %v2587 = vunpack.c.h.b16 %v1856
        %v2588 = vunpack.c.l.b16 %v1857
        %v2589 = vunpack.c.h.b16 %v1857
        %v2590 = vunpack.c.l.b16 %v1858
        %v2591 = vunpack.c.h.b16 %v1858
        %v2592 = vunpack.c.l.b16 %v1859
        %v2593 = vunpack.c.h.b16 %v1859
        %v2594 = vunpack.c.l.b16 %v1860
        %v2595 = vunpack.c.h.b16 %v1860
        %v2596 = vunpack.c.l.b16 %v1861
        %v2597 = vunpack.c.h.b16 %v1861
        %v2598 = vunpack.c.l.b16 %v1862
        %v2599 = vunpack.c.h.b16 %v1862
        %v2600 = vunpack.c.l.b16 %v1863
        %v2601 = vunpack.c.h.b16 %v1863
        %v2602 = vunpack.c.l.b16 %v1864
        %v2603 = vunpack.c.h.b16 %v1864
        %v2604 = vunpack.c.l.b16 %v1865
        %v2605 = vunpack.c.h.b16 %v1865
        %v2606 = vunpack.c.l.b16 %v1866
        %v2607 = vunpack.c.h.b16 %v1866
        %v2608 = vunpack.c.l.b16 %v1867
        %v2609 = vunpack.c.h.b16 %v1867
        %v2610 = vunpack.c.l.b16 %v1868
        %v2611 = vunpack.c.h.b16 %v1868
        %v2612 = vunpack.c.l.b16 %v1869
        %v2613 = vunpack.c.h.b16 %v1869
        %v2614 = vunpack.c.l.b16 %v1870
        %v2615 = vunpack.c.h.b16 %v1870
        %v2616 = vunpack.c.l.b16 %v1871
        %v2617 = vunpack.c.h.b16 %v1871
        %v2618 = vunpack.c.l.b16 %v1872
        %v2619 = vunpack.c.h.b16 %v1872
        %v2620 = vunpack.c.l.b16 %v1873
        %v2621 = vunpack.c.h.b16 %v1873
        %v2622 = vunpack.c.l.b16 %v1874
        %v2623 = vunpack.c.h.b16 %v1874
        %v2624 = vunpack.c.l.b16 %v1875
        %v2625 = vunpack.c.h.b16 %v1875
        %v2626 = vunpack.c.l.b16 %v1876
        %v2627 = vunpack.c.h.b16 %v1876
        %v2628 = vunpack.c.l.b16 %v1877
        %v2629 = vunpack.c.h.b16 %v1877
        %v2630 = vunpack.c.l.b16 %v1878
        %v2631 = vunpack.c.h.b16 %v1878
        %v2632 = vunpack.c.l.b16 %v1879
        %v2633 = vunpack.c.h.b16 %v1879
        %v2634 = vunpack.c.l.b16 %v1880
        %v2635 = vunpack.c.h.b16 %v1880
        %v2636 = vunpack.c.l.b16 %v1881
        %v2637 = vunpack.c.h.b16 %v1881
        %v2638 = vunpack.c.l.b16 %v1882
        %v2639 = vunpack.c.h.b16 %v1882
        %v2640 = vunpack.c.l.b16 %v1883
        %v2641 = vunpack.c.h.b16 %v1883
        %v2642 = vunpack.c.l.b16 %v1884
        %v2643 = vunpack.c.h.b16 %v1884
        %v2644 = vunpack.c.l.b16 %v1885
        %v2645 = vunpack.c.h.b16 %v1885
        %v2646 = vunpack.c.l.b16 %v1886
        %v2647 = vunpack.c.h.b16 %v1886
        %v2648 = vunpack.c.l.b16 %v1887
        %v2649 = vunpack.c.h.b16 %v1887
        %v2650 = vunpack.c.l.b16 %v1888
        %v2651 = vunpack.c.h.b16 %v1888
        %v2652 = vunpack.c.l.b16 %v1889
        %v2653 = vunpack.c.h.b16 %v1889
        %v2654 = vunpack.c.l.b16 %v1890
        %v2655 = vunpack.c.h.b16 %v1890
        %v2656 = vunpack.c.l.b16 %v1891
        %v2657 = vunpack.c.h.b16 %v1891
        %v2658 = vunpack.c.l.b16 %v1892
        %v2659 = vunpack.c.h.b16 %v1892
        %v2660 = vunpack.c.l.b16 %v1893
        %v2661 = vunpack.c.h.b16 %v1893
        %v2662 = vunpack.c.l.b16 %v1894
        %v2663 = vunpack.c.h.b16 %v1894
        %v2664 = vunpack.c.l.b16 %v1895
        %v2665 = vunpack.c.h.b16 %v1895
        %v2666 = vunpack.c.l.b16 %v1896
        %v2667 = vunpack.c.h.b16 %v1896
        %v2668 = vunpack.c.l.b16 %v1897
        %v2669 = vunpack.c.h.b16 %v1897
        %v2670 = vunpack.c.l.b16 %v1898
        %v2671 = vunpack.c.h.b16 %v1898
        %v2672 = vunpack.c.l.b16 %v1899
        %v2673 = vunpack.c.h.b16 %v1899
        %v2674 = vunpack.c.l.b16 %v1900
        %v2675 = vunpack.c.h.b16 %v1900
        %v2676 = vunpack.c.l.b16 %v1901
        %v2677 = vunpack.c.h.b16 %v1901
        %v2678 = vunpack.c.l.b16 %v1902
        %v2679 = vunpack.c.h.b16 %v1902
        %v2680 = vunpack.c.l.b16 %v1903
        %v2681 = vunpack.c.h.b16 %v1903
        %v2682 = vunpack.c.l.b16 %v1904
        %v2683 = vunpack.c.h.b16 %v1904
        %v2684 = vunpack.c.l.b16 %v1905
        %v2685 = vunpack.c.h.b16 %v1905
        %v2686 = vunpack.c.l.b16 %v1906
        %v2687 = vunpack.c.h.b16 %v1906
        %v2688 = vunpack.c.l.b16 %v1907
        %v2689 = vunpack.c.h.b16 %v1907
        %v2690 = vunpack.c.l.b16 %v1908
        %v2691 = vunpack.c.h.b16 %v1908
        %v2692 = vunpack.c.l.b16 %v1909
        %v2693 = vunpack.c.h.b16 %v1909
        %v2694 = vunpack.c.l.b16 %v1910
        %v2695 = vunpack.c.h.b16 %v1910
        %v2696 = vunpack.c.l.b16 %v1911
        %v2697 = vunpack.c.h.b16 %v1911
        %v2698 = vunpack.c.l.b16 %v1912
        %v2699 = vunpack.c.h.b16 %v1912
        %v2700 = vunpack.c.l.b16 %v1913
        %v2701 = vunpack.c.h.b16 %v1913
        %v2702 = vunpack.c.l.b16 %v1914
        %v2703 = vunpack.c.h.b16 %v1914
        %v2704 = vunpack.c.l.b16 %v1915
        %v2705 = vunpack.c.h.b16 %v1915
        %v2706 = vunpack.c.l.b16 %v1916
        %v2707 = vunpack.c.h.b16 %v1916
        %v2708 = vunpack.c.l.b16 %v1917
        %v2709 = vunpack.c.h.b16 %v1917
        %v2710 = vunpack.c.l.b16 %v1918
        %v2711 = vunpack.c.h.b16 %v1918
        %v2712 = vunpack.c.l.b16 %v1919
        %v2713 = vunpack.c.h.b16 %v1919
        %v2714 = vunpack.c.l.b16 %v1920
        %v2715 = vunpack.c.h.b16 %v1920
        %v2716 = vunpack.c.l.b16 %v1921
        %v2717 = vunpack.c.h.b16 %v1921
        %v2718 = vunpack.c.l.b16 %v1922
        %v2719 = vunpack.c.h.b16 %v1922
        %v2720 = vunpack.c.l.b16 %v1923
        %v2721 = vunpack.c.h.b16 %v1923
        %v2722 = vunpack.c.l.b16 %v1924
        %v2723 = vunpack.c.h.b16 %v1924
        %v2724 = vunpack.c.l.b16 %v1925
        %v2725 = vunpack.c.h.b16 %v1925
        %v2726 = vunpack.c.l.b16 %v1926
        %v2727 = vunpack.c.h.b16 %v1926
        %v2728 = vunpack.c.l.b16 %v1927
        %v2729 = vunpack.c.h.b16 %v1927
        %v2730 = vunpack.c.l.b16 %v1928
        %v2731 = vunpack.c.h.b16 %v1928
        %v2732 = vunpack.c.l.b16 %v1929
        %v2733 = vunpack.c.h.b16 %v1929
        %v2734 = vunpack.c.l.b16 %v1930
        %v2735 = vunpack.c.h.b16 %v1930
        %v2736 = vunpack.c.l.b16 %v1931
        %v2737 = vunpack.c.h.b16 %v1931
        %v2738 = vunpack.c.l.b16 %v1932
        %v2739 = vunpack.c.h.b16 %v1932
        %v2740 = vunpack.c.l.b16 %v1933
        %v2741 = vunpack.c.h.b16 %v1933
        %v2742 = vunpack.c.l.b16 %v1934
        %v2743 = vunpack.c.h.b16 %v1934
        %v2744 = vunpack.c.l.b16 %v1935
        %v2745 = vunpack.c.h.b16 %v1935
        %v2746 = vunpack.c.l.b16 %v1936
        %v2747 = vunpack.c.h.b16 %v1936
        %v2748 = vunpack.c.l.b16 %v1937
        %v2749 = vunpack.c.h.b16 %v1937
        %v2750 = vunpack.c.l.b16 %v1938
        %v2751 = vunpack.c.h.b16 %v1938
        %v2752 = vunpack.c.l.b16 %v1939
        %v2753 = vunpack.c.h.b16 %v1939
        %v2754 = vunpack.c.l.b16 %v1940
        %v2755 = vunpack.c.h.b16 %v1940
        %v2756 = vunpack.c.l.b16 %v1941
        %v2757 = vunpack.c.h.b16 %v1941
        %v2758 = vunpack.c.l.b16 %v1942
        %v2759 = vunpack.c.h.b16 %v1942
        %v2760 = vunpack.c.l.b16 %v1943
        %v2761 = vunpack.c.h.b16 %v1943
        %v2762 = vunpack.c.l.b16 %v1944
        %v2763 = vunpack.c.h.b16 %v1944
        %v2764 = vunpack.c.l.b16 %v1945
        %v2765 = vunpack.c.h.b16 %v1945
        %v2766 = vunpack.c.l.b16 %v1946
        %v2767 = vunpack.c.h.b16 %v1946
        %v2768 = vunpack.c.l.b16 %v1947
        %v2769 = vunpack.c.h.b16 %v1947
        %v2770 = vunpack.c.l.b16 %v1948
        %v2771 = vunpack.c.h.b16 %v1948
        %v2772 = vunpack.c.l.b16 %v1949
        %v2773 = vunpack.c.h.b16 %v1949
        %v2774 = vunpack.c.l.b16 %v1950
        %v2775 = vunpack.c.h.b16 %v1950
        %v2776 = vunpack.c.l.b16 %v1951
        %v2777 = vunpack.c.h.b16 %v1951
        %v2778 = vunpack.c.l.b16 %v1952
        %v2779 = vunpack.c.h.b16 %v1952
        %v2780 = vunpack.c.l.b16 %v1953
        %v2781 = vunpack.c.h.b16 %v1953
        %v2782 = vunpack.c.l.b16 %v1954
        %v2783 = vunpack.c.h.b16 %v1954
        %v2784 = vunpack.c.l.b16 %v1955
        %v2785 = vunpack.c.h.b16 %v1955
        %v2786 = vunpack.c.l.b16 %v1956
        %v2787 = vunpack.c.h.b16 %v1956
        %v2788 = vunpack.c.l.b16 %v1957
        %v2789 = vunpack.c.h.b16 %v1957
        %v2790 = vunpack.c.l.b16 %v1958
        %v2791 = vunpack.c.h.b16 %v1958
        %v2792 = vunpack.c.l.b16 %v1959
        %v2793 = vunpack.c.h.b16 %v1959
        %v2794 = vunpack.c.l.b16 %v1960
        %v2795 = vunpack.c.h.b16 %v1960
        %v2796 = vunpack.c.l.b16 %v1961
        %v2797 = vunpack.c.h.b16 %v1961
        %v2798 = vunpack.c.l.b16 %v1962
        %v2799 = vunpack.c.h.b16 %v1962
        %v2800 = vunpack.c.l.b16 %v1963
        %v2801 = vunpack.c.h.b16 %v1963
        %v2802 = vunpack.c.l.b16 %v1964
        %v2803 = vunpack.c.h.b16 %v1964
        %v2804 = vunpack.c.l.b16 %v1965
        %v2805 = vunpack.c.h.b16 %v1965
        %v2806 = vunpack.c.l.b16 %v1966
        %v2807 = vunpack.c.h.b16 %v1966
        %v2808 = vunpack.c.l.b16 %v1967
        %v2809 = vunpack.c.h.b16 %v1967
        %v2810 = vunpack.c.l.b16 %v1968
        %v2811 = vunpack.c.h.b16 %v1968
        %v2812 = vunpack.c.l.b16 %v1969
        %v2813 = vunpack.c.h.b16 %v1969
        %v2814 = vunpack.c.l.b16 %v1970
        %v2815 = vunpack.c.h.b16 %v1970
        %v2816 = vunpack.c.l.b16 %v1971
        %v2817 = vunpack.c.h.b16 %v1971
        %v2818 = vunpack.c.l.b16 %v1972
        %v2819 = vunpack.c.h.b16 %v1972
        %v2820 = vunpack.c.l.b16 %v1973
        %v2821 = vunpack.c.h.b16 %v1973
        %v2822 = vunpack.c.l.b16 %v1974
        %v2823 = vunpack.c.h.b16 %v1974
        %v2824 = vunpack.c.l.b16 %v1975
        %v2825 = vunpack.c.h.b16 %v1975
        %v2826 = vunpack.c.l.b16 %v1976
        %v2827 = vunpack.c.h.b16 %v1976
        %v2828 = vunpack.c.l.b16 %v1977
        %v2829 = vunpack.c.h.b16 %v1977
        %v2830 = vunpack.c.l.b16 %v1978
        %v2831 = vunpack.c.h.b16 %v1978
        %v2832 = vunpack.c.l.b16 %v1979
        %v2833 = vunpack.c.h.b16 %v1979
        %v2834 = vunpack.c.l.b16 %v1980
        %v2835 = vunpack.c.h.b16 %v1980
        %v2836 = vunpack.c.l.b16 %v1981
        %v2837 = vunpack.c.h.b16 %v1981
        %v2838 = vunpack.c.l.b16 %v1982
        %v2839 = vunpack.c.h.b16 %v1982
        %v2840 = vunpack.c.l.b16 %v1983
        %v2841 = vunpack.c.h.b16 %v1983
        %v2842 = vpack.c.b16 %v2334, %v2330
        %v2843 = vpack.c.b16 %v2335, %v2331
        %v2844 = vpack.c.b16 %v2336, %v2332
        %v2845 = vpack.c.b16 %v2337, %v2333
        %v2846 = vpack.c.b16 %v2342, %v2338
        %v2847 = vpack.c.b16 %v2343, %v2339
        %v2848 = vpack.c.b16 %v2344, %v2340
        %v2849 = vpack.c.b16 %v2345, %v2341
        %v2850 = vpack.c.b16 %v2350, %v2346
        %v2851 = vpack.c.b16 %v2351, %v2347
        %v2852 = vpack.c.b16 %v2352, %v2348
        %v2853 = vpack.c.b16 %v2353, %v2349
        %v2854 = vpack.c.b16 %v2358, %v2354
        %v2855 = vpack.c.b16 %v2359, %v2355
        %v2856 = vpack.c.b16 %v2360, %v2356
        %v2857 = vpack.c.b16 %v2361, %v2357
        %v2858 = vpack.c.b16 %v2366, %v2362
        %v2859 = vpack.c.b16 %v2367, %v2363
        %v2860 = vpack.c.b16 %v2368, %v2364
        %v2861 = vpack.c.b16 %v2369, %v2365
        %v2862 = vpack.c.b16 %v2374, %v2370
        %v2863 = vpack.c.b16 %v2375, %v2371
        %v2864 = vpack.c.b16 %v2376, %v2372
        %v2865 = vpack.c.b16 %v2377, %v2373
        %v2866 = vpack.c.b16 %v2382, %v2378
        %v2867 = vpack.c.b16 %v2383, %v2379
        %v2868 = vpack.c.b16 %v2384, %v2380
        %v2869 = vpack.c.b16 %v2385, %v2381
        %v2870 = vpack.c.b16 %v2390, %v2386
        %v2871 = vpack.c.b16 %v2391, %v2387
        %v2872 = vpack.c.b16 %v2392, %v2388
        %v2873 = vpack.c.b16 %v2393, %v2389
        %v2874 = vpack.c.b16 %v2398, %v2394
        %v2875 = vpack.c.b16 %v2399, %v2395
        %v2876 = vpack.c.b16 %v2400, %v2396
        %v2877 = vpack.c.b16 %v2401, %v2397
        %v2878 = vpack.c.b16 %v2406, %v2402
        %v2879 = vpack.c.b16 %v2407, %v2403
        %v2880 = vpack.c.b16 %v2408, %v2404
        %v2881 = vpack.c.b16 %v2409, %v2405
        %v2882 = vpack.c.b16 %v2414, %v2410
        %v2883 = vpack.c.b16 %v2415, %v2411
        %v2884 = vpack.c.b16 %v2416, %v2412
        %v2885 = vpack.c.b16 %v2417, %v2413
        %v2886 = vpack.c.b16 %v2422, %v2418
        %v2887 = vpack.c.b16 %v2423, %v2419
        %v2888 = vpack.c.b16 %v2424, %v2420
        %v2889 = vpack.c.b16 %v2425, %v2421
        %v2890 = vpack.c.b16 %v2430, %v2426
        %v2891 = vpack.c.b16 %v2431, %v2427
        %v2892 = vpack.c.b16 %v2432, %v2428
        %v2893 = vpack.c.b16 %v2433, %v2429
        %v2894 = vpack.c.b16 %v2438, %v2434
        %v2895 = vpack.c.b16 %v2439, %v2435
        %v2896 = vpack.c.b16 %v2440, %v2436
        %v2897 = vpack.c.b16 %v2441, %v2437
        %v2898 = vpack.c.b16 %v2446, %v2442
        %v2899 = vpack.c.b16 %v2447, %v2443
        %v2900 = vpack.c.b16 %v2448, %v2444
        %v2901 = vpack.c.b16 %v2449, %v2445
        %v2902 = vpack.c.b16 %v2454, %v2450
        %v2903 = vpack.c.b16 %v2455, %v2451
        %v2904 = vpack.c.b16 %v2456, %v2452
        %v2905 = vpack.c.b16 %v2457, %v2453
        %v2906 = vpack.c.b16 %v2462, %v2458
        %v2907 = vpack.c.b16 %v2463, %v2459
        %v2908 = vpack.c.b16 %v2464, %v2460
        %v2909 = vpack.c.b16 %v2465, %v2461
        %v2910 = vpack.c.b16 %v2470, %v2466
        %v2911 = vpack.c.b16 %v2471, %v2467
        %v2912 = vpack.c.b16 %v2472, %v2468
        %v2913 = vpack.c.b16 %v2473, %v2469
        %v2914 = vpack.c.b16 %v2478, %v2474
        %v2915 = vpack.c.b16 %v2479, %v2475
        %v2916 = vpack.c.b16 %v2480, %v2476
        %v2917 = vpack.c.b16 %v2481, %v2477
        %v2918 = vpack.c.b16 %v2486, %v2482
        %v2919 = vpack.c.b16 %v2487, %v2483
        %v2920 = vpack.c.b16 %v2488, %v2484
        %v2921 = vpack.c.b16 %v2489, %v2485
        %v2922 = vpack.c.b16 %v2494, %v2490
        %v2923 = vpack.c.b16 %v2495, %v2491
        %v2924 = vpack.c.b16 %v2496, %v2492
        %v2925 = vpack.c.b16 %v2497, %v2493
        %v2926 = vpack.c.b16 %v2502, %v2498
        %v2927 = vpack.c.b16 %v2503, %v2499
        %v2928 = vpack.c.b16 %v2504, %v2500
        %v2929 = vpack.c.b16 %v2505, %v2501
        %v2930 = vpack.c.b16 %v2510, %v2506
        %v2931 = vpack.c.b16 %v2511, %v2507
        %v2932 = vpack.c.b16 %v2512, %v2508
        %v2933 = vpack.c.b16 %v2513, %v2509
        %v2934 = vpack.c.b16 %v2518, %v2514
        %v2935 = vpack.c.b16 %v2519, %v2515
        %v2936 = vpack.c.b16 %v2520, %v2516
        %v2937 = vpack.c.b16 %v2521, %v2517
        %v2938 = vpack.c.b16 %v2526, %v2522
        %v2939 = vpack.c.b16 %v2527, %v2523
        %v2940 = vpack.c.b16 %v2528, %v2524
        %v2941 = vpack.c.b16 %v2529, %v2525
        %v2942 = vpack.c.b16 %v2534, %v2530
        %v2943 = vpack.c.b16 %v2535, %v2531
        %v2944 = vpack.c.b16 %v2536, %v2532
        %v2945 = vpack.c.b16 %v2537, %v2533
        %v2946 = vpack.c.b16 %v2542, %v2538
        %v2947 = vpack.c.b16 %v2543, %v2539
        %v2948 = vpack.c.b16 %v2544, %v2540
        %v2949 = vpack.c.b16 %v2545, %v2541
        %v2950 = vpack.c.b16 %v2550, %v2546
        %v2951 = vpack.c.b16 %v2551, %v2547
        %v2952 = vpack.c.b16 %v2552, %v2548
        %v2953 = vpack.c.b16 %v2553, %v2549
        %v2954 = vpack.c.b16 %v2558, %v2554
        %v2955 = vpack.c.b16 %v2559, %v2555
        %v2956 = vpack.c.b16 %v2560, %v2556
        %v2957 = vpack.c.b16 %v2561, %v2557
        %v2958 = vpack.c.b16 %v2566, %v2562
        %v2959 = vpack.c.b16 %v2567, %v2563
        %v2960 = vpack.c.b16 %v2568, %v2564
        %v2961 = vpack.c.b16 %v2569, %v2565
        %v2962 = vpack.c.b16 %v2574, %v2570
        %v2963 = vpack.c.b16 %v2575, %v2571
        %v2964 = vpack.c.b16 %v2576, %v2572
        %v2965 = vpack.c.b16 %v2577, %v2573
        %v2966 = vpack.c.b16 %v2582, %v2578
        %v2967 = vpack.c.b16 %v2583, %v2579
        %v2968 = vpack.c.b16 %v2584, %v2580
        %v2969 = vpack.c.b16 %v2585, %v2581
        %v2970 = vpack.c.b16 %v2590, %v2586
        %v2971 = vpack.c.b16 %v2591, %v2587
        %v2972 = vpack.c.b16 %v2592, %v2588
        %v2973 = vpack.c.b16 %v2593, %v2589
        %v2974 = vpack.c.b16 %v2598, %v2594
        %v2975 = vpack.c.b16 %v2599, %v2595
        %v2976 = vpack.c.b16 %v2600, %v2596
        %v2977 = vpack.c.b16 %v2601, %v2597
        %v2978 = vpack.c.b16 %v2606, %v2602
        %v2979 = vpack.c.b16 %v2607, %v2603
        %v2980 = vpack.c.b16 %v2608, %v2604
        %v2981 = vpack.c.b16 %v2609, %v2605
        %v2982 = vpack.c.b16 %v2614, %v2610
        %v2983 = vpack.c.b16 %v2615, %v2611
        %v2984 = vpack.c.b16 %v2616, %v2612
        %v2985 = vpack.c.b16 %v2617, %v2613
        %v2986 = vpack.c.b16 %v2622, %v2618
        %v2987 = vpack.c.b16 %v2623, %v2619
        %v2988 = vpack.c.b16 %v2624, %v2620
        %v2989 = vpack.c.b16 %v2625, %v2621
        %v2990 = vpack.c.b16 %v2630, %v2626
        %v2991 = vpack.c.b16 %v2631, %v2627
        %v2992 = vpack.c.b16 %v2632, %v2628
        %v2993 = vpack.c.b16 %v2633, %v2629
        %v2994 = vpack.c.b16 %v2638, %v2634
        %v2995 = vpack.c.b16 %v2639, %v2635
        %v2996 = vpack.c.b16 %v2640, %v2636
        %v2997 = vpack.c.b16 %v2641, %v2637
        %v2998 = vpack.c.b16 %v2646, %v2642
        %v2999 = vpack.c.b16 %v2647, %v2643
        %v3000 = vpack.c.b16 %v2648, %v2644
        %v3001 = vpack.c.b16 %v2649, %v2645
        %v3002 = vpack.c.b16 %v2654, %v2650
        %v3003 = vpack.c.b16 %v2655, %v2651
        %v3004 = vpack.c.b16 %v2656, %v2652
        %v3005 = vpack.c.b16 %v2657, %v2653
        %v3006 = vpack.c.b16 %v2662, %v2658
        %v3007 = vpack.c.b16 %v2663, %v2659
        %v3008 = vpack.c.b16 %v2664, %v2660
        %v3009 = vpack.c.b16 %v2665, %v2661
        %v3010 = vpack.c.b16 %v2670, %v2666
        %v3011 = vpack.c.b16 %v2671, %v2667
        %v3012 = vpack.c.b16 %v2672, %v2668
        %v3013 = vpack.c.b16 %v2673, %v2669
        %v3014 = vpack.c.b16 %v2678, %v2674
        %v3015 = vpack.c.b16 %v2679, %v2675
        %v3016 = vpack.c.b16 %v2680, %v2676
        %v3017 = vpack.c.b16 %v2681, %v2677
        %v3018 = vpack.c.b16 %v2686, %v2682
        %v3019 = vpack.c.b16 %v2687, %v2683
        %v3020 = vpack.c.b16 %v2688, %v2684
        %v3021 = vpack.c.b16 %v2689, %v2685
        %v3022 = vpack.c.b16 %v2694, %v2690
        %v3023 = vpack.c.b16 %v2695, %v2691
        %v3024 = vpack.c.b16 %v2696, %v2692
        %v3025 = vpack.c.b16 %v2697, %v2693
        %v3026 = vpack.c.b16 %v2702, %v2698
        %v3027 = vpack.c.b16 %v2703, %v2699
        %v3028 = vpack.c.b16 %v2704, %v2700
        %v3029 = vpack.c.b16 %v2705, %v2701
        %v3030 = vpack.c.b16 %v2710, %v2706
        %v3031 = vpack.c.b16 %v2711, %v2707
        %v3032 = vpack.c.b16 %v2712, %v2708
        %v3033 = vpack.c.b16 %v2713, %v2709
        %v3034 = vpack.c.b16 %v2718, %v2714
        %v3035 = vpack.c.b16 %v2719, %v2715
        %v3036 = vpack.c.b16 %v2720, %v2716
        %v3037 = vpack.c.b16 %v2721, %v2717
        %v3038 = vpack.c.b16 %v2726, %v2722
        %v3039 = vpack.c.b16 %v2727, %v2723
        %v3040 = vpack.c.b16 %v2728, %v2724
        %v3041 = vpack.c.b16 %v2729, %v2725
        %v3042 = vpack.c.b16 %v2734, %v2730
        %v3043 = vpack.c.b16 %v2735, %v2731
        %v3044 = vpack.c.b16 %v2736, %v2732
        %v3045 = vpack.c.b16 %v2737, %v2733
        %v3046 = vpack.c.b16 %v2742, %v2738
        %v3047 = vpack.c.b16 %v2743, %v2739
        %v3048 = vpack.c.b16 %v2744, %v2740
        %v3049 = vpack.c.b16 %v2745, %v2741
        %v3050 = vpack.c.b16 %v2750, %v2746
        %v3051 = vpack.c.b16 %v2751, %v2747
        %v3052 = vpack.c.b16 %v2752, %v2748
        %v3053 = vpack.c.b16 %v2753, %v2749
        %v3054 = vpack.c.b16 %v2758, %v2754
        %v3055 = vpack.c.b16 %v2759, %v2755
        %v3056 = vpack.c.b16 %v2760, %v2756
        %v3057 = vpack.c.b16 %v2761, %v2757
        %v3058 = vpack.c.b16 %v2766, %v2762
        %v3059 = vpack.c.b16 %v2767, %v2763
        %v3060 = vpack.c.b16 %v2768, %v2764
        %v3061 = vpack.c.b16 %v2769, %v2765
        %v3062 = vpack.c.b16 %v2774, %v2770
        %v3063 = vpack.c.b16 %v2775, %v2771
        %v3064 = vpack.c.b16 %v2776, %v2772
        %v3065 = vpack.c.b16 %v2777, %v2773
        %v3066 = vpack.c.b16 %v2782, %v2778
        %v3067 = vpack.c.b16 %v2783, %v2779
        %v3068 = vpack.c.b16 %v2784, %v2780
        %v3069 = vpack.c.b16 %v2785, %v2781
        %v3070 = vpack.c.b16 %v2790, %v2786
        %v3071 = vpack.c.b16 %v2791, %v2787
        %v3072 = vpack.c.b16 %v2792, %v2788
        %v3073 = vpack.c.b16 %v2793, %v2789
        %v3074 = vpack.c.b16 %v2798, %v2794
        %v3075 = vpack.c.b16 %v2799, %v2795
        %v3076 = vpack.c.b16 %v2800, %v2796
        %v3077 = vpack.c.b16 %v2801, %v2797
        %v3078 = vpack.c.b16 %v2806, %v2802
        %v3079 = vpack.c.b16 %v2807, %v2803
        %v3080 = vpack.c.b16 %v2808, %v2804
        %v3081 = vpack.c.b16 %v2809, %v2805
        %v3082 = vpack.c.b16 %v2814, %v2810
        %v3083 = vpack.c.b16 %v2815, %v2811
        %v3084 = vpack.c.b16 %v2816, %v2812
        %v3085 = vpack.c.b16 %v2817, %v2813
        %v3086 = vpack.c.b16 %v2822, %v2818
        %v3087 = vpack.c.b16 %v2823, %v2819
        %v3088 = vpack.c.b16 %v2824, %v2820
        %v3089 = vpack.c.b16 %v2825, %v2821
        %v3090 = vpack.c.b16 %v2830, %v2826
        %v3091 = vpack.c.b16 %v2831, %v2827
        %v3092 = vpack.c.b16 %v2832, %v2828
        %v3093 = vpack.c.b16 %v2833, %v2829
        %v3094 = vpack.c.b16 %v2838, %v2834
        %v3095 = vpack.c.b16 %v2839, %v2835
        %v3096 = vpack.c.b16 %v2840, %v2836
        %v3097 = vpack.c.b16 %v2841, %v2837
        %3354 = vmatpush.bf16.msra.mxu0 %v2870
        %3355 = vmatpush.bf16.msra.mxu0 %v2866
        %3356 = vmatpush.bf16.msra.mxu0 %v2862
        %3357 = vmatpush.bf16.msra.mxu0 %v2858
        %3358 = vmatpush.bf16.msra.mxu0 %v2854
        %3359 = vmatpush.bf16.msra.mxu0 %v2850
        %3360 = vmatpush.bf16.msra.mxu0 %v2846
        %3361 = vmatpush.bf16.msra.mxu0 %v2842
        %3362 = vmatmul.bf16.gmra.mxu0 %v2042
        %v3363 = vpop.f32.mrf.mxu0
        %v3364 = vadd.f32 %v1986, %v3363
        %v3365 = vpop.f32.mrf.mxu0
        %v3366 = vadd.f32 %v1986, %v3365
        %3367 = vmatmul.bf16.gmra.mxu0 %v2050
        %v3368 = vpop.f32.mrf.mxu0
        %v3369 = vadd.f32 %v1986, %v3368
        %v3370 = vpop.f32.mrf.mxu0
        %v3371 = vadd.f32 %v1986, %v3370
        %3372 = vdwg.mxu0
        %3373 = vmatpush.bf16.msra.mxu0 %v2902
        %3374 = vmatpush.bf16.msra.mxu0 %v2898
        %3375 = vmatpush.bf16.msra.mxu0 %v2894
        %3376 = vmatpush.bf16.msra.mxu0 %v2890
        %3377 = vmatpush.bf16.msra.mxu0 %v2886
        %3378 = vmatpush.bf16.msra.mxu0 %v2882
        %3379 = vmatpush.bf16.msra.mxu0 %v2878
        %3380 = vmatpush.bf16.msra.mxu0 %v2874
        %3381 = vmatmul.bf16.gmra.mxu0 %v2043
        %v3382 = vpop.f32.mrf.mxu0
        %v3383 = vadd.f32 %v3364, %v3382
        %v3384 = vpop.f32.mrf.mxu0
        %v3385 = vadd.f32 %v3366, %v3384
        %3386 = vmatmul.bf16.gmra.mxu0 %v2051
        %v3387 = vpop.f32.mrf.mxu0
        %v3388 = vadd.f32 %v3369, %v3387
        %v3389 = vpop.f32.mrf.mxu0
        %v3390 = vadd.f32 %v3371, %v3389
        %3391 = vdwg.mxu0
        %3392 = vmatpush.bf16.msra.mxu0 %v2934
        %3393 = vmatpush.bf16.msra.mxu0 %v2930
        %3394 = vmatpush.bf16.msra.mxu0 %v2926
        %3395 = vmatpush.bf16.msra.mxu0 %v2922
        %3396 = vmatpush.bf16.msra.mxu0 %v2918
        %3397 = vmatpush.bf16.msra.mxu0 %v2914
        %3398 = vmatpush.bf16.msra.mxu0 %v2910
        %3399 = vmatpush.bf16.msra.mxu0 %v2906
        %3400 = vmatmul.bf16.gmra.mxu0 %v2044
        %v3401 = vpop.f32.mrf.mxu0
        %v3402 = vadd.f32 %v3383, %v3401
        %v3403 = vpop.f32.mrf.mxu0
        %v3404 = vadd.f32 %v3385, %v3403
        %3405 = vmatmul.bf16.gmra.mxu0 %v2052
        %v3406 = vpop.f32.mrf.mxu0
        %v3407 = vadd.f32 %v3388, %v3406
        %v3408 = vpop.f32.mrf.mxu0
        %v3409 = vadd.f32 %v3390, %v3408
        %3410 = vdwg.mxu0
        %3411 = vmatpush.bf16.msra.mxu0 %v2966
        %3412 = vmatpush.bf16.msra.mxu0 %v2962
        %3413 = vmatpush.bf16.msra.mxu0 %v2958
        %3414 = vmatpush.bf16.msra.mxu0 %v2954
        %3415 = vmatpush.bf16.msra.mxu0 %v2950
        %3416 = vmatpush.bf16.msra.mxu0 %v2946
        %3417 = vmatpush.bf16.msra.mxu0 %v2942
        %3418 = vmatpush.bf16.msra.mxu0 %v2938
        %3419 = vmatmul.bf16.gmra.mxu0 %v2045
        %v3420 = vpop.f32.mrf.mxu0
        %v3421 = vadd.f32 %v3402, %v3420
        %v3422 = vpop.f32.mrf.mxu0
        %v3423 = vadd.f32 %v3404, %v3422
        %3424 = vmatmul.bf16.gmra.mxu0 %v2053
        %v3425 = vpop.f32.mrf.mxu0
        %v3426 = vadd.f32 %v3407, %v3425
        %v3427 = vpop.f32.mrf.mxu0
        %v3428 = vadd.f32 %v3409, %v3427
        %3429 = vdwg.mxu0
        %3430 = vmatpush.bf16.msra.mxu0 %v2998
        %3431 = vmatpush.bf16.msra.mxu0 %v2994
        %3432 = vmatpush.bf16.msra.mxu0 %v2990
        %3433 = vmatpush.bf16.msra.mxu0 %v2986
        %3434 = vmatpush.bf16.msra.mxu0 %v2982
        %3435 = vmatpush.bf16.msra.mxu0 %v2978
        %3436 = vmatpush.bf16.msra.mxu0 %v2974
        %3437 = vmatpush.bf16.msra.mxu0 %v2970
        %3438 = vmatmul.bf16.gmra.mxu0 %v2046
        %v3439 = vpop.f32.mrf.mxu0
        %v3440 = vadd.f32 %v3421, %v3439
        %v3441 = vpop.f32.mrf.mxu0
        %v3442 = vadd.f32 %v3423, %v3441
        %3443 = vmatmul.bf16.gmra.mxu0 %v2054
        %v3444 = vpop.f32.mrf.mxu0
        %v3445 = vadd.f32 %v3426, %v3444
        %v3446 = vpop.f32.mrf.mxu0
        %v3447 = vadd.f32 %v3428, %v3446
        %3448 = vdwg.mxu0
        %3449 = vmatpush.bf16.msra.mxu0 %v3030
        %3450 = vmatpush.bf16.msra.mxu0 %v3026
        %3451 = vmatpush.bf16.msra.mxu0 %v3022
        %3452 = vmatpush.bf16.msra.mxu0 %v3018
        %3453 = vmatpush.bf16.msra.mxu0 %v3014
        %3454 = vmatpush.bf16.msra.mxu0 %v3010
        %3455 = vmatpush.bf16.msra.mxu0 %v3006
        %3456 = vmatpush.bf16.msra.mxu0 %v3002
        %3457 = vmatmul.bf16.gmra.mxu0 %v2047
        %v3458 = vpop.f32.mrf.mxu0
        %v3459 = vadd.f32 %v3440, %v3458
        %v3460 = vpop.f32.mrf.mxu0
        %v3461 = vadd.f32 %v3442, %v3460
        %3462 = vmatmul.bf16.gmra.mxu0 %v2055
        %v3463 = vpop.f32.mrf.mxu0
        %v3464 = vadd.f32 %v3445, %v3463
        %v3465 = vpop.f32.mrf.mxu0
        %v3466 = vadd.f32 %v3447, %v3465
        %3467 = vdwg.mxu0
        %3468 = vmatpush.bf16.msra.mxu0 %v3062
        %3469 = vmatpush.bf16.msra.mxu0 %v3058
        %3470 = vmatpush.bf16.msra.mxu0 %v3054
        %3471 = vmatpush.bf16.msra.mxu0 %v3050
        %3472 = vmatpush.bf16.msra.mxu0 %v3046
        %3473 = vmatpush.bf16.msra.mxu0 %v3042
        %3474 = vmatpush.bf16.msra.mxu0 %v3038
        %3475 = vmatpush.bf16.msra.mxu0 %v3034
        %3476 = vmatmul.bf16.gmra.mxu0 %v2048
        %v3477 = vpop.f32.mrf.mxu0
        %v3478 = vadd.f32 %v3459, %v3477
        %v3479 = vpop.f32.mrf.mxu0
        %v3480 = vadd.f32 %v3461, %v3479
        %3481 = vmatmul.bf16.gmra.mxu0 %v2056
        %v3482 = vpop.f32.mrf.mxu0
        %v3483 = vadd.f32 %v3464, %v3482
        %v3484 = vpop.f32.mrf.mxu0
        %v3485 = vadd.f32 %v3466, %v3484
        %3486 = vdwg.mxu0
        %3487 = vmatpush.bf16.msra.mxu0 %v3094
        %3488 = vmatpush.bf16.msra.mxu0 %v3090
        %3489 = vmatpush.bf16.msra.mxu0 %v3086
        %3490 = vmatpush.bf16.msra.mxu0 %v3082
        %3491 = vmatpush.bf16.msra.mxu0 %v3078
        %3492 = vmatpush.bf16.msra.mxu0 %v3074
        %3493 = vmatpush.bf16.msra.mxu0 %v3070
        %3494 = vmatpush.bf16.msra.mxu0 %v3066
        %3495 = vmatmul.bf16.gmra.mxu0 %v2049
        %v3496 = vpop.f32.mrf.mxu0
        %v3497 = vadd.f32 %v3478, %v3496
        %v3498 = vpop.f32.mrf.mxu0
        %v3499 = vadd.f32 %v3480, %v3498
        %3500 = vmatmul.bf16.gmra.mxu0 %v2057
        %v3501 = vpop.f32.mrf.mxu0
        %v3502 = vadd.f32 %v3483, %v3501
        %v3503 = vpop.f32.mrf.mxu0
        %v3504 = vadd.f32 %v3485, %v3503
        %3505 = vdwg.mxu0
        %3506 = vmatpush.bf16.msra.mxu0 %v2871
        %3507 = vmatpush.bf16.msra.mxu0 %v2867
        %3508 = vmatpush.bf16.msra.mxu0 %v2863
        %3509 = vmatpush.bf16.msra.mxu0 %v2859
        %3510 = vmatpush.bf16.msra.mxu0 %v2855
        %3511 = vmatpush.bf16.msra.mxu0 %v2851
        %3512 = vmatpush.bf16.msra.mxu0 %v2847
        %3513 = vmatpush.bf16.msra.mxu0 %v2843
        %3514 = vmatmul.bf16.gmra.mxu0 %v2042
        %v3515 = vpop.f32.mrf.mxu0
        %v3516 = vadd.f32 %v1987, %v3515
        %v3517 = vpop.f32.mrf.mxu0
        %v3518 = vadd.f32 %v1987, %v3517
        %3519 = vmatmul.bf16.gmra.mxu0 %v2050
        %v3520 = vpop.f32.mrf.mxu0
        %v3521 = vadd.f32 %v1987, %v3520
        %v3522 = vpop.f32.mrf.mxu0
        %v3523 = vadd.f32 %v1987, %v3522
        %3524 = vdwg.mxu0
        %3525 = vmatpush.bf16.msra.mxu0 %v2903
        %3526 = vmatpush.bf16.msra.mxu0 %v2899
        %3527 = vmatpush.bf16.msra.mxu0 %v2895
        %3528 = vmatpush.bf16.msra.mxu0 %v2891
        %3529 = vmatpush.bf16.msra.mxu0 %v2887
        %3530 = vmatpush.bf16.msra.mxu0 %v2883
        %3531 = vmatpush.bf16.msra.mxu0 %v2879
        %3532 = vmatpush.bf16.msra.mxu0 %v2875
        %3533 = vmatmul.bf16.gmra.mxu0 %v2043
        %v3534 = vpop.f32.mrf.mxu0
        %v3535 = vadd.f32 %v3516, %v3534
        %v3536 = vpop.f32.mrf.mxu0
        %v3537 = vadd.f32 %v3518, %v3536
        %3538 = vmatmul.bf16.gmra.mxu0 %v2051
        %v3539 = vpop.f32.mrf.mxu0
        %v3540 = vadd.f32 %v3521, %v3539
        %v3541 = vpop.f32.mrf.mxu0
        %v3542 = vadd.f32 %v3523, %v3541
        %3543 = vdwg.mxu0
        %3544 = vmatpush.bf16.msra.mxu0 %v2935
        %3545 = vmatpush.bf16.msra.mxu0 %v2931
        %3546 = vmatpush.bf16.msra.mxu0 %v2927
        %3547 = vmatpush.bf16.msra.mxu0 %v2923
        %3548 = vmatpush.bf16.msra.mxu0 %v2919
        %3549 = vmatpush.bf16.msra.mxu0 %v2915
        %3550 = vmatpush.bf16.msra.mxu0 %v2911
        %3551 = vmatpush.bf16.msra.mxu0 %v2907
        %3552 = vmatmul.bf16.gmra.mxu0 %v2044
        %v3553 = vpop.f32.mrf.mxu0
        %v3554 = vadd.f32 %v3535, %v3553
        %v3555 = vpop.f32.mrf.mxu0
        %v3556 = vadd.f32 %v3537, %v3555
        %3557 = vmatmul.bf16.gmra.mxu0 %v2052
        %v3558 = vpop.f32.mrf.mxu0
        %v3559 = vadd.f32 %v3540, %v3558
        %v3560 = vpop.f32.mrf.mxu0
        %v3561 = vadd.f32 %v3542, %v3560
        %3562 = vdwg.mxu0
        %3563 = vmatpush.bf16.msra.mxu0 %v2967
        %3564 = vmatpush.bf16.msra.mxu0 %v2963
        %3565 = vmatpush.bf16.msra.mxu0 %v2959
        %3566 = vmatpush.bf16.msra.mxu0 %v2955
        %3567 = vmatpush.bf16.msra.mxu0 %v2951
        %3568 = vmatpush.bf16.msra.mxu0 %v2947
        %3569 = vmatpush.bf16.msra.mxu0 %v2943
        %3570 = vmatpush.bf16.msra.mxu0 %v2939
        %3571 = vmatmul.bf16.gmra.mxu0 %v2045
        %v3572 = vpop.f32.mrf.mxu0
        %v3573 = vadd.f32 %v3554, %v3572
        %v3574 = vpop.f32.mrf.mxu0
        %v3575 = vadd.f32 %v3556, %v3574
        %3576 = vmatmul.bf16.gmra.mxu0 %v2053
        %v3577 = vpop.f32.mrf.mxu0
        %v3578 = vadd.f32 %v3559, %v3577
        %v3579 = vpop.f32.mrf.mxu0
        %v3580 = vadd.f32 %v3561, %v3579
        %3581 = vdwg.mxu0
        %3582 = vmatpush.bf16.msra.mxu0 %v2999
        %3583 = vmatpush.bf16.msra.mxu0 %v2995
        %3584 = vmatpush.bf16.msra.mxu0 %v2991
        %3585 = vmatpush.bf16.msra.mxu0 %v2987
        %3586 = vmatpush.bf16.msra.mxu0 %v2983
        %3587 = vmatpush.bf16.msra.mxu0 %v2979
        %3588 = vmatpush.bf16.msra.mxu0 %v2975
        %3589 = vmatpush.bf16.msra.mxu0 %v2971
        %3590 = vmatmul.bf16.gmra.mxu0 %v2046
        %v3591 = vpop.f32.mrf.mxu0
        %v3592 = vadd.f32 %v3573, %v3591
        %v3593 = vpop.f32.mrf.mxu0
        %v3594 = vadd.f32 %v3575, %v3593
        %3595 = vmatmul.bf16.gmra.mxu0 %v2054
        %v3596 = vpop.f32.mrf.mxu0
        %v3597 = vadd.f32 %v3578, %v3596
        %v3598 = vpop.f32.mrf.mxu0
        %v3599 = vadd.f32 %v3580, %v3598
        %3600 = vdwg.mxu0
        %3601 = vmatpush.bf16.msra.mxu0 %v3031
        %3602 = vmatpush.bf16.msra.mxu0 %v3027
        %3603 = vmatpush.bf16.msra.mxu0 %v3023
        %3604 = vmatpush.bf16.msra.mxu0 %v3019
        %3605 = vmatpush.bf16.msra.mxu0 %v3015
        %3606 = vmatpush.bf16.msra.mxu0 %v3011
        %3607 = vmatpush.bf16.msra.mxu0 %v3007
        %3608 = vmatpush.bf16.msra.mxu0 %v3003
        %3609 = vmatmul.bf16.gmra.mxu0 %v2047
        %v3610 = vpop.f32.mrf.mxu0
        %v3611 = vadd.f32 %v3592, %v3610
        %v3612 = vpop.f32.mrf.mxu0
        %v3613 = vadd.f32 %v3594, %v3612
        %3614 = vmatmul.bf16.gmra.mxu0 %v2055
        %v3615 = vpop.f32.mrf.mxu0
        %v3616 = vadd.f32 %v3597, %v3615
        %v3617 = vpop.f32.mrf.mxu0
        %v3618 = vadd.f32 %v3599, %v3617
        %3619 = vdwg.mxu0
        %3620 = vmatpush.bf16.msra.mxu0 %v3063
        %3621 = vmatpush.bf16.msra.mxu0 %v3059
        %3622 = vmatpush.bf16.msra.mxu0 %v3055
        %3623 = vmatpush.bf16.msra.mxu0 %v3051
        %3624 = vmatpush.bf16.msra.mxu0 %v3047
        %3625 = vmatpush.bf16.msra.mxu0 %v3043
        %3626 = vmatpush.bf16.msra.mxu0 %v3039
        %3627 = vmatpush.bf16.msra.mxu0 %v3035
        %3628 = vmatmul.bf16.gmra.mxu0 %v2048
        %v3629 = vpop.f32.mrf.mxu0
        %v3630 = vadd.f32 %v3611, %v3629
        %v3631 = vpop.f32.mrf.mxu0
        %v3632 = vadd.f32 %v3613, %v3631
        %3633 = vmatmul.bf16.gmra.mxu0 %v2056
        %v3634 = vpop.f32.mrf.mxu0
        %v3635 = vadd.f32 %v3616, %v3634
        %v3636 = vpop.f32.mrf.mxu0
        %v3637 = vadd.f32 %v3618, %v3636
        %3638 = vdwg.mxu0
        %3639 = vmatpush.bf16.msra.mxu0 %v3095
        %3640 = vmatpush.bf16.msra.mxu0 %v3091
        %3641 = vmatpush.bf16.msra.mxu0 %v3087
        %3642 = vmatpush.bf16.msra.mxu0 %v3083
        %3643 = vmatpush.bf16.msra.mxu0 %v3079
        %3644 = vmatpush.bf16.msra.mxu0 %v3075
        %3645 = vmatpush.bf16.msra.mxu0 %v3071
        %3646 = vmatpush.bf16.msra.mxu0 %v3067
        %3647 = vmatmul.bf16.gmra.mxu0 %v2049
        %v3648 = vpop.f32.mrf.mxu0
        %v3649 = vadd.f32 %v3630, %v3648
        %v3650 = vpop.f32.mrf.mxu0
        %v3651 = vadd.f32 %v3632, %v3650
        %3652 = vmatmul.bf16.gmra.mxu0 %v2057
        %v3653 = vpop.f32.mrf.mxu0
        %v3654 = vadd.f32 %v3635, %v3653
        %v3655 = vpop.f32.mrf.mxu0
        %v3656 = vadd.f32 %v3637, %v3655
        %3657 = vdwg.mxu0
        %3658 = vmatpush.bf16.msra.mxu0 %v2872
        %3659 = vmatpush.bf16.msra.mxu0 %v2868
        %3660 = vmatpush.bf16.msra.mxu0 %v2864
        %3661 = vmatpush.bf16.msra.mxu0 %v2860
        %3662 = vmatpush.bf16.msra.mxu0 %v2856
        %3663 = vmatpush.bf16.msra.mxu0 %v2852
        %3664 = vmatpush.bf16.msra.mxu0 %v2848
        %3665 = vmatpush.bf16.msra.mxu0 %v2844
        %3666 = vmatmul.bf16.gmra.mxu0 %v2042
        %v3667 = vpop.f32.mrf.mxu0
        %v3668 = vadd.f32 %v1988, %v3667
        %v3669 = vpop.f32.mrf.mxu0
        %v3670 = vadd.f32 %v1988, %v3669
        %3671 = vmatmul.bf16.gmra.mxu0 %v2050
        %v3672 = vpop.f32.mrf.mxu0
        %v3673 = vadd.f32 %v1988, %v3672
        %v3674 = vpop.f32.mrf.mxu0
        %v3675 = vadd.f32 %v1988, %v3674
        %3676 = vdwg.mxu0
        %3677 = vmatpush.bf16.msra.mxu0 %v2904
        %3678 = vmatpush.bf16.msra.mxu0 %v2900
        %3679 = vmatpush.bf16.msra.mxu0 %v2896
        %3680 = vmatpush.bf16.msra.mxu0 %v2892
        %3681 = vmatpush.bf16.msra.mxu0 %v2888
        %3682 = vmatpush.bf16.msra.mxu0 %v2884
        %3683 = vmatpush.bf16.msra.mxu0 %v2880
        %3684 = vmatpush.bf16.msra.mxu0 %v2876
        %3685 = vmatmul.bf16.gmra.mxu0 %v2043
        %v3686 = vpop.f32.mrf.mxu0
        %v3687 = vadd.f32 %v3668, %v3686
        %v3688 = vpop.f32.mrf.mxu0
        %v3689 = vadd.f32 %v3670, %v3688
        %3690 = vmatmul.bf16.gmra.mxu0 %v2051
        %v3691 = vpop.f32.mrf.mxu0
        %v3692 = vadd.f32 %v3673, %v3691
        %v3693 = vpop.f32.mrf.mxu0
        %v3694 = vadd.f32 %v3675, %v3693
        %3695 = vdwg.mxu0
        %3696 = vmatpush.bf16.msra.mxu0 %v2936
        %3697 = vmatpush.bf16.msra.mxu0 %v2932
        %3698 = vmatpush.bf16.msra.mxu0 %v2928
        %3699 = vmatpush.bf16.msra.mxu0 %v2924
        %3700 = vmatpush.bf16.msra.mxu0 %v2920
        %3701 = vmatpush.bf16.msra.mxu0 %v2916
        %3702 = vmatpush.bf16.msra.mxu0 %v2912
        %3703 = vmatpush.bf16.msra.mxu0 %v2908
        %3704 = vmatmul.bf16.gmra.mxu0 %v2044
        %v3705 = vpop.f32.mrf.mxu0
        %v3706 = vadd.f32 %v3687, %v3705
        %v3707 = vpop.f32.mrf.mxu0
        %v3708 = vadd.f32 %v3689, %v3707
        %3709 = vmatmul.bf16.gmra.mxu0 %v2052
        %v3710 = vpop.f32.mrf.mxu0
        %v3711 = vadd.f32 %v3692, %v3710
        %v3712 = vpop.f32.mrf.mxu0
        %v3713 = vadd.f32 %v3694, %v3712
        %3714 = vdwg.mxu0
        %3715 = vmatpush.bf16.msra.mxu0 %v2968
        %3716 = vmatpush.bf16.msra.mxu0 %v2964
        %3717 = vmatpush.bf16.msra.mxu0 %v2960
        %3718 = vmatpush.bf16.msra.mxu0 %v2956
        %3719 = vmatpush.bf16.msra.mxu0 %v2952
        %3720 = vmatpush.bf16.msra.mxu0 %v2948
        %3721 = vmatpush.bf16.msra.mxu0 %v2944
        %3722 = vmatpush.bf16.msra.mxu0 %v2940
        %3723 = vmatmul.bf16.gmra.mxu0 %v2045
        %v3724 = vpop.f32.mrf.mxu0
        %v3725 = vadd.f32 %v3706, %v3724
        %v3726 = vpop.f32.mrf.mxu0
        %v3727 = vadd.f32 %v3708, %v3726
        %3728 = vmatmul.bf16.gmra.mxu0 %v2053
        %v3729 = vpop.f32.mrf.mxu0
        %v3730 = vadd.f32 %v3711, %v3729
        %v3731 = vpop.f32.mrf.mxu0
        %v3732 = vadd.f32 %v3713, %v3731
        %3733 = vdwg.mxu0
        %3734 = vmatpush.bf16.msra.mxu0 %v3000
        %3735 = vmatpush.bf16.msra.mxu0 %v2996
        %3736 = vmatpush.bf16.msra.mxu0 %v2992
        %3737 = vmatpush.bf16.msra.mxu0 %v2988
        %3738 = vmatpush.bf16.msra.mxu0 %v2984
        %3739 = vmatpush.bf16.msra.mxu0 %v2980
        %3740 = vmatpush.bf16.msra.mxu0 %v2976
        %3741 = vmatpush.bf16.msra.mxu0 %v2972
        %3742 = vmatmul.bf16.gmra.mxu0 %v2046
        %v3743 = vpop.f32.mrf.mxu0
        %v3744 = vadd.f32 %v3725, %v3743
        %v3745 = vpop.f32.mrf.mxu0
        %v3746 = vadd.f32 %v3727, %v3745
        %3747 = vmatmul.bf16.gmra.mxu0 %v2054
        %v3748 = vpop.f32.mrf.mxu0
        %v3749 = vadd.f32 %v3730, %v3748
        %v3750 = vpop.f32.mrf.mxu0
        %v3751 = vadd.f32 %v3732, %v3750
        %3752 = vdwg.mxu0
        %3753 = vmatpush.bf16.msra.mxu0 %v3032
        %3754 = vmatpush.bf16.msra.mxu0 %v3028
        %3755 = vmatpush.bf16.msra.mxu0 %v3024
        %3756 = vmatpush.bf16.msra.mxu0 %v3020
        %3757 = vmatpush.bf16.msra.mxu0 %v3016
        %3758 = vmatpush.bf16.msra.mxu0 %v3012
        %3759 = vmatpush.bf16.msra.mxu0 %v3008
        %3760 = vmatpush.bf16.msra.mxu0 %v3004
        %3761 = vmatmul.bf16.gmra.mxu0 %v2047
        %v3762 = vpop.f32.mrf.mxu0
        %v3763 = vadd.f32 %v3744, %v3762
        %v3764 = vpop.f32.mrf.mxu0
        %v3765 = vadd.f32 %v3746, %v3764
        %3766 = vmatmul.bf16.gmra.mxu0 %v2055
        %v3767 = vpop.f32.mrf.mxu0
        %v3768 = vadd.f32 %v3749, %v3767
        %v3769 = vpop.f32.mrf.mxu0
        %v3770 = vadd.f32 %v3751, %v3769
        %3771 = vdwg.mxu0
        %3772 = vmatpush.bf16.msra.mxu0 %v3064
        %3773 = vmatpush.bf16.msra.mxu0 %v3060
        %3774 = vmatpush.bf16.msra.mxu0 %v3056
        %3775 = vmatpush.bf16.msra.mxu0 %v3052
        %3776 = vmatpush.bf16.msra.mxu0 %v3048
        %3777 = vmatpush.bf16.msra.mxu0 %v3044
        %3778 = vmatpush.bf16.msra.mxu0 %v3040
        %3779 = vmatpush.bf16.msra.mxu0 %v3036
        %3780 = vmatmul.bf16.gmra.mxu0 %v2048
        %v3781 = vpop.f32.mrf.mxu0
        %v3782 = vadd.f32 %v3763, %v3781
        %v3783 = vpop.f32.mrf.mxu0
        %v3784 = vadd.f32 %v3765, %v3783
        %3785 = vmatmul.bf16.gmra.mxu0 %v2056
        %v3786 = vpop.f32.mrf.mxu0
        %v3787 = vadd.f32 %v3768, %v3786
        %v3788 = vpop.f32.mrf.mxu0
        %v3789 = vadd.f32 %v3770, %v3788
        %3790 = vdwg.mxu0
        %3791 = vmatpush.bf16.msra.mxu0 %v3096
        %3792 = vmatpush.bf16.msra.mxu0 %v3092
        %3793 = vmatpush.bf16.msra.mxu0 %v3088
        %3794 = vmatpush.bf16.msra.mxu0 %v3084
        %3795 = vmatpush.bf16.msra.mxu0 %v3080
        %3796 = vmatpush.bf16.msra.mxu0 %v3076
        %3797 = vmatpush.bf16.msra.mxu0 %v3072
        %3798 = vmatpush.bf16.msra.mxu0 %v3068
        %3799 = vmatmul.bf16.gmra.mxu0 %v2049
        %v3800 = vpop.f32.mrf.mxu0
        %v3801 = vadd.f32 %v3782, %v3800
        %v3802 = vpop.f32.mrf.mxu0
        %v3803 = vadd.f32 %v3784, %v3802
        %3804 = vmatmul.bf16.gmra.mxu0 %v2057
        %v3805 = vpop.f32.mrf.mxu0
        %v3806 = vadd.f32 %v3787, %v3805
        %v3807 = vpop.f32.mrf.mxu0
        %v3808 = vadd.f32 %v3789, %v3807
        %3809 = vdwg.mxu0
        %3810 = vmatpush.bf16.msra.mxu0 %v2873
        %3811 = vmatpush.bf16.msra.mxu0 %v2869
        %3812 = vmatpush.bf16.msra.mxu0 %v2865
        %3813 = vmatpush.bf16.msra.mxu0 %v2861
        %3814 = vmatpush.bf16.msra.mxu0 %v2857
        %3815 = vmatpush.bf16.msra.mxu0 %v2853
        %3816 = vmatpush.bf16.msra.mxu0 %v2849
        %3817 = vmatpush.bf16.msra.mxu0 %v2845
        %3818 = vmatmul.bf16.gmra.mxu0 %v2042
        %v3819 = vpop.f32.mrf.mxu0
        %v3820 = vadd.f32 %v1989, %v3819
        %v3821 = vpop.f32.mrf.mxu0
        %v3822 = vadd.f32 %v1989, %v3821
        %3823 = vmatmul.bf16.gmra.mxu0 %v2050
        %v3824 = vpop.f32.mrf.mxu0
        %v3825 = vadd.f32 %v1989, %v3824
        %v3826 = vpop.f32.mrf.mxu0
        %v3827 = vadd.f32 %v1989, %v3826
        %3828 = vdwg.mxu0
        %3829 = vmatpush.bf16.msra.mxu0 %v2905
        %3830 = vmatpush.bf16.msra.mxu0 %v2901
        %3831 = vmatpush.bf16.msra.mxu0 %v2897
        %3832 = vmatpush.bf16.msra.mxu0 %v2893
        %3833 = vmatpush.bf16.msra.mxu0 %v2889
        %3834 = vmatpush.bf16.msra.mxu0 %v2885
        %3835 = vmatpush.bf16.msra.mxu0 %v2881
        %3836 = vmatpush.bf16.msra.mxu0 %v2877
        %3837 = vmatmul.bf16.gmra.mxu0 %v2043
        %v3838 = vpop.f32.mrf.mxu0
        %v3839 = vadd.f32 %v3820, %v3838
        %v3840 = vpop.f32.mrf.mxu0
        %v3841 = vadd.f32 %v3822, %v3840
        %3842 = vmatmul.bf16.gmra.mxu0 %v2051
        %v3843 = vpop.f32.mrf.mxu0
        %v3844 = vadd.f32 %v3825, %v3843
        %v3845 = vpop.f32.mrf.mxu0
        %v3846 = vadd.f32 %v3827, %v3845
        %3847 = vdwg.mxu0
        %3848 = vmatpush.bf16.msra.mxu0 %v2937
        %3849 = vmatpush.bf16.msra.mxu0 %v2933
        %3850 = vmatpush.bf16.msra.mxu0 %v2929
        %3851 = vmatpush.bf16.msra.mxu0 %v2925
        %3852 = vmatpush.bf16.msra.mxu0 %v2921
        %3853 = vmatpush.bf16.msra.mxu0 %v2917
        %3854 = vmatpush.bf16.msra.mxu0 %v2913
        %3855 = vmatpush.bf16.msra.mxu0 %v2909
        %3856 = vmatmul.bf16.gmra.mxu0 %v2044
        %v3857 = vpop.f32.mrf.mxu0
        %v3858 = vadd.f32 %v3839, %v3857
        %v3859 = vpop.f32.mrf.mxu0
        %v3860 = vadd.f32 %v3841, %v3859
        %3861 = vmatmul.bf16.gmra.mxu0 %v2052
        %v3862 = vpop.f32.mrf.mxu0
        %v3863 = vadd.f32 %v3844, %v3862
        %v3864 = vpop.f32.mrf.mxu0
        %v3865 = vadd.f32 %v3846, %v3864
        %3866 = vdwg.mxu0
        %3867 = vmatpush.bf16.msra.mxu0 %v2969
        %3868 = vmatpush.bf16.msra.mxu0 %v2965
        %3869 = vmatpush.bf16.msra.mxu0 %v2961
        %3870 = vmatpush.bf16.msra.mxu0 %v2957
        %3871 = vmatpush.bf16.msra.mxu0 %v2953
        %3872 = vmatpush.bf16.msra.mxu0 %v2949
        %3873 = vmatpush.bf16.msra.mxu0 %v2945
        %3874 = vmatpush.bf16.msra.mxu0 %v2941
        %3875 = vmatmul.bf16.gmra.mxu0 %v2045
        %v3876 = vpop.f32.mrf.mxu0
        %v3877 = vadd.f32 %v3858, %v3876
        %v3878 = vpop.f32.mrf.mxu0
        %v3879 = vadd.f32 %v3860, %v3878
        %3880 = vmatmul.bf16.gmra.mxu0 %v2053
        %v3881 = vpop.f32.mrf.mxu0
        %v3882 = vadd.f32 %v3863, %v3881
        %v3883 = vpop.f32.mrf.mxu0
        %v3884 = vadd.f32 %v3865, %v3883
        %3885 = vdwg.mxu0
        %3886 = vmatpush.bf16.msra.mxu0 %v3001
        %3887 = vmatpush.bf16.msra.mxu0 %v2997
        %3888 = vmatpush.bf16.msra.mxu0 %v2993
        %3889 = vmatpush.bf16.msra.mxu0 %v2989
        %3890 = vmatpush.bf16.msra.mxu0 %v2985
        %3891 = vmatpush.bf16.msra.mxu0 %v2981
        %3892 = vmatpush.bf16.msra.mxu0 %v2977
        %3893 = vmatpush.bf16.msra.mxu0 %v2973
        %3894 = vmatmul.bf16.gmra.mxu0 %v2046
        %v3895 = vpop.f32.mrf.mxu0
        %v3896 = vadd.f32 %v3877, %v3895
        %v3897 = vpop.f32.mrf.mxu0
        %v3898 = vadd.f32 %v3879, %v3897
        %3899 = vmatmul.bf16.gmra.mxu0 %v2054
        %v3900 = vpop.f32.mrf.mxu0
        %v3901 = vadd.f32 %v3882, %v3900
        %v3902 = vpop.f32.mrf.mxu0
        %v3903 = vadd.f32 %v3884, %v3902
        %3904 = vdwg.mxu0
        %3905 = vmatpush.bf16.msra.mxu0 %v3033
        %3906 = vmatpush.bf16.msra.mxu0 %v3029
        %3907 = vmatpush.bf16.msra.mxu0 %v3025
        %3908 = vmatpush.bf16.msra.mxu0 %v3021
        %3909 = vmatpush.bf16.msra.mxu0 %v3017
        %3910 = vmatpush.bf16.msra.mxu0 %v3013
        %3911 = vmatpush.bf16.msra.mxu0 %v3009
        %3912 = vmatpush.bf16.msra.mxu0 %v3005
        %3913 = vmatmul.bf16.gmra.mxu0 %v2047
        %v3914 = vpop.f32.mrf.mxu0
        %v3915 = vadd.f32 %v3896, %v3914
        %v3916 = vpop.f32.mrf.mxu0
        %v3917 = vadd.f32 %v3898, %v3916
        %3918 = vmatmul.bf16.gmra.mxu0 %v2055
        %v3919 = vpop.f32.mrf.mxu0
        %v3920 = vadd.f32 %v3901, %v3919
        %v3921 = vpop.f32.mrf.mxu0
        %v3922 = vadd.f32 %v3903, %v3921
        %3923 = vdwg.mxu0
        %3924 = vmatpush.bf16.msra.mxu0 %v3065
        %3925 = vmatpush.bf16.msra.mxu0 %v3061
        %3926 = vmatpush.bf16.msra.mxu0 %v3057
        %3927 = vmatpush.bf16.msra.mxu0 %v3053
        %3928 = vmatpush.bf16.msra.mxu0 %v3049
        %3929 = vmatpush.bf16.msra.mxu0 %v3045
        %3930 = vmatpush.bf16.msra.mxu0 %v3041
        %3931 = vmatpush.bf16.msra.mxu0 %v3037
        %3932 = vmatmul.bf16.gmra.mxu0 %v2048
        %v3933 = vpop.f32.mrf.mxu0
        %v3934 = vadd.f32 %v3915, %v3933
        %v3935 = vpop.f32.mrf.mxu0
        %v3936 = vadd.f32 %v3917, %v3935
        %3937 = vmatmul.bf16.gmra.mxu0 %v2056
        %v3938 = vpop.f32.mrf.mxu0
        %v3939 = vadd.f32 %v3920, %v3938
        %v3940 = vpop.f32.mrf.mxu0
        %v3941 = vadd.f32 %v3922, %v3940
        %3942 = vdwg.mxu0
        %3943 = vmatpush.bf16.msra.mxu0 %v3097
        %3944 = vmatpush.bf16.msra.mxu0 %v3093
        %3945 = vmatpush.bf16.msra.mxu0 %v3089
        %3946 = vmatpush.bf16.msra.mxu0 %v3085
        %3947 = vmatpush.bf16.msra.mxu0 %v3081
        %3948 = vmatpush.bf16.msra.mxu0 %v3077
        %3949 = vmatpush.bf16.msra.mxu0 %v3073
        %3950 = vmatpush.bf16.msra.mxu0 %v3069
        %3951 = vmatmul.bf16.gmra.mxu0 %v2049
        %v3952 = vpop.f32.mrf.mxu0
        %v3953 = vadd.f32 %v3934, %v3952
        %v3954 = vpop.f32.mrf.mxu0
        %v3955 = vadd.f32 %v3936, %v3954
        %3956 = vmatmul.bf16.gmra.mxu0 %v2057
        %v3957 = vpop.f32.mrf.mxu0
        %v3958 = vadd.f32 %v3939, %v3957
        %v3959 = vpop.f32.mrf.mxu0
        %v3960 = vadd.f32 %v3941, %v3959
        %3961 = vdwg.mxu0
        %v3962 = vmax.f32 %v3497, 0.0
        %v3963 = vmax.f32 %v3649, 0.0
        %v3964 = vmax.f32 %v3801, 0.0
        %v3965 = vmax.f32 %v3953, 0.0
        %v3966 = vmax.f32 %v3499, 0.0
        %v3967 = vmax.f32 %v3651, 0.0
        %v3968 = vmax.f32 %v3803, 0.0
        %v3969 = vmax.f32 %v3955, 0.0
        %v3970 = vmax.f32 %v3502, 0.0
        %v3971 = vmax.f32 %v3654, 0.0
        %v3972 = vmax.f32 %v3806, 0.0
        %v3973 = vmax.f32 %v3958, 0.0
        %v3974 = vmax.f32 %v3504, 0.0
        %v3975 = vmax.f32 %v3656, 0.0
        %v3976 = vmax.f32 %v3808, 0.0
        %v3977 = vmax.f32 %v3960, 0.0
        %v3978 = vpack.c.bf16 %v3966, %v3962
        %v3979 = vpack.c.bf16 %v3967, %v3963
        %v3980 = vpack.c.bf16 %v3968, %v3964
        %v3981 = vpack.c.bf16 %v3969, %v3965
        %v3982 = vpack.c.bf16 %v3974, %v3970
        %v3983 = vpack.c.bf16 %v3975, %v3971
        %v3984 = vpack.c.bf16 %v3976, %v3972
        %v3985 = vpack.c.bf16 %v3977, %v3973
        %v3986 = vld [vmem:[#allocation9] sm:$0xff]
        %v3987 = vld [vmem:[#allocation9 + $0x8] sm:$0xff]
        %v3988 = vld [vmem:[#allocation9 + $0x10] sm:$0xff]
        %v3989 = vld [vmem:[#allocation9 + $0x18] sm:$0xff]
        %v3990 = vld [vmem:[#allocation9 + $0x20] sm:$0xff]
        %v3991 = vld [vmem:[#allocation9 + $0x28] sm:$0xff]
        %v3992 = vld [vmem:[#allocation9 + $0x30] sm:$0xff]
        %v3993 = vld [vmem:[#allocation9 + $0x38] sm:$0xff]
        %v3994 = vld [vmem:[#allocation9 + $0x40] sm:$0xff]
        %v3995 = vld [vmem:[#allocation9 + $0x48] sm:$0xff]
        %v3996 = vld [vmem:[#allocation9 + $0x50] sm:$0xff]
        %v3997 = vld [vmem:[#allocation9 + $0x58] sm:$0xff]
        %v3998 = vld [vmem:[#allocation9 + $0x60] sm:$0xff]
        %v3999 = vld [vmem:[#allocation9 + $0x68] sm:$0xff]
        %v4000 = vld [vmem:[#allocation9 + $0x70] sm:$0xff]
        %v4001 = vld [vmem:[#allocation9 + $0x78] sm:$0xff]
        %v4002 = vld [vmem:[#allocation9 + $0x80] sm:$0xff]
        %v4003 = vld [vmem:[#allocation9 + $0x88] sm:$0xff]
        %v4004 = vld [vmem:[#allocation9 + $0x90] sm:$0xff]
        %v4005 = vld [vmem:[#allocation9 + $0x98] sm:$0xff]
        %v4006 = vld [vmem:[#allocation9 + $0xa0] sm:$0xff]
        %v4007 = vld [vmem:[#allocation9 + $0xa8] sm:$0xff]
        %v4008 = vld [vmem:[#allocation9 + $0xb0] sm:$0xff]
        %v4009 = vld [vmem:[#allocation9 + $0xb8] sm:$0xff]
        %v4010 = vld [vmem:[#allocation9 + $0xc0] sm:$0xff]
        %v4011 = vld [vmem:[#allocation9 + $0xc8] sm:$0xff]
        %v4012 = vld [vmem:[#allocation9 + $0xd0] sm:$0xff]
        %v4013 = vld [vmem:[#allocation9 + $0xd8] sm:$0xff]
        %v4014 = vld [vmem:[#allocation9 + $0xe0] sm:$0xff]
        %v4015 = vld [vmem:[#allocation9 + $0xe8] sm:$0xff]
        %v4016 = vld [vmem:[#allocation9 + $0xf0] sm:$0xff]
        %v4017 = vld [vmem:[#allocation9 + $0xf8] sm:$0xff]
        %v4018 = vld [vmem:[#allocation9 + $0x100] sm:$0xff]
        %v4019 = vld [vmem:[#allocation9 + $0x108] sm:$0xff]
        %v4020 = vld [vmem:[#allocation9 + $0x110] sm:$0xff]
        %v4021 = vld [vmem:[#allocation9 + $0x118] sm:$0xff]
        %v4022 = vld [vmem:[#allocation9 + $0x120] sm:$0xff]
        %v4023 = vld [vmem:[#allocation9 + $0x128] sm:$0xff]
        %v4024 = vld [vmem:[#allocation9 + $0x130] sm:$0xff]
        %v4025 = vld [vmem:[#allocation9 + $0x138] sm:$0xff]
        %v4026 = vld [vmem:[#allocation9 + $0x140] sm:$0xff]
        %v4027 = vld [vmem:[#allocation9 + $0x148] sm:$0xff]
        %v4028 = vld [vmem:[#allocation9 + $0x150] sm:$0xff]
        %v4029 = vld [vmem:[#allocation9 + $0x158] sm:$0xff]
        %v4030 = vld [vmem:[#allocation9 + $0x160] sm:$0xff]
        %v4031 = vld [vmem:[#allocation9 + $0x168] sm:$0xff]
        %v4032 = vld [vmem:[#allocation9 + $0x170] sm:$0xff]
        %v4033 = vld [vmem:[#allocation9 + $0x178] sm:$0xff]
        %v4034 = vld [vmem:[#allocation9 + $0x180] sm:$0xff]
        %v4035 = vld [vmem:[#allocation9 + $0x188] sm:$0xff]
        %v4036 = vld [vmem:[#allocation9 + $0x190] sm:$0xff]
        %v4037 = vld [vmem:[#allocation9 + $0x198] sm:$0xff]
        %v4038 = vld [vmem:[#allocation9 + $0x1a0] sm:$0xff]
        %v4039 = vld [vmem:[#allocation9 + $0x1a8] sm:$0xff]
        %v4040 = vld [vmem:[#allocation9 + $0x1b0] sm:$0xff]
        %v4041 = vld [vmem:[#allocation9 + $0x1b8] sm:$0xff]
        %v4042 = vld [vmem:[#allocation9 + $0x1c0] sm:$0xff]
        %v4043 = vld [vmem:[#allocation9 + $0x1c8] sm:$0xff]
        %v4044 = vld [vmem:[#allocation9 + $0x1d0] sm:$0xff]
        %v4045 = vld [vmem:[#allocation9 + $0x1d8] sm:$0xff]
        %v4046 = vld [vmem:[#allocation9 + $0x1e0] sm:$0xff]
        %v4047 = vld [vmem:[#allocation9 + $0x1e8] sm:$0xff]
        %v4048 = vld [vmem:[#allocation9 + $0x1f0] sm:$0xff]
        %v4049 = vld [vmem:[#allocation9 + $0x1f8] sm:$0xff]
        %v4050 = vld [vmem:[%s3] sm:$0x3]
        %v4052 = vperm.slane %v4050, 0
        %v4053 = vperm.slane %v4050, 1
        %v4120 = vunpack.c.l.b16 %v3986
        %v4121 = vunpack.c.h.b16 %v3986
        %v4122 = vunpack.c.l.b16 %v3987
        %v4123 = vunpack.c.h.b16 %v3987
        %v4124 = vunpack.c.l.b16 %v3988
        %v4125 = vunpack.c.h.b16 %v3988
        %v4126 = vunpack.c.l.b16 %v3989
        %v4127 = vunpack.c.h.b16 %v3989
        %v4128 = vunpack.c.l.b16 %v3990
        %v4129 = vunpack.c.h.b16 %v3990
        %v4130 = vunpack.c.l.b16 %v3991
        %v4131 = vunpack.c.h.b16 %v3991
        %v4132 = vunpack.c.l.b16 %v3992
        %v4133 = vunpack.c.h.b16 %v3992
        %v4134 = vunpack.c.l.b16 %v3993
        %v4135 = vunpack.c.h.b16 %v3993
        %v4136 = vunpack.c.l.b16 %v3994
        %v4137 = vunpack.c.h.b16 %v3994
        %v4138 = vunpack.c.l.b16 %v3995
        %v4139 = vunpack.c.h.b16 %v3995
        %v4140 = vunpack.c.l.b16 %v3996
        %v4141 = vunpack.c.h.b16 %v3996
        %v4142 = vunpack.c.l.b16 %v3997
        %v4143 = vunpack.c.h.b16 %v3997
        %v4144 = vunpack.c.l.b16 %v3998
        %v4145 = vunpack.c.h.b16 %v3998
        %v4146 = vunpack.c.l.b16 %v3999
        %v4147 = vunpack.c.h.b16 %v3999
        %v4148 = vunpack.c.l.b16 %v4000
        %v4149 = vunpack.c.h.b16 %v4000
        %v4150 = vunpack.c.l.b16 %v4001
        %v4151 = vunpack.c.h.b16 %v4001
        %v4152 = vunpack.c.l.b16 %v4002
        %v4153 = vunpack.c.h.b16 %v4002
        %v4154 = vunpack.c.l.b16 %v4003
        %v4155 = vunpack.c.h.b16 %v4003
        %v4156 = vunpack.c.l.b16 %v4004
        %v4157 = vunpack.c.h.b16 %v4004
        %v4158 = vunpack.c.l.b16 %v4005
        %v4159 = vunpack.c.h.b16 %v4005
        %v4160 = vunpack.c.l.b16 %v4006
        %v4161 = vunpack.c.h.b16 %v4006
        %v4162 = vunpack.c.l.b16 %v4007
        %v4163 = vunpack.c.h.b16 %v4007
        %v4164 = vunpack.c.l.b16 %v4008
        %v4165 = vunpack.c.h.b16 %v4008
        %v4166 = vunpack.c.l.b16 %v4009
        %v4167 = vunpack.c.h.b16 %v4009
        %v4168 = vunpack.c.l.b16 %v4010
        %v4169 = vunpack.c.h.b16 %v4010
        %v4170 = vunpack.c.l.b16 %v4011
        %v4171 = vunpack.c.h.b16 %v4011
        %v4172 = vunpack.c.l.b16 %v4012
        %v4173 = vunpack.c.h.b16 %v4012
        %v4174 = vunpack.c.l.b16 %v4013
        %v4175 = vunpack.c.h.b16 %v4013
        %v4176 = vunpack.c.l.b16 %v4014
        %v4177 = vunpack.c.h.b16 %v4014
        %v4178 = vunpack.c.l.b16 %v4015
        %v4179 = vunpack.c.h.b16 %v4015
        %v4180 = vunpack.c.l.b16 %v4016
        %v4181 = vunpack.c.h.b16 %v4016
        %v4182 = vunpack.c.l.b16 %v4017
        %v4183 = vunpack.c.h.b16 %v4017
        %v4184 = vunpack.c.l.b16 %v4018
        %v4185 = vunpack.c.h.b16 %v4018
        %v4186 = vunpack.c.l.b16 %v4019
        %v4187 = vunpack.c.h.b16 %v4019
        %v4188 = vunpack.c.l.b16 %v4020
        %v4189 = vunpack.c.h.b16 %v4020
        %v4190 = vunpack.c.l.b16 %v4021
        %v4191 = vunpack.c.h.b16 %v4021
        %v4192 = vunpack.c.l.b16 %v4022
        %v4193 = vunpack.c.h.b16 %v4022
        %v4194 = vunpack.c.l.b16 %v4023
        %v4195 = vunpack.c.h.b16 %v4023
        %v4196 = vunpack.c.l.b16 %v4024
        %v4197 = vunpack.c.h.b16 %v4024
        %v4198 = vunpack.c.l.b16 %v4025
        %v4199 = vunpack.c.h.b16 %v4025
        %v4200 = vunpack.c.l.b16 %v4026
        %v4201 = vunpack.c.h.b16 %v4026
        %v4202 = vunpack.c.l.b16 %v4027
        %v4203 = vunpack.c.h.b16 %v4027
        %v4204 = vunpack.c.l.b16 %v4028
        %v4205 = vunpack.c.h.b16 %v4028
        %v4206 = vunpack.c.l.b16 %v4029
        %v4207 = vunpack.c.h.b16 %v4029
        %v4208 = vunpack.c.l.b16 %v4030
        %v4209 = vunpack.c.h.b16 %v4030
        %v4210 = vunpack.c.l.b16 %v4031
        %v4211 = vunpack.c.h.b16 %v4031
        %v4212 = vunpack.c.l.b16 %v4032
        %v4213 = vunpack.c.h.b16 %v4032
        %v4214 = vunpack.c.l.b16 %v4033
        %v4215 = vunpack.c.h.b16 %v4033
        %v4216 = vunpack.c.l.b16 %v4034
        %v4217 = vunpack.c.h.b16 %v4034
        %v4218 = vunpack.c.l.b16 %v4035
        %v4219 = vunpack.c.h.b16 %v4035
        %v4220 = vunpack.c.l.b16 %v4036
        %v4221 = vunpack.c.h.b16 %v4036
        %v4222 = vunpack.c.l.b16 %v4037
        %v4223 = vunpack.c.h.b16 %v4037
        %v4224 = vunpack.c.l.b16 %v4038
        %v4225 = vunpack.c.h.b16 %v4038
        %v4226 = vunpack.c.l.b16 %v4039
        %v4227 = vunpack.c.h.b16 %v4039
        %v4228 = vunpack.c.l.b16 %v4040
        %v4229 = vunpack.c.h.b16 %v4040
        %v4230 = vunpack.c.l.b16 %v4041
        %v4231 = vunpack.c.h.b16 %v4041
        %v4232 = vunpack.c.l.b16 %v4042
        %v4233 = vunpack.c.h.b16 %v4042
        %v4234 = vunpack.c.l.b16 %v4043
        %v4235 = vunpack.c.h.b16 %v4043
        %v4236 = vunpack.c.l.b16 %v4044
        %v4237 = vunpack.c.h.b16 %v4044
        %v4238 = vunpack.c.l.b16 %v4045
        %v4239 = vunpack.c.h.b16 %v4045
        %v4240 = vunpack.c.l.b16 %v4046
        %v4241 = vunpack.c.h.b16 %v4046
        %v4242 = vunpack.c.l.b16 %v4047
        %v4243 = vunpack.c.h.b16 %v4047
        %v4244 = vunpack.c.l.b16 %v4048
        %v4245 = vunpack.c.h.b16 %v4048
        %v4246 = vunpack.c.l.b16 %v4049
        %v4247 = vunpack.c.h.b16 %v4049
        %v4248 = vpack.c.b16 %v4122, %v4120
        %v4249 = vpack.c.b16 %v4123, %v4121
        %v4250 = vpack.c.b16 %v4126, %v4124
        %v4251 = vpack.c.b16 %v4127, %v4125
        %v4252 = vpack.c.b16 %v4130, %v4128
        %v4253 = vpack.c.b16 %v4131, %v4129
        %v4254 = vpack.c.b16 %v4134, %v4132
        %v4255 = vpack.c.b16 %v4135, %v4133
        %v4256 = vpack.c.b16 %v4138, %v4136
        %v4257 = vpack.c.b16 %v4139, %v4137
        %v4258 = vpack.c.b16 %v4142, %v4140
        %v4259 = vpack.c.b16 %v4143, %v4141
        %v4260 = vpack.c.b16 %v4146, %v4144
        %v4261 = vpack.c.b16 %v4147, %v4145
        %v4262 = vpack.c.b16 %v4150, %v4148
        %v4263 = vpack.c.b16 %v4151, %v4149
        %v4264 = vpack.c.b16 %v4154, %v4152
        %v4265 = vpack.c.b16 %v4155, %v4153
        %v4266 = vpack.c.b16 %v4158, %v4156
        %v4267 = vpack.c.b16 %v4159, %v4157
        %v4268 = vpack.c.b16 %v4162, %v4160
        %v4269 = vpack.c.b16 %v4163, %v4161
        %v4270 = vpack.c.b16 %v4166, %v4164
        %v4271 = vpack.c.b16 %v4167, %v4165
        %v4272 = vpack.c.b16 %v4170, %v4168
        %v4273 = vpack.c.b16 %v4171, %v4169
        %v4274 = vpack.c.b16 %v4174, %v4172
        %v4275 = vpack.c.b16 %v4175, %v4173
        %v4276 = vpack.c.b16 %v4178, %v4176
        %v4277 = vpack.c.b16 %v4179, %v4177
        %v4278 = vpack.c.b16 %v4182, %v4180
        %v4279 = vpack.c.b16 %v4183, %v4181
        %v4280 = vpack.c.b16 %v4186, %v4184
        %v4281 = vpack.c.b16 %v4187, %v4185
        %v4282 = vpack.c.b16 %v4190, %v4188
        %v4283 = vpack.c.b16 %v4191, %v4189
        %v4284 = vpack.c.b16 %v4194, %v4192
        %v4285 = vpack.c.b16 %v4195, %v4193
        %v4286 = vpack.c.b16 %v4198, %v4196
        %v4287 = vpack.c.b16 %v4199, %v4197
        %v4288 = vpack.c.b16 %v4202, %v4200
        %v4289 = vpack.c.b16 %v4203, %v4201
        %v4290 = vpack.c.b16 %v4206, %v4204
        %v4291 = vpack.c.b16 %v4207, %v4205
        %v4292 = vpack.c.b16 %v4210, %v4208
        %v4293 = vpack.c.b16 %v4211, %v4209
        %v4294 = vpack.c.b16 %v4214, %v4212
        %v4295 = vpack.c.b16 %v4215, %v4213
        %v4296 = vpack.c.b16 %v4218, %v4216
        %v4297 = vpack.c.b16 %v4219, %v4217
        %v4298 = vpack.c.b16 %v4222, %v4220
        %v4299 = vpack.c.b16 %v4223, %v4221
        %v4300 = vpack.c.b16 %v4226, %v4224
        %v4301 = vpack.c.b16 %v4227, %v4225
        %v4302 = vpack.c.b16 %v4230, %v4228
        %v4303 = vpack.c.b16 %v4231, %v4229
        %v4304 = vpack.c.b16 %v4234, %v4232
        %v4305 = vpack.c.b16 %v4235, %v4233
        %v4306 = vpack.c.b16 %v4238, %v4236
        %v4307 = vpack.c.b16 %v4239, %v4237
        %v4308 = vpack.c.b16 %v4242, %v4240
        %v4309 = vpack.c.b16 %v4243, %v4241
        %v4310 = vpack.c.b16 %v4246, %v4244
        %v4311 = vpack.c.b16 %v4247, %v4245
        %4376 = vmatpush.bf16.msra.mxu0 %v4262
        %4377 = vmatpush.bf16.msra.mxu0 %v4260
        %4378 = vmatpush.bf16.msra.mxu0 %v4258
        %4379 = vmatpush.bf16.msra.mxu0 %v4256
        %4380 = vmatpush.bf16.msra.mxu0 %v4254
        %4381 = vmatpush.bf16.msra.mxu0 %v4252
        %4382 = vmatpush.bf16.msra.mxu0 %v4250
        %4383 = vmatpush.bf16.msra.mxu0 %v4248
        %4384 = vmatmul.bf16.gmra.mxu0 %v3978
        %v4385 = vpop.f32.mrf.mxu0
        %v4386 = vadd.f32 %v4052, %v4385
        %v4387 = vpop.f32.mrf.mxu0
        %v4388 = vadd.f32 %v4052, %v4387
        %4389 = vmatmul.bf16.gmra.mxu0 %v3982
        %v4390 = vpop.f32.mrf.mxu0
        %v4391 = vadd.f32 %v4052, %v4390
        %v4392 = vpop.f32.mrf.mxu0
        %v4393 = vadd.f32 %v4052, %v4392
        %4394 = vdwg.mxu0
        %4395 = vmatpush.bf16.msra.mxu0 %v4278
        %4396 = vmatpush.bf16.msra.mxu0 %v4276
        %4397 = vmatpush.bf16.msra.mxu0 %v4274
        %4398 = vmatpush.bf16.msra.mxu0 %v4272
        %4399 = vmatpush.bf16.msra.mxu0 %v4270
        %4400 = vmatpush.bf16.msra.mxu0 %v4268
        %4401 = vmatpush.bf16.msra.mxu0 %v4266
        %4402 = vmatpush.bf16.msra.mxu0 %v4264
        %4403 = vmatmul.bf16.gmra.mxu0 %v3979
        %v4404 = vpop.f32.mrf.mxu0
        %v4405 = vadd.f32 %v4386, %v4404
        %v4406 = vpop.f32.mrf.mxu0
        %v4407 = vadd.f32 %v4388, %v4406
        %4408 = vmatmul.bf16.gmra.mxu0 %v3983
        %v4409 = vpop.f32.mrf.mxu0
        %v4410 = vadd.f32 %v4391, %v4409
        %v4411 = vpop.f32.mrf.mxu0
        %v4412 = vadd.f32 %v4393, %v4411
        %4413 = vdwg.mxu0
        %4414 = vmatpush.bf16.msra.mxu0 %v4294
        %4415 = vmatpush.bf16.msra.mxu0 %v4292
        %4416 = vmatpush.bf16.msra.mxu0 %v4290
        %4417 = vmatpush.bf16.msra.mxu0 %v4288
        %4418 = vmatpush.bf16.msra.mxu0 %v4286
        %4419 = vmatpush.bf16.msra.mxu0 %v4284
        %4420 = vmatpush.bf16.msra.mxu0 %v4282
        %4421 = vmatpush.bf16.msra.mxu0 %v4280
        %4422 = vmatmul.bf16.gmra.mxu0 %v3980
        %v4423 = vpop.f32.mrf.mxu0
        %v4424 = vadd.f32 %v4405, %v4423
        %v4425 = vpop.f32.mrf.mxu0
        %v4426 = vadd.f32 %v4407, %v4425
        %4427 = vmatmul.bf16.gmra.mxu0 %v3984
        %v4428 = vpop.f32.mrf.mxu0
        %v4429 = vadd.f32 %v4410, %v4428
        %v4430 = vpop.f32.mrf.mxu0
        %v4431 = vadd.f32 %v4412, %v4430
        %4432 = vdwg.mxu0
        %4433 = vmatpush.bf16.msra.mxu0 %v4310
        %4434 = vmatpush.bf16.msra.mxu0 %v4308
        %4435 = vmatpush.bf16.msra.mxu0 %v4306
        %4436 = vmatpush.bf16.msra.mxu0 %v4304
        %4437 = vmatpush.bf16.msra.mxu0 %v4302
        %4438 = vmatpush.bf16.msra.mxu0 %v4300
        %4439 = vmatpush.bf16.msra.mxu0 %v4298
        %4440 = vmatpush.bf16.msra.mxu0 %v4296
        %4441 = vmatmul.bf16.gmra.mxu0 %v3981
        %v4442 = vpop.f32.mrf.mxu0
        %v4443 = vadd.f32 %v4424, %v4442
        %v4444 = vpop.f32.mrf.mxu0
        %v4445 = vadd.f32 %v4426, %v4444
        %4446 = vmatmul.bf16.gmra.mxu0 %v3985
        %v4447 = vpop.f32.mrf.mxu0
        %v4448 = vadd.f32 %v4429, %v4447
        %v4449 = vpop.f32.mrf.mxu0
        %v4450 = vadd.f32 %v4431, %v4449
        %4451 = vdwg.mxu0
        %4452 = vmatpush.bf16.msra.mxu0 %v4263
        %4453 = vmatpush.bf16.msra.mxu0 %v4261
        %4454 = vmatpush.bf16.msra.mxu0 %v4259
        %4455 = vmatpush.bf16.msra.mxu0 %v4257
        %4456 = vmatpush.bf16.msra.mxu0 %v4255
        %4457 = vmatpush.bf16.msra.mxu0 %v4253
        %4458 = vmatpush.bf16.msra.mxu0 %v4251
        %4459 = vmatpush.bf16.msra.mxu0 %v4249
        %4460 = vmatmul.bf16.gmra.mxu0 %v3978
        %v4461 = vpop.f32.mrf.mxu0
        %v4462 = vadd.f32 %v4053, %v4461
        %v4463 = vpop.f32.mrf.mxu0
        %v4464 = vadd.f32 %v4053, %v4463
        %4465 = vmatmul.bf16.gmra.mxu0 %v3982
        %v4466 = vpop.f32.mrf.mxu0
        %v4467 = vadd.f32 %v4053, %v4466
        %v4468 = vpop.f32.mrf.mxu0
        %v4469 = vadd.f32 %v4053, %v4468
        %4470 = vdwg.mxu0
        %4471 = vmatpush.bf16.msra.mxu0 %v4279
        %4472 = vmatpush.bf16.msra.mxu0 %v4277
        %4473 = vmatpush.bf16.msra.mxu0 %v4275
        %4474 = vmatpush.bf16.msra.mxu0 %v4273
        %4475 = vmatpush.bf16.msra.mxu0 %v4271
        %4476 = vmatpush.bf16.msra.mxu0 %v4269
        %4477 = vmatpush.bf16.msra.mxu0 %v4267
        %4478 = vmatpush.bf16.msra.mxu0 %v4265
        %4479 = vmatmul.bf16.gmra.mxu0 %v3979
        %v4480 = vpop.f32.mrf.mxu0
        %v4481 = vadd.f32 %v4462, %v4480
        %v4482 = vpop.f32.mrf.mxu0
        %v4483 = vadd.f32 %v4464, %v4482
        %4484 = vmatmul.bf16.gmra.mxu0 %v3983
        %v4485 = vpop.f32.mrf.mxu0
        %v4486 = vadd.f32 %v4467, %v4485
        %v4487 = vpop.f32.mrf.mxu0
        %v4488 = vadd.f32 %v4469, %v4487
        %4489 = vdwg.mxu0
        %4490 = vmatpush.bf16.msra.mxu0 %v4295
        %4491 = vmatpush.bf16.msra.mxu0 %v4293
        %4492 = vmatpush.bf16.msra.mxu0 %v4291
        %4493 = vmatpush.bf16.msra.mxu0 %v4289
        %4494 = vmatpush.bf16.msra.mxu0 %v4287
        %4495 = vmatpush.bf16.msra.mxu0 %v4285
        %4496 = vmatpush.bf16.msra.mxu0 %v4283
        %4497 = vmatpush.bf16.msra.mxu0 %v4281
        %4498 = vmatmul.bf16.gmra.mxu0 %v3980
        %v4499 = vpop.f32.mrf.mxu0
        %v4500 = vadd.f32 %v4481, %v4499
        %v4501 = vpop.f32.mrf.mxu0
        %v4502 = vadd.f32 %v4483, %v4501
        %4503 = vmatmul.bf16.gmra.mxu0 %v3984
        %v4504 = vpop.f32.mrf.mxu0
        %v4505 = vadd.f32 %v4486, %v4504
        %v4506 = vpop.f32.mrf.mxu0
        %v4507 = vadd.f32 %v4488, %v4506
        %4508 = vdwg.mxu0
        %4509 = vmatpush.bf16.msra.mxu0 %v4311
        %4510 = vmatpush.bf16.msra.mxu0 %v4309
        %4511 = vmatpush.bf16.msra.mxu0 %v4307
        %4512 = vmatpush.bf16.msra.mxu0 %v4305
        %4513 = vmatpush.bf16.msra.mxu0 %v4303
        %4514 = vmatpush.bf16.msra.mxu0 %v4301
        %4515 = vmatpush.bf16.msra.mxu0 %v4299
        %4516 = vmatpush.bf16.msra.mxu0 %v4297
        %4517 = vmatmul.bf16.gmra.mxu0 %v3981
        %v4518 = vpop.f32.mrf.mxu0
        %v4519 = vadd.f32 %v4500, %v4518
        %v4520 = vpop.f32.mrf.mxu0
        %v4521 = vadd.f32 %v4502, %v4520
        %4522 = vmatmul.bf16.gmra.mxu0 %v3985
        %v4523 = vpop.f32.mrf.mxu0
        %v4524 = vadd.f32 %v4505, %v4523
        %v4525 = vpop.f32.mrf.mxu0
        %v4526 = vadd.f32 %v4507, %v4525
        %4527 = vdwg.mxu0
        %v4528 = vmax.f32 %v4443, 0.0
        %v4529 = vmax.f32 %v4519, 0.0
        %v4530 = vmax.f32 %v4445, 0.0
        %v4531 = vmax.f32 %v4521, 0.0
        %v4532 = vmax.f32 %v4448, 0.0
        %v4533 = vmax.f32 %v4524, 0.0
        %v4534 = vmax.f32 %v4450, 0.0
        %v4535 = vmax.f32 %v4526, 0.0
        %v4536 = vpack.c.bf16 %v4530, %v4528
        %v4537 = vpack.c.bf16 %v4531, %v4529
        %v4538 = vpack.c.bf16 %v4534, %v4532
        %v4539 = vpack.c.bf16 %v4535, %v4533
        %v4540 = vld [vmem:[%s4] sm:$0xf]
        %v4541 = vld [vmem:[%s4 + $0x4] sm:$0xf]
        %v4542 = vld [vmem:[%s4 + $0x8] sm:$0xf]
        %v4543 = vld [vmem:[%s4 + $0xc] sm:$0xf]
        %v4544 = vld [vmem:[%s4 + $0x10] sm:$0xf]
        %v4545 = vld [vmem:[%s4 + $0x14] sm:$0xf]
        %v4546 = vld [vmem:[%s4 + $0x18] sm:$0xf]
        %v4547 = vld [vmem:[%s4 + $0x1c] sm:$0xf]
        %v4548 = vld [vmem:[%s4 + $0x20] sm:$0xf]
        %v4549 = vld [vmem:[%s4 + $0x24] sm:$0xf]
        %v4550 = vld [vmem:[%s4 + $0x28] sm:$0xf]
        %v4551 = vld [vmem:[%s4 + $0x2c] sm:$0xf]
        %v4552 = vld [vmem:[%s4 + $0x30] sm:$0xf]
        %v4553 = vld [vmem:[%s4 + $0x34] sm:$0xf]
        %v4554 = vld [vmem:[%s4 + $0x38] sm:$0xf]
        %v4555 = vld [vmem:[%s4 + $0x3c] sm:$0xf]
        %v4556 = vld [vmem:[%s4 + $0x40] sm:$0xf]
        %v4557 = vld [vmem:[%s4 + $0x44] sm:$0xf]
        %v4558 = vld [vmem:[%s4 + $0x48] sm:$0xf]
        %v4559 = vld [vmem:[%s4 + $0x4c] sm:$0xf]
        %v4560 = vld [vmem:[%s4 + $0x50] sm:$0xf]
        %v4561 = vld [vmem:[%s4 + $0x54] sm:$0xf]
        %v4562 = vld [vmem:[%s4 + $0x58] sm:$0xf]
        %v4563 = vld [vmem:[%s4 + $0x5c] sm:$0xf]
        %v4564 = vld [vmem:[%s4 + $0x60] sm:$0xf]
        %v4565 = vld [vmem:[%s4 + $0x64] sm:$0xf]
        %v4566 = vld [vmem:[%s4 + $0x68] sm:$0xf]
        %v4567 = vld [vmem:[%s4 + $0x6c] sm:$0xf]
        %v4568 = vld [vmem:[%s4 + $0x70] sm:$0xf]
        %v4569 = vld [vmem:[%s4 + $0x74] sm:$0xf]
        %v4570 = vld [vmem:[%s4 + $0x78] sm:$0xf]
        %v4571 = vld [vmem:[%s4 + $0x7c] sm:$0xf]
        %v4572 = vld [vmem:[%s5] sm:$0x1]
        %v4574 = vperm.slane %v4572, 0
        %v4608 = vunpack.c.l.b16 %v4540
        %v4609 = vunpack.c.l.b16 %v4541
        %v4610 = vunpack.c.l.b16 %v4542
        %v4611 = vunpack.c.l.b16 %v4543
        %v4612 = vunpack.c.l.b16 %v4544
        %v4613 = vunpack.c.l.b16 %v4545
        %v4614 = vunpack.c.l.b16 %v4546
        %v4615 = vunpack.c.l.b16 %v4547
        %v4616 = vunpack.c.l.b16 %v4548
        %v4617 = vunpack.c.l.b16 %v4549
        %v4618 = vunpack.c.l.b16 %v4550
        %v4619 = vunpack.c.l.b16 %v4551
        %v4620 = vunpack.c.l.b16 %v4552
        %v4621 = vunpack.c.l.b16 %v4553
        %v4622 = vunpack.c.l.b16 %v4554
        %v4623 = vunpack.c.l.b16 %v4555
        %v4624 = vunpack.c.l.b16 %v4556
        %v4625 = vunpack.c.l.b16 %v4557
        %v4626 = vunpack.c.l.b16 %v4558
        %v4627 = vunpack.c.l.b16 %v4559
        %v4628 = vunpack.c.l.b16 %v4560
        %v4629 = vunpack.c.l.b16 %v4561
        %v4630 = vunpack.c.l.b16 %v4562
        %v4631 = vunpack.c.l.b16 %v4563
        %v4632 = vunpack.c.l.b16 %v4564
        %v4633 = vunpack.c.l.b16 %v4565
        %v4634 = vunpack.c.l.b16 %v4566
        %v4635 = vunpack.c.l.b16 %v4567
        %v4636 = vunpack.c.l.b16 %v4568
        %v4637 = vunpack.c.l.b16 %v4569
        %v4638 = vunpack.c.l.b16 %v4570
        %v4639 = vunpack.c.l.b16 %v4571
        %v4640 = vpack.c.b16 %v4609, %v4608
        %v4641 = vpack.c.b16 %v4611, %v4610
        %v4642 = vpack.c.b16 %v4613, %v4612
        %v4643 = vpack.c.b16 %v4615, %v4614
        %v4644 = vpack.c.b16 %v4617, %v4616
        %v4645 = vpack.c.b16 %v4619, %v4618
        %v4646 = vpack.c.b16 %v4621, %v4620
        %v4647 = vpack.c.b16 %v4623, %v4622
        %v4648 = vpack.c.b16 %v4625, %v4624
        %v4649 = vpack.c.b16 %v4627, %v4626
        %v4650 = vpack.c.b16 %v4629, %v4628
        %v4651 = vpack.c.b16 %v4631, %v4630
        %v4652 = vpack.c.b16 %v4633, %v4632
        %v4653 = vpack.c.b16 %v4635, %v4634
        %v4654 = vpack.c.b16 %v4637, %v4636
        %v4655 = vpack.c.b16 %v4639, %v4638
        %4672 = vmatpush.bf16.msra.mxu0 %v4647
        %4673 = vmatpush.bf16.msra.mxu0 %v4646
        %4674 = vmatpush.bf16.msra.mxu0 %v4645
        %4675 = vmatpush.bf16.msra.mxu0 %v4644
        %4676 = vmatpush.bf16.msra.mxu0 %v4643
        %4677 = vmatpush.bf16.msra.mxu0 %v4642
        %4678 = vmatpush.bf16.msra.mxu0 %v4641
        %4679 = vmatpush.bf16.msra.mxu0 %v4640
        %4680 = vmatmul.bf16.gmra.mxu0 %v4536
        %v4681 = vpop.f32.mrf.mxu0
        %v4682 = vadd.f32 %v4574, %v4681
        %v4683 = vpop.f32.mrf.mxu0
        %v4684 = vadd.f32 %v4574, %v4683
        %4685 = vmatmul.bf16.gmra.mxu0 %v4538
        %v4686 = vpop.f32.mrf.mxu0
        %v4687 = vadd.f32 %v4574, %v4686
        %v4688 = vpop.f32.mrf.mxu0
        %v4689 = vadd.f32 %v4574, %v4688
        %4690 = vdwg.mxu0
        %4691 = vmatpush.bf16.msra.mxu0 %v4655
        %4692 = vmatpush.bf16.msra.mxu0 %v4654
        %4693 = vmatpush.bf16.msra.mxu0 %v4653
        %4694 = vmatpush.bf16.msra.mxu0 %v4652
        %4695 = vmatpush.bf16.msra.mxu0 %v4651
        %4696 = vmatpush.bf16.msra.mxu0 %v4650
        %4697 = vmatpush.bf16.msra.mxu0 %v4649
        %4698 = vmatpush.bf16.msra.mxu0 %v4648
        %4699 = vmatmul.bf16.gmra.mxu0 %v4537
        %v4700 = vpop.f32.mrf.mxu0
        %v4701 = vadd.f32 %v4682, %v4700
        %v4702 = vpop.f32.mrf.mxu0
        %v4703 = vadd.f32 %v4684, %v4702
        %4704 = vmatmul.bf16.gmra.mxu0 %v4539
        %v4705 = vpop.f32.mrf.mxu0
        %v4706 = vadd.f32 %v4687, %v4705
        %v4707 = vpop.f32.mrf.mxu0
        %v4708 = vadd.f32 %v4689, %v4707
        %4709 = vdwg.mxu0
        %v4710 = vmax.f32 %v4701, 0.0
        %v4711 = vmax.f32 %v4703, 0.0
        %v4712 = vmax.f32 %v4706, 0.0
        %v4713 = vmax.f32 %v4708, 0.0
        %v4714 = vpack.c.bf16 %v4711, %v4710
        %v4715 = vpack.c.bf16 %v4713, %v4712
        %v4716 = vld [vmem:[%s6] sm:$0xf]
        %v4717 = vld [vmem:[%s6 + $0x4] sm:$0xf]
        %v4718 = vld [vmem:[%s6 + $0x8] sm:$0xf]
        %v4719 = vld [vmem:[%s6 + $0xc] sm:$0xf]
        %v4720 = vld [vmem:[%s6 + $0x10] sm:$0xf]
        %v4721 = vld [vmem:[%s6 + $0x14] sm:$0xf]
        %v4722 = vld [vmem:[%s6 + $0x18] sm:$0xf]
        %v4723 = vld [vmem:[%s6 + $0x1c] sm:$0xf]
        %v4724 = vld [vmem:[%s6 + $0x20] sm:$0xf]
        %v4725 = vld [vmem:[%s6 + $0x24] sm:$0xf]
        %v4726 = vld [vmem:[%s6 + $0x28] sm:$0xf]
        %v4727 = vld [vmem:[%s6 + $0x2c] sm:$0xf]
        %v4728 = vld [vmem:[%s6 + $0x30] sm:$0xf]
        %v4729 = vld [vmem:[%s6 + $0x34] sm:$0xf]
        %v4730 = vld [vmem:[%s6 + $0x38] sm:$0xf]
        %v4731 = vld [vmem:[%s6 + $0x3c] sm:$0xf]
        %v4732 = vld [vmem:[%s7] sm:$0x1]
        %v4734 = vperm.slane %v4732, 0
        %v4752 = vunpack.c.l.b16 %v4716
        %v4753 = vunpack.c.l.b16 %v4717
        %v4754 = vunpack.c.l.b16 %v4718
        %v4755 = vunpack.c.l.b16 %v4719
        %v4756 = vunpack.c.l.b16 %v4720
        %v4757 = vunpack.c.l.b16 %v4721
        %v4758 = vunpack.c.l.b16 %v4722
        %v4759 = vunpack.c.l.b16 %v4723
        %v4760 = vunpack.c.l.b16 %v4724
        %v4761 = vunpack.c.l.b16 %v4725
        %v4762 = vunpack.c.l.b16 %v4726
        %v4763 = vunpack.c.l.b16 %v4727
        %v4764 = vunpack.c.l.b16 %v4728
        %v4765 = vunpack.c.l.b16 %v4729
        %v4766 = vunpack.c.l.b16 %v4730
        %v4767 = vunpack.c.l.b16 %v4731
        %v4768 = vpack.c.b16 %v4753, %v4752
        %v4769 = vpack.c.b16 %v4755, %v4754
        %v4770 = vpack.c.b16 %v4757, %v4756
        %v4771 = vpack.c.b16 %v4759, %v4758
        %v4772 = vpack.c.b16 %v4761, %v4760
        %v4773 = vpack.c.b16 %v4763, %v4762
        %v4774 = vpack.c.b16 %v4765, %v4764
        %v4775 = vpack.c.b16 %v4767, %v4766
        %4784 = vmatpush.bf16.msra.mxu0 %v4775
        %4785 = vmatpush.bf16.msra.mxu0 %v4774
        %4786 = vmatpush.bf16.msra.mxu0 %v4773
        %4787 = vmatpush.bf16.msra.mxu0 %v4772
        %4788 = vmatpush.bf16.msra.mxu0 %v4771
        %4789 = vmatpush.bf16.msra.mxu0 %v4770
        %4790 = vmatpush.bf16.msra.mxu0 %v4769
        %4791 = vmatpush.bf16.msra.mxu0 %v4768
        %4792 = vmatmul.bf16.gmra.mxu0 %v4714
        %v4793 = vpop.f32.mrf.mxu0
        %v4794 = vadd.f32 %v4734, %v4793
        %v4795 = vpop.f32.mrf.mxu0
        %v4796 = vadd.f32 %v4734, %v4795
        %4797 = vmatmul.bf16.gmra.mxu0 %v4715
        %v4798 = vpop.f32.mrf.mxu0
        %v4799 = vadd.f32 %v4734, %v4798
        %v4800 = vpop.f32.mrf.mxu0
        %v4801 = vadd.f32 %v4734, %v4800
        %4802 = vdwg.mxu0
        %v4803 = vmax.f32 %v4794, 0.0
        %v4804 = vmax.f32 %v4796, 0.0
        %v4805 = vmax.f32 %v4799, 0.0
        %v4806 = vmax.f32 %v4801, 0.0
        %v4807 = vpack.c.bf16 %v4804, %v4803
        %v4808 = vpack.c.bf16 %v4806, %v4805
        %v4809 = vld [vmem:[%s8] sm:$0xf]
        %v4810 = vld [vmem:[%s8 + $0x4] sm:$0xf]
        %v4811 = vld [vmem:[%s8 + $0x8] sm:$0xf]
        %v4812 = vld [vmem:[%s8 + $0xc] sm:$0xf]
        %v4813 = vld [vmem:[%s8 + $0x10] sm:$0xf]
        %v4814 = vld [vmem:[%s8 + $0x14] sm:$0xf]
        %v4815 = vld [vmem:[%s8 + $0x18] sm:$0xf]
        %v4816 = vld [vmem:[%s8 + $0x1c] sm:$0xf]
        %v4817 = vld [vmem:[%s8 + $0x20] sm:$0xf]
        %v4818 = vld [vmem:[%s8 + $0x24] sm:$0xf]
        %v4819 = vld [vmem:[%s8 + $0x28] sm:$0xf]
        %v4820 = vld [vmem:[%s8 + $0x2c] sm:$0xf]
        %v4821 = vld [vmem:[%s8 + $0x30] sm:$0xf]
        %v4822 = vld [vmem:[%s8 + $0x34] sm:$0xf]
        %v4823 = vld [vmem:[%s8 + $0x38] sm:$0xf]
        %v4824 = vld [vmem:[%s8 + $0x3c] sm:$0xf]
        %v4825 = vld [vmem:[%s9] sm:$0x1]
        %v4827 = vperm.slane %v4825, 0
        %v4845 = vunpack.c.l.b16 %v4809
        %v4846 = vunpack.c.l.b16 %v4810
        %v4847 = vunpack.c.l.b16 %v4811
        %v4848 = vunpack.c.l.b16 %v4812
        %v4849 = vunpack.c.l.b16 %v4813
        %v4850 = vunpack.c.l.b16 %v4814
        %v4851 = vunpack.c.l.b16 %v4815
        %v4852 = vunpack.c.l.b16 %v4816
        %v4853 = vunpack.c.l.b16 %v4817
        %v4854 = vunpack.c.l.b16 %v4818
        %v4855 = vunpack.c.l.b16 %v4819
        %v4856 = vunpack.c.l.b16 %v4820
        %v4857 = vunpack.c.l.b16 %v4821
        %v4858 = vunpack.c.l.b16 %v4822
        %v4859 = vunpack.c.l.b16 %v4823
        %v4860 = vunpack.c.l.b16 %v4824
        %v4861 = vpack.c.b16 %v4846, %v4845
        %v4862 = vpack.c.b16 %v4848, %v4847
        %v4863 = vpack.c.b16 %v4850, %v4849
        %v4864 = vpack.c.b16 %v4852, %v4851
        %v4865 = vpack.c.b16 %v4854, %v4853
        %v4866 = vpack.c.b16 %v4856, %v4855
        %v4867 = vpack.c.b16 %v4858, %v4857
        %v4868 = vpack.c.b16 %v4860, %v4859
        %4877 = vmatpush.bf16.msra.mxu0 %v4868
        %4878 = vmatpush.bf16.msra.mxu0 %v4867
        %4879 = vmatpush.bf16.msra.mxu0 %v4866
        %4880 = vmatpush.bf16.msra.mxu0 %v4865
        %4881 = vmatpush.bf16.msra.mxu0 %v4864
        %4882 = vmatpush.bf16.msra.mxu0 %v4863
        %4883 = vmatpush.bf16.msra.mxu0 %v4862
        %4884 = vmatpush.bf16.msra.mxu0 %v4861
        %4885 = vmatmul.bf16.gmra.mxu0 %v4807
        %v4886 = vpop.f32.mrf.mxu0
        %v4887 = vadd.f32 %v4827, %v4886
        %v4888 = vpop.f32.mrf.mxu0
        %v4889 = vadd.f32 %v4827, %v4888
        %4890 = vmatmul.bf16.gmra.mxu0 %v4808
        %v4891 = vpop.f32.mrf.mxu0
        %v4892 = vadd.f32 %v4827, %v4891
        %v4893 = vpop.f32.mrf.mxu0
        %v4894 = vadd.f32 %v4827, %v4893
        %4895 = vdwg.mxu0
        %v4896 = vpack.c.bf16 %v4887, %v4887
        %v4897 = vpack.c.bf16 %v4889, %v4889
        %v4898 = vpack.c.bf16 %v4892, %v4892
        %v4899 = vpack.c.bf16 %v4894, %v4894
        %4900 = vst [vmem:[%s456] sm:$0xf] %v4896
        %4901 = vst [vmem:[%s456 + $0x4] sm:$0xf] %v4897
        %4902 = vst [vmem:[%s456 + $0x8] sm:$0xf] %v4898
        %4903 = vst [vmem:[%s456 + $0xc] sm:$0xf] %v4899
        %s4904 = smul.u32 4, %s30
        %p4905 = scmp.lt.s32.totalorder %s4904, 7
        %s4906 = scalar_select %p4905, %s4904, 7
        %s4907 = smul.addr %s4906, 4
        %s4908 = scalar_lea.vmem %s12, %s4907
        // Predicated region
        $region73: #{_forward.2} parent=63 // pred_check
          %p4909 = pneg %p284
        $region74: #{_forward.2} parent=63 // pred_check_branch
          %4911 = sbr.rel (%p4909) target = $region76
        $region75: #{_forward.2} parent=63 // pred_region
          %s4912 = smul.u32 4, %s30
        $region76: #{_forward.2} parent=63 // pred_fallthru
          _
      $region64: #{_forward.2} parent=5 // pred_fallthru
        _
      %p4913 = scmp.le.s32.totalorder 2, %s25
      // Predicated region
      $region77: #{_forward.2} parent=5 // pred_check
        %p4914 = pneg %p4913
      $region78: #{_forward.2} parent=5 // pred_check_branch
        %4916 = sbr.rel (%p4914) target = $region80
      $region79: #{_forward.2} parent=5 // pred_region
        %s4917 = ssub.s32 %s25, 2
        // Predicated region
        $region81: #{_forward.2} parent=79 // pred_check
          %p4918 = pneg %p290
        $region82: #{_forward.2} parent=79 // pred_check_branch
          %4920 = sbr.rel (%p4918) target = $region84
        $region83: #{_forward.2} parent=79 // pred_region
          %s4921 = smul.u32 4, %s31
          %p4922 = scmp.lt.s32.totalorder %s4921, 7
          %s4923 = scalar_select %p4922, %s4921, 7
          %s4924 = smul.addr %s4923, 4
          %s4925 = scalar_lea.vmem %s12, %s4924
        $region84: #{_forward.2} parent=79 // pred_fallthru
          _
      $region80: #{_forward.2} parent=5 // pred_fallthru
        _
    $region6: #{_forward.2} parent=1 // loop_footer
      %s29 = sadd.s32 1, %s25
    $region7: #{_forward.2} parent=1 // loop_footer_branch
      %24 = sbr.rel target = $region3
    $region8: #{_forward.2} parent=1 // loop_exit
      _
    %4926 = vsyncpa [#allocation8], 1
    %s4927 = scalar_lea.sflag [#allocation8], 1
    %4928 = vsyncpa %s4927, 1
    %4929 = vsyncpa [#allocation10], 1

</llo_original>
